<compile_context>
chip_gen: v7x
topology: tpu7x:2x2x1
jax: 0.10.0
libtpu: 0.0.40
codegen_flags: <defaults>
</compile_context>

<pallas_src>
import math

import jax
import jax.numpy as jnp
from jax.experimental import pallas as pl
from jax.experimental.pallas import tpu as pltpu


def attention_pooling_kernel(x_ref, attn_t_ref, pe_a_ref, pe_ref, enc_t_ref,
                             enc_b_ref, fin_t_ref, fin_b_ref, out_ref):
    """One grid step: TB batch elements, all NL attention heads.

    x_ref      : (TB, L, D)   bf16  feature block (the only big HBM stream)
    attn_t_ref : (D, NL)      bf16  attention weights, pre-transposed
    pe_a_ref   : (L, NL)      f32   pe @ attn_w.T (PE folded into the scores)
    pe_ref     : (L, D)       f32   positional encoding
    enc_t_ref  : (D, D4)      f32   shared encoder weight, pre-transposed
    enc_b_ref  : (1, D4)      f32   shared encoder bias
    fin_t_ref  : (NL, D4, Cp) f32   per-head classifier slices (C padded to Cp)
    fin_b_ref  : (1, Cp)      f32   classifier bias (padded)
    out_ref    : (TB, Cp)     f32   logits block (lane-dense, no unit dim)
    """
    TB, L, D = x_ref.shape
    NL = attn_t_ref.shape[1]

    xb = x_ref[...]                                          # bf16 (TB, L, D)

    # ---- attention scores, all heads in ONE dense bf16 MXU matmul (M = TB*L) --
    s2 = jnp.dot(xb.reshape(TB * L, D), attn_t_ref[...],
                 preferred_element_type=jnp.float32)         # (TB*L, NL)
    s = s2.reshape(TB, L, NL) + pe_a_ref[...][None, :, :]    # + (x->x+pe) term

    # ---- softmax over the sequence axis L, per (batch, head) ----------------
    m = jnp.max(s, axis=1, keepdims=True)                    # (TB, 1, NL)
    p = jnp.exp(s - m)
    w = p * pl.reciprocal(jnp.sum(p, axis=1, keepdims=True), approx=True)
    # (dropout on the attention weights is identity in eval mode)

    # Single f32 (x + pe) slab: needed for f32-accurate VPU weighted sums below;
    # it is the only f32 copy of the block and is counted in the TB/VMEM model.
    x32 = xb.astype(jnp.float32) + pe_ref[...][None, :, :]   # (TB, L, D)

    acc = None
    for i in range(NL):                      # static unroll over the NL heads
        # attended features, head i: VPU multiply + sublane reduce
        # (no serialized M=1 MXU matmuls, no per-batch weight broadcasts)
        att_i = jnp.sum(x32 * w[:, :, i:i + 1], axis=1)      # (TB, D)
        # shared encoder Linear(D, D/4) + ReLU — dense matmul, M = TB
        e_i = jnp.maximum(
            jnp.dot(att_i, enc_t_ref[...],
                    preferred_element_type=jnp.float32) + enc_b_ref[...], 0.0)
        # head-i slice of the final classifier — dense matmul, M = TB
        part = jnp.dot(e_i, fin_t_ref[i], preferred_element_type=jnp.float32)
        acc = part if acc is None else acc + part

    # column_stack + final Linear == sum of per-head partial products + bias
    out_ref[...] = (acc + fin_b_ref[...]).astype(out_ref.dtype)


def make_positional_encoding(max_len, d_model):
    position = jnp.arange(max_len, dtype=jnp.float32)[:, None]
    div_term = jnp.exp(jnp.arange(0, d_model, 2, dtype=jnp.float32)
                       * (-math.log(10000.0) / d_model))
    pe = jnp.zeros((max_len, d_model), jnp.float32)
    pe = pe.at[:, 0::2].set(jnp.sin(position * div_term))
    pe = pe.at[:, 1::2].set(jnp.cos(position * div_term))
    return pe


def _pad_to_lanes(n, lanes=128):
    return ((n + lanes - 1) // lanes) * lanes


def _num_tensorcores_per_chip():
    # v7x has 2 TensorCores per chip (a "parallel" grid axis shards across them);
    # v5e / v6e have 1, so fewer, larger grid steps are strictly better there.
    try:
        kind = jax.devices()[0].device_kind.lower()
    except Exception:
        return 1
    return 2 if "7" in kind else 1


def _vmem_working_set(tb, L, D, D4, NL, Cp):
    """(total_bytes, per_batch_elem_bytes, resident_bytes) for a block size tb."""
    per_elem = (2 * L * D * 2      # double-buffered bf16 feature block
                + L * D * 4        # f32 (x + pe) slab
                + L * D * 4        # transient f32 weighted-product slab
                + 2 * Cp * 4)      # double-buffered f32 output block
    resident = (L * D * 4          # positional encoding
                + L * NL * 4       # pe @ attn_w.T
                + D * NL * 2       # attention weights (bf16)
                + D * D4 * 4 + D4 * 4            # encoder weight + bias
                + NL * D4 * Cp * 4 + Cp * 4)     # classifier (lane-padded)
    return resident + tb * per_elem, per_elem, resident


def _choose_block_b(B, L, D, D4, NL, Cp, num_tc=1,
                    vmem_budget_bytes=28 * 1024 * 1024):
    """Batch elements per grid step, from the *real* VMEM working set."""
    _, per_elem, resident = _vmem_working_set(1, L, D, D4, NL, Cp)
    avail = max(per_elem, vmem_budget_bytes - resident)
    max_tb = max(1, min(B, avail // per_elem))
    if num_tc > 1 and B >= num_tc:
        # Only on multi-TensorCore chips (v7x) keep >= num_tc parallel steps.
        max_tb = min(max_tb, max(1, B // num_tc))
    for tb in range(int(max_tb), 0, -1):
        # (TB, Cp) output block is legal iff TB % 8 == 0 or TB == B.
        if B % tb == 0 and (tb % 8 == 0 or tb == B):
            return tb
    return B  # full-array block is always legal (single grid step)


def attention_pooling_forward(features, params, num_clips, feature_dim,
                              block_b=None):
    nt, chw = features.shape
    h = int(round((chw / feature_dim) ** 0.5))
    L = num_clips * h * h
    D = feature_dim
    x = features.reshape(-1, L, D)
    B = x.shape[0]

    pe = params["pe"][:L, :].astype(jnp.float32)             # (L, D)
    attn_w = params["attn_w"].astype(jnp.float32)            # (NL, D)
    enc_w = params["enc_w"].astype(jnp.float32)              # (D4, D)
    enc_b = params["enc_b"].astype(jnp.float32).reshape(1, -1)   # (1, D4)
    fin_w = params["fin_w"].astype(jnp.float32)               # (C, NL*D4)
    fin_b = params["fin_b"].astype(jnp.float32)                # (C,)

    NL = attn_w.shape[0]
    D4 = enc_w.shape[0]
    C = fin_w.shape[0]
    Cp = _pad_to_lanes(C)                                      # lane-dense output

    # Dominant tensor streamed as bf16 (halves HBM read bytes); accumulation f32.
    x_bf16 = x.astype(jnp.bfloat16)
    # Weight layouts chosen so the kernel needs no transposes / broadcasts.
    attn_t = attn_w.T.astype(jnp.bfloat16)                     # (D, NL)  MXU fast path
    pe_a = pe @ attn_w.T                                       # (L, NL)  PE score term
    enc_t = enc_w.T                                            # (D, D4)
    fin_t = fin_w.reshape(C, NL, D4).transpose(1, 2, 0)        # (NL, D4, C)
    fin_t = jnp.pad(fin_t, ((0, 0), (0, 0), (0, Cp - C)))      # (NL, D4, Cp)
    fin_b_p = jnp.pad(fin_b, (0, Cp - C)).reshape(1, Cp)       # (1, Cp)

    num_tc = _num_tensorcores_per_chip()
    TB = block_b if block_b is not None else _choose_block_b(
        B, L, D, D4, NL, Cp, num_tc=num_tc)
    assert B % TB == 0, f"block_b={TB} must divide batch {B}"
    grid = (B // TB,)

    est_bytes, _, _ = _vmem_working_set(TB, L, D, D4, NL, Cp)
    vmem_limit = int(min(56 * 1024 * 1024,
                         max(32 * 1024 * 1024, int(est_bytes * 1.5))))

    def _invariant_spec(shape):
        nd = len(shape)
        # Constant index_map => DMA'd once; single buffer saves the 2nd copy.
        return pl.BlockSpec(shape, lambda b, _nd=nd: (0,) * _nd,
                            pipeline_mode=pl.Buffered(1))

    out = pl.pallas_call(
        attention_pooling_kernel,
        out_shape=jax.ShapeDtypeStruct((B, Cp), jnp.float32),
        grid=grid,
        in_specs=[
            pl.BlockSpec((TB, L, D), lambda b: (b, 0, 0)),     # features (bf16)
            _invariant_spec((D, NL)),                          # attention weights
            _invariant_spec((L, NL)),                          # pe @ attn_w.T
            _invariant_spec((L, D)),                           # positional enc.
            _invariant_spec((D, D4)),                          # encoder weight
            _invariant_spec((1, D4)),                          # encoder bias
            _invariant_spec((NL, D4, Cp)),                     # classifier W
            _invariant_spec((1, Cp)),                          # classifier b
        ],
        out_specs=pl.BlockSpec((TB, Cp), lambda b: (b, 0)),
        compiler_params=pltpu.CompilerParams(
            dimension_semantics=("parallel",),
            vmem_limit_bytes=vmem_limit),
    )(x_bf16, attn_t, pe_a, pe, enc_t, enc_b, fin_t, fin_b_p)

    return out[:, :C]                                          # (B, C)


def reference_forward(features, pe, attn_w, enc_w, enc_b, fin_w, fin_b,
                      num_clips, feature_dim):
    """Pure-JAX eval-mode reference using the same bf16-rounded feature stream."""
    nt, chw = features.shape
    h = int(round((chw / feature_dim) ** 0.5))
    L = num_clips * h * h
    x = features.reshape(-1, L, feature_dim)
    x = x.astype(jnp.bfloat16).astype(jnp.float32) + pe[:L][None]
    outs = []
    for i in range(attn_w.shape[0]):
        s = jnp.einsum('bld,d->bl', x, attn_w[i])
        w = jax.nn.softmax(s, axis=-1)
        att = jnp.einsum('bl,bld->bd', w, x)
        e = jnp.maximum(att @ enc_w.T + enc_b[None, :], 0.0)
        outs.append(e)
    final = jnp.concatenate(outs, axis=-1)
    return final @ fin_w.T + fin_b[None, :]


if __name__ == "__main__":
    # Small shapes consistent with the module's forward().
    num_clips = 2          # num_segments
    D = 32                 # num_features == hidden_dim
    NL = 3                 # num_layers
    C = 10                 # num_classes
    h = 4                  # spatial side inferred from chw in forward()
    B = 16                 # batch
    nt = B * num_clips
    chw = h * h * D
    D4 = D // 4

    key = jax.random.PRNGKey(0)
    k_feat, k_attn, k_encw, k_encb, k_finw, k_finb = jax.random.split(key, 6)

    features = jax.random.normal(k_feat, (nt, chw), jnp.float32)

    # module __init__ uses max_len = num_clips * height * height**2 (height=7)
    max_len = num_clips * 7 * 7 ** 2
    pe = make_positional_encoding(max_len, D)

    # deterministic synthetic parameters (shapes from the nn.Module __init__)
    attn_w = jax.random.normal(k_attn, (NL, D), jnp.float32) / math.sqrt(D)
    enc_w = jax.random.normal(k_encw, (D4, D), jnp.float32) / math.sqrt(D)
    enc_b = jax.random.normal(k_encb, (D4,), jnp.float32) * 0.01
    fin_w = jax.random.normal(k_finw, (C, NL * D4), jnp.float32) / math.sqrt(NL * D4)
    fin_b = jax.random.normal(k_finb, (C,), jnp.float32) * 0.01

    params = dict(pe=pe, attn_w=attn_w, enc_w=enc_w, enc_b=enc_b,
                  fin_w=fin_w, fin_b=fin_b)

    out = attention_pooling_forward(features, params, num_clips, D)
    out = jax.block_until_ready(out)
    assert out.shape == (B, C) and out.dtype == jnp.float32

    ref = reference_forward(features, pe, attn_w, enc_w, enc_b, fin_w, fin_b,
                            num_clips, D)
    max_err = float(jnp.max(jnp.abs(out - ref)))
    assert max_err < 5e-2, f"max abs err {max_err}"
    print("KERNEL_OK")
</pallas_src>

<mosaic_0001>
module attributes {stable_mosaic.version = 11 : i64} {
  func.func @attention_pooling_kernel(%arg0: i32, %arg1: memref<16x32x32xbf16, #tpu.memory_space<vmem>>, %arg2: memref<32x3xbf16, #tpu.memory_space<vmem>>, %arg3: memref<32x3xf32, #tpu.memory_space<vmem>>, %arg4: memref<32x32xf32, #tpu.memory_space<vmem>>, %arg5: memref<32x8xf32, #tpu.memory_space<vmem>>, %arg6: memref<1x8xf32, #tpu.memory_space<vmem>>, %arg7: memref<3x8x128xf32, #tpu.memory_space<vmem>>, %arg8: memref<1x128xf32, #tpu.memory_space<vmem>>, %arg9: memref<16x128xf32, #tpu.memory_space<vmem>>) attributes {dimension_semantics = [#tpu.dimension_semantics<parallel>], iteration_bounds = array<i64: 1>, scalar_prefetch = 0 : i64, scratch_operands = 0 : i64, tpu.core_type = #tpu.core_type<tc>, window_params = [{transform_indices = @transform_0, window_bounds = array<i64: 16, 32, 32>}, {pipeline_mode = #tpu.pipeline_mode<synchronous>, transform_indices = @transform_1, window_bounds = array<i64: 32, 3>}, {pipeline_mode = #tpu.pipeline_mode<synchronous>, transform_indices = @transform_2, window_bounds = array<i64: 32, 3>}, {pipeline_mode = #tpu.pipeline_mode<synchronous>, transform_indices = @transform_3, window_bounds = array<i64: 32, 32>}, {pipeline_mode = #tpu.pipeline_mode<synchronous>, transform_indices = @transform_4, window_bounds = array<i64: 32, 8>}, {pipeline_mode = #tpu.pipeline_mode<synchronous>, transform_indices = @transform_5, window_bounds = array<i64: 1, 8>}, {pipeline_mode = #tpu.pipeline_mode<synchronous>, transform_indices = @transform_6, window_bounds = array<i64: 3, 8, 128>}, {pipeline_mode = #tpu.pipeline_mode<synchronous>, transform_indices = @transform_7, window_bounds = array<i64: 1, 128>}, {transform_indices = @transform_8, window_bounds = array<i64: 16, 128>}]} {
    %c0 = arith.constant 0 : index
    %c0_0 = arith.constant 0 : index
    %c0_1 = arith.constant 0 : index
    %0 = vector.load %arg1[%c0, %c0_0, %c0_1] : memref<16x32x32xbf16, #tpu.memory_space<vmem>>, vector<16x32x32xbf16>
    %1 = vector.shape_cast %0 : vector<16x32x32xbf16> to vector<512x32xbf16>
    %c0_2 = arith.constant 0 : index
    %c0_3 = arith.constant 0 : index
    %2 = vector.load %arg2[%c0_2, %c0_3] : memref<32x3xbf16, #tpu.memory_space<vmem>>, vector<32x3xbf16>
    %cst = arith.constant dense<0.000000e+00> : vector<512x3xf32>
    %3 = tpu.matmul %1, %2, %cst {dimension_numbers = #tpu.dot_dimension_numbers<[1], [0], [0], [1], [0, 0, 1, 1], [], []>} : vector<512x32xbf16>, vector<32x3xbf16>, vector<512x3xf32> -> vector<512x3xf32>
    %4 = vector.shape_cast %3 : vector<512x3xf32> to vector<16x32x3xf32>
    %c0_4 = arith.constant 0 : index
    %c0_5 = arith.constant 0 : index
    %5 = vector.load %arg3[%c0_4, %c0_5] : memref<32x3xf32, #tpu.memory_space<vmem>>, vector<32x3xf32>
    %6 = vector.shape_cast %5 : vector<32x3xf32> to vector<1x32x3xf32>
    %7 = vector.broadcast %6 : vector<1x32x3xf32> to vector<16x32x3xf32>
    %8 = arith.addf %4, %7 : vector<16x32x3xf32>
    %cst_6 = arith.constant dense<0xFF800000> : vector<16x3xf32>
    %9 = vector.multi_reduction <maximumf>, %8, %cst_6 [1] : vector<16x32x3xf32> to vector<16x3xf32>
    %10 = vector.shape_cast %9 : vector<16x3xf32> to vector<16x1x3xf32>
    %11 = vector.broadcast %10 : vector<16x1x3xf32> to vector<16x32x3xf32>
    %12 = arith.subf %8, %11 : vector<16x32x3xf32>
    %13 = math.exp %12 : vector<16x32x3xf32>
    %cst_7 = arith.constant dense<0.000000e+00> : vector<16x3xf32>
    %14 = vector.multi_reduction <add>, %13, %cst_7 [1] : vector<16x32x3xf32> to vector<16x3xf32>
    %15 = vector.shape_cast %14 : vector<16x3xf32> to vector<16x1x3xf32>
    %16 = tpu.reciprocal %15 {approx = true} : vector<16x1x3xf32> -> vector<16x1x3xf32>
    %17 = vector.broadcast %16 : vector<16x1x3xf32> to vector<16x32x3xf32>
    %18 = arith.mulf %13, %17 : vector<16x32x3xf32>
    %19 = arith.extf %0 : vector<16x32x32xbf16> to vector<16x32x32xf32>
    %c0_8 = arith.constant 0 : index
    %c0_9 = arith.constant 0 : index
    %20 = vector.load %arg4[%c0_8, %c0_9] : memref<32x32xf32, #tpu.memory_space<vmem>>, vector<32x32xf32>
    %21 = vector.shape_cast %20 : vector<32x32xf32> to vector<1x32x32xf32>
    %22 = vector.broadcast %21 : vector<1x32x32xf32> to vector<16x32x32xf32>
    %23 = arith.addf %19, %22 : vector<16x32x32xf32>
    %24 = vector.extract_strided_slice %18 {offsets = [0, 0, 0], sizes = [16, 32, 1], strides = [1, 1, 1]} : vector<16x32x3xf32> to vector<16x32x1xf32>
    %25 = vector.broadcast %24 : vector<16x32x1xf32> to vector<16x32x32xf32>
    %26 = arith.mulf %23, %25 : vector<16x32x32xf32>
    %cst_10 = arith.constant dense<0.000000e+00> : vector<16x32xf32>
    %27 = vector.multi_reduction <add>, %26, %cst_10 [1] : vector<16x32x32xf32> to vector<16x32xf32>
    %c0_11 = arith.constant 0 : index
    %c0_12 = arith.constant 0 : index
    %28 = vector.load %arg5[%c0_11, %c0_12] : memref<32x8xf32, #tpu.memory_space<vmem>>, vector<32x8xf32>
    %cst_13 = arith.constant dense<0.000000e+00> : vector<16x8xf32>
    %29 = tpu.matmul %27, %28, %cst_13 {dimension_numbers = #tpu.dot_dimension_numbers<[1], [0], [0], [1], [0, 0, 1, 1], [], []>} : vector<16x32xf32>, vector<32x8xf32>, vector<16x8xf32> -> vector<16x8xf32>
    %c0_14 = arith.constant 0 : index
    %c0_15 = arith.constant 0 : index
    %30 = vector.load %arg6[%c0_14, %c0_15] : memref<1x8xf32, #tpu.memory_space<vmem>>, vector<1x8xf32>
    %31 = vector.broadcast %30 : vector<1x8xf32> to vector<16x8xf32>
    %32 = arith.addf %29, %31 : vector<16x8xf32>
    %cst_16 = arith.constant 0.000000e+00 : f32
    %33 = vector.broadcast %cst_16 : f32 to vector<16x8xf32>
    %34 = arith.maximumf %32, %33 : vector<16x8xf32>
    %c0_17 = arith.constant 0 : index
    %c0_18 = arith.constant 0 : index
    %c0_19 = arith.constant 0 : index
    %35 = vector.load %arg7[%c0_17, %c0_18, %c0_19] : memref<3x8x128xf32, #tpu.memory_space<vmem>>, vector<1x8x128xf32>
    %36 = vector.shape_cast %35 : vector<1x8x128xf32> to vector<8x128xf32>
    %cst_20 = arith.constant dense<0.000000e+00> : vector<16x128xf32>
    %37 = tpu.matmul %34, %36, %cst_20 {dimension_numbers = #tpu.dot_dimension_numbers<[1], [0], [0], [1], [0, 0, 1, 1], [], []>} : vector<16x8xf32>, vector<8x128xf32>, vector<16x128xf32> -> vector<16x128xf32>
    %38 = vector.extract_strided_slice %18 {offsets = [0, 0, 1], sizes = [16, 32, 1], strides = [1, 1, 1]} : vector<16x32x3xf32> to vector<16x32x1xf32>
    %39 = vector.broadcast %38 : vector<16x32x1xf32> to vector<16x32x32xf32>
    %40 = arith.mulf %23, %39 : vector<16x32x32xf32>
    %cst_21 = arith.constant dense<0.000000e+00> : vector<16x32xf32>
    %41 = vector.multi_reduction <add>, %40, %cst_21 [1] : vector<16x32x32xf32> to vector<16x32xf32>
    %c0_22 = arith.constant 0 : index
    %c0_23 = arith.constant 0 : index
    %42 = vector.load %arg5[%c0_22, %c0_23] : memref<32x8xf32, #tpu.memory_space<vmem>>, vector<32x8xf32>
    %cst_24 = arith.constant dense<0.000000e+00> : vector<16x8xf32>
    %43 = tpu.matmul %41, %42, %cst_24 {dimension_numbers = #tpu.dot_dimension_numbers<[1], [0], [0], [1], [0, 0, 1, 1], [], []>} : vector<16x32xf32>, vector<32x8xf32>, vector<16x8xf32> -> vector<16x8xf32>
    %c0_25 = arith.constant 0 : index
    %c0_26 = arith.constant 0 : index
    %44 = vector.load %arg6[%c0_25, %c0_26] : memref<1x8xf32, #tpu.memory_space<vmem>>, vector<1x8xf32>
    %45 = vector.broadcast %44 : vector<1x8xf32> to vector<16x8xf32>
    %46 = arith.addf %43, %45 : vector<16x8xf32>
    %cst_27 = arith.constant 0.000000e+00 : f32
    %47 = vector.broadcast %cst_27 : f32 to vector<16x8xf32>
    %48 = arith.maximumf %46, %47 : vector<16x8xf32>
    %c1 = arith.constant 1 : index
    %c0_28 = arith.constant 0 : index
    %c0_29 = arith.constant 0 : index
    %49 = vector.load %arg7[%c1, %c0_28, %c0_29] : memref<3x8x128xf32, #tpu.memory_space<vmem>>, vector<1x8x128xf32>
    %50 = vector.shape_cast %49 : vector<1x8x128xf32> to vector<8x128xf32>
    %cst_30 = arith.constant dense<0.000000e+00> : vector<16x128xf32>
    %51 = tpu.matmul %48, %50, %cst_30 {dimension_numbers = #tpu.dot_dimension_numbers<[1], [0], [0], [1], [0, 0, 1, 1], [], []>} : vector<16x8xf32>, vector<8x128xf32>, vector<16x128xf32> -> vector<16x128xf32>
    %52 = arith.addf %37, %51 : vector<16x128xf32>
    %53 = vector.extract_strided_slice %18 {offsets = [0, 0, 2], sizes = [16, 32, 1], strides = [1, 1, 1]} : vector<16x32x3xf32> to vector<16x32x1xf32>
    %54 = vector.broadcast %53 : vector<16x32x1xf32> to vector<16x32x32xf32>
    %55 = arith.mulf %23, %54 : vector<16x32x32xf32>
    %cst_31 = arith.constant dense<0.000000e+00> : vector<16x32xf32>
    %56 = vector.multi_reduction <add>, %55, %cst_31 [1] : vector<16x32x32xf32> to vector<16x32xf32>
    %c0_32 = arith.constant 0 : index
    %c0_33 = arith.constant 0 : index
    %57 = vector.load %arg5[%c0_32, %c0_33] : memref<32x8xf32, #tpu.memory_space<vmem>>, vector<32x8xf32>
    %cst_34 = arith.constant dense<0.000000e+00> : vector<16x8xf32>
    %58 = tpu.matmul %56, %57, %cst_34 {dimension_numbers = #tpu.dot_dimension_numbers<[1], [0], [0], [1], [0, 0, 1, 1], [], []>} : vector<16x32xf32>, vector<32x8xf32>, vector<16x8xf32> -> vector<16x8xf32>
    %c0_35 = arith.constant 0 : index
    %c0_36 = arith.constant 0 : index
    %59 = vector.load %arg6[%c0_35, %c0_36] : memref<1x8xf32, #tpu.memory_space<vmem>>, vector<1x8xf32>
    %60 = vector.broadcast %59 : vector<1x8xf32> to vector<16x8xf32>
    %61 = arith.addf %58, %60 : vector<16x8xf32>
    %cst_37 = arith.constant 0.000000e+00 : f32
    %62 = vector.broadcast %cst_37 : f32 to vector<16x8xf32>
    %63 = arith.maximumf %61, %62 : vector<16x8xf32>
    %c2 = arith.constant 2 : index
    %c0_38 = arith.constant 0 : index
    %c0_39 = arith.constant 0 : index
    %64 = vector.load %arg7[%c2, %c0_38, %c0_39] : memref<3x8x128xf32, #tpu.memory_space<vmem>>, vector<1x8x128xf32>
    %65 = vector.shape_cast %64 : vector<1x8x128xf32> to vector<8x128xf32>
    %cst_40 = arith.constant dense<0.000000e+00> : vector<16x128xf32>
    %66 = tpu.matmul %63, %65, %cst_40 {dimension_numbers = #tpu.dot_dimension_numbers<[1], [0], [0], [1], [0, 0, 1, 1], [], []>} : vector<16x8xf32>, vector<8x128xf32>, vector<16x128xf32> -> vector<16x128xf32>
    %67 = arith.addf %52, %66 : vector<16x128xf32>
    %c0_41 = arith.constant 0 : index
    %c0_42 = arith.constant 0 : index
    %68 = vector.load %arg8[%c0_41, %c0_42] : memref<1x128xf32, #tpu.memory_space<vmem>>, vector<1x128xf32>
    %69 = vector.broadcast %68 : vector<1x128xf32> to vector<16x128xf32>
    %70 = arith.addf %67, %69 : vector<16x128xf32>
    %c0_43 = arith.constant 0 : index
    %c0_44 = arith.constant 0 : index
    %71 = vector.load %arg9[%c0_43, %c0_44] : memref<16x128xf32, #tpu.memory_space<vmem>>, vector<16x128xf32>
    tpu.vector_store %arg9[%c0_43, %c0_44], %70 {strides = array<i32>} : memref<16x128xf32, #tpu.memory_space<vmem>>, vector<16x128xf32>,
    return
  }
  func.func @transform_0(%arg0: i32) -> (i32, i32, i32) {
    %c0_i32 = arith.constant 0 : i32
    %c0_i32_0 = arith.constant 0 : i32
    %c0_i32_1 = arith.constant 0 : i32
    return %arg0, %c0_i32, %c0_i32_0 : i32, i32, i32
  }
  func.func @transform_1(%arg0: i32) -> (i32, i32) {
    %c0_i32 = arith.constant 0 : i32
    %c0_i32_0 = arith.constant 0 : i32
    %c0_i32_1 = arith.constant 0 : i32
    return %c0_i32, %c0_i32_0 : i32, i32
  }
  func.func @transform_2(%arg0: i32) -> (i32, i32) {
    %c0_i32 = arith.constant 0 : i32
    %c0_i32_0 = arith.constant 0 : i32
    %c0_i32_1 = arith.constant 0 : i32
    return %c0_i32, %c0_i32_0 : i32, i32
  }
  func.func @transform_3(%arg0: i32) -> (i32, i32) {
    %c0_i32 = arith.constant 0 : i32
    %c0_i32_0 = arith.constant 0 : i32
    %c0_i32_1 = arith.constant 0 : i32
    return %c0_i32, %c0_i32_0 : i32, i32
  }
  func.func @transform_4(%arg0: i32) -> (i32, i32) {
    %c0_i32 = arith.constant 0 : i32
    %c0_i32_0 = arith.constant 0 : i32
    %c0_i32_1 = arith.constant 0 : i32
    return %c0_i32, %c0_i32_0 : i32, i32
  }
  func.func @transform_5(%arg0: i32) -> (i32, i32) {
    %c0_i32 = arith.constant 0 : i32
    %c0_i32_0 = arith.constant 0 : i32
    %c0_i32_1 = arith.constant 0 : i32
    return %c0_i32, %c0_i32_0 : i32, i32
  }
  func.func @transform_6(%arg0: i32) -> (i32, i32, i32) {
    %c0_i32 = arith.constant 0 : i32
    %c0_i32_0 = arith.constant 0 : i32
    %c0_i32_1 = arith.constant 0 : i32
    %c0_i32_2 = arith.constant 0 : i32
    return %c0_i32, %c0_i32_0, %c0_i32_1 : i32, i32, i32
  }
  func.func @transform_7(%arg0: i32) -> (i32, i32) {
    %c0_i32 = arith.constant 0 : i32
    %c0_i32_0 = arith.constant 0 : i32
    %c0_i32_1 = arith.constant 0 : i32
    return %c0_i32, %c0_i32_0 : i32, i32
  }
  func.func @transform_8(%arg0: i32) -> (i32, i32) {
    %c0_i32 = arith.constant 0 : i32
    %c0_i32_0 = arith.constant 0 : i32
    return %arg0, %c0_i32 : i32, i32
  }
}

</mosaic_0001>

<llo_original>
// kernel: tpu_custom_call.1
$region0: #{tpu_custom_call.1}
  #allocation0 [shape = 'u32[]', space=smem, size = 0x4, offset = 0x4, fixed_abs, tag = 'smem constant byte address 0x4 - core index']
  #allocation1 [shape = 'u32[144,128]{1,0:T(1,128)}', space=vmem, size = 0x12000, scoped, tag = 'internal scratch']
  %s0 = inlined_call_operand.hbm [shape: bf16[16,32,32], index: 0, kind: input, shape index: {}]
  %s1 = inlined_call_operand.vmem [shape: bf16[32,3], index: 1, kind: input, shape index: {}]
  %s2 = inlined_call_operand.vmem [shape: f32[32,3], index: 2, kind: input, shape index: {}]
  %s3 = inlined_call_operand.vmem [shape: f32[32,32], index: 3, kind: input, shape index: {}]
  %s4 = inlined_call_operand.vmem [shape: f32[32,8], index: 4, kind: input, shape index: {}]
  %s5 = inlined_call_operand.vmem [shape: f32[1,8], index: 5, kind: input, shape index: {}]
  %s6 = inlined_call_operand.vmem [shape: f32[3,8,128], index: 6, kind: input, shape index: {}]
  %s7 = inlined_call_operand.vmem [shape: f32[1,128], index: 7, kind: input, shape index: {}]
  %s8 = inlined_call_operand.hbm [shape: f32[16,128], index: 8, kind: output, shape index: {}]
  %s9 = sld [smem:[#allocation0]]
  $region46: #{tpu_custom_call.1} parent=0
    _
  %s11 = ssub.s32 1, %s9
  %s12 = scalar_select 0, %s11, %s9
  $region1: #{tpu_custom_call.1} parent=0
    #allocation2 [shape = 'u8[131072]{0}', space=vmem, size = 0x20000, scoped, tag = 'input window, operand 0, single buffered']
    #allocation3 [shape = 's32[1]{0}', space=sflag, size = 0x4, scoped, tag = 'scoped memory for tpu_custom_call.1']
    #allocation4 [shape = 's32[1]{0}', space=sflag, size = 0x4, scoped, tag = 'scoped memory for tpu_custom_call.1']
    #allocation5 [shape = 'u8[8192]{0}', space=vmem, size = 0x2000, scoped, tag = 'output window, operand 0, single buffered']
    %13 = vsyncpa [#allocation3], 0
    %14 = vsyncpa [#allocation4], 0
    // Predicated region
    $region2: #{tpu_custom_call.1} parent=1 // pred_check
      _
    $region3: #{tpu_custom_call.1} parent=1 // pred_check_branch
      %16 = sbr.rel (0) target = $region5
    $region4: #{tpu_custom_call.1} parent=1 // pred_region
      %s18 = ssub.s32 4096, 4096
      %19 = vsyncadd [#allocation3], %s18
      %s20 = sshll.u32 [#allocation2], 4
      %s21 = int_to_ptr.vmem [resolvable:$true] %s20
      %26 = dma.hbm_to_vmem [thread:$0]  %s0, 4096, %s21, [#allocation3], 64, 64, 4
    $region5: #{tpu_custom_call.1} parent=1 // pred_fallthru
      _
    // Predicated region
    $region6: #{tpu_custom_call.1} parent=1 // pred_check
      _
    $region7: #{tpu_custom_call.1} parent=1 // pred_check_branch
      %28 = sbr.rel (0) target = $region9
    $region8: #{tpu_custom_call.1} parent=1 // pred_region
      _
    $region9: #{tpu_custom_call.1} parent=1 // pred_fallthru
      _
    // Predicated region
    $region10: #{tpu_custom_call.1} parent=1 // pred_check
      _
    $region11: #{tpu_custom_call.1} parent=1 // pred_check_branch
      %30 = sbr.rel (0) target = $region13
    $region12: #{tpu_custom_call.1} parent=1 // pred_region
      _
    $region13: #{tpu_custom_call.1} parent=1 // pred_fallthru
      _
    // Predicated region
    $region14: #{tpu_custom_call.1} parent=1 // pred_check
      _
    $region15: #{tpu_custom_call.1} parent=1 // pred_check_branch
      %32 = sbr.rel (0) target = $region17
    $region16: #{tpu_custom_call.1} parent=1 // pred_region
      _
    $region17: #{tpu_custom_call.1} parent=1 // pred_fallthru
      _
    // Predicated region
    $region18: #{tpu_custom_call.1} parent=1 // pred_check
      _
    $region19: #{tpu_custom_call.1} parent=1 // pred_check_branch
      %34 = sbr.rel (0) target = $region21
    $region20: #{tpu_custom_call.1} parent=1 // pred_region
      _
    $region21: #{tpu_custom_call.1} parent=1 // pred_fallthru
      _
    // Predicated region
    $region22: #{tpu_custom_call.1} parent=1 // pred_check
      _
    $region23: #{tpu_custom_call.1} parent=1 // pred_check_branch
      %36 = sbr.rel (0) target = $region25
    $region24: #{tpu_custom_call.1} parent=1 // pred_region
      _
    $region25: #{tpu_custom_call.1} parent=1 // pred_fallthru
      _
    // Predicated region
    $region26: #{tpu_custom_call.1} parent=1 // pred_check
      _
    $region27: #{tpu_custom_call.1} parent=1 // pred_check_branch
      %38 = sbr.rel (0) target = $region29
    $region28: #{tpu_custom_call.1} parent=1 // pred_region
      _
    $region29: #{tpu_custom_call.1} parent=1 // pred_fallthru
      _
    // Predicated region
    $region30: #{tpu_custom_call.1} parent=1 // pred_check
      _
    $region31: #{tpu_custom_call.1} parent=1 // pred_check_branch
      %40 = sbr.rel (0) target = $region33
    $region32: #{tpu_custom_call.1} parent=1 // pred_region
      _
    $region33: #{tpu_custom_call.1} parent=1 // pred_fallthru
      _
    // Predicated region
    $region34: #{tpu_custom_call.1} parent=1 // pred_check
      _
    $region35: #{tpu_custom_call.1} parent=1 // pred_check_branch
      %42 = sbr.rel (0) target = $region37
    $region36: #{tpu_custom_call.1} parent=1 // pred_region
      %43 = dma.done [#allocation3], 4096
    $region37: #{tpu_custom_call.1} parent=1 // pred_fallthru
      _
    %v45 = vld [vmem:[#allocation2] sm:$0xf]
    %v46 = vld [vmem:[#allocation2 + $0x4] sm:$0xf]
    %v47 = vld [vmem:[#allocation2 + $0x8] sm:$0xf]
    %v48 = vld [vmem:[#allocation2 + $0xc] sm:$0xf]
    %v49 = vld [vmem:[#allocation2 + $0x10] sm:$0xf]
    %v50 = vld [vmem:[#allocation2 + $0x14] sm:$0xf]
    %v51 = vld [vmem:[#allocation2 + $0x18] sm:$0xf]
    %v52 = vld [vmem:[#allocation2 + $0x1c] sm:$0xf]
    %v53 = vld [vmem:[#allocation2 + $0x20] sm:$0xf]
    %v54 = vld [vmem:[#allocation2 + $0x24] sm:$0xf]
    %v55 = vld [vmem:[#allocation2 + $0x28] sm:$0xf]
    %v56 = vld [vmem:[#allocation2 + $0x2c] sm:$0xf]
    %v57 = vld [vmem:[#allocation2 + $0x30] sm:$0xf]
    %v58 = vld [vmem:[#allocation2 + $0x34] sm:$0xf]
    %v59 = vld [vmem:[#allocation2 + $0x38] sm:$0xf]
    %v60 = vld [vmem:[#allocation2 + $0x3c] sm:$0xf]
    %v61 = vld [vmem:[#allocation2 + $0x40] sm:$0xf]
    %v62 = vld [vmem:[#allocation2 + $0x44] sm:$0xf]
    %v63 = vld [vmem:[#allocation2 + $0x48] sm:$0xf]
    %v64 = vld [vmem:[#allocation2 + $0x4c] sm:$0xf]
    %v65 = vld [vmem:[#allocation2 + $0x50] sm:$0xf]
    %v66 = vld [vmem:[#allocation2 + $0x54] sm:$0xf]
    %v67 = vld [vmem:[#allocation2 + $0x58] sm:$0xf]
    %v68 = vld [vmem:[#allocation2 + $0x5c] sm:$0xf]
    %v69 = vld [vmem:[#allocation2 + $0x60] sm:$0xf]
    %v70 = vld [vmem:[#allocation2 + $0x64] sm:$0xf]
    %v71 = vld [vmem:[#allocation2 + $0x68] sm:$0xf]
    %v72 = vld [vmem:[#allocation2 + $0x6c] sm:$0xf]
    %v73 = vld [vmem:[#allocation2 + $0x70] sm:$0xf]
    %v74 = vld [vmem:[#allocation2 + $0x74] sm:$0xf]
    %v75 = vld [vmem:[#allocation2 + $0x78] sm:$0xf]
    %v76 = vld [vmem:[#allocation2 + $0x7c] sm:$0xf]
    %v77 = vld [vmem:[#allocation2 + $0x80] sm:$0xf]
    %v78 = vld [vmem:[#allocation2 + $0x84] sm:$0xf]
    %v79 = vld [vmem:[#allocation2 + $0x88] sm:$0xf]
    %v80 = vld [vmem:[#allocation2 + $0x8c] sm:$0xf]
    %v81 = vld [vmem:[#allocation2 + $0x90] sm:$0xf]
    %v82 = vld [vmem:[#allocation2 + $0x94] sm:$0xf]
    %v83 = vld [vmem:[#allocation2 + $0x98] sm:$0xf]
    %v84 = vld [vmem:[#allocation2 + $0x9c] sm:$0xf]
    %v85 = vld [vmem:[#allocation2 + $0xa0] sm:$0xf]
    %v86 = vld [vmem:[#allocation2 + $0xa4] sm:$0xf]
    %v87 = vld [vmem:[#allocation2 + $0xa8] sm:$0xf]
    %v88 = vld [vmem:[#allocation2 + $0xac] sm:$0xf]
    %v89 = vld [vmem:[#allocation2 + $0xb0] sm:$0xf]
    %v90 = vld [vmem:[#allocation2 + $0xb4] sm:$0xf]
    %v91 = vld [vmem:[#allocation2 + $0xb8] sm:$0xf]
    %v92 = vld [vmem:[#allocation2 + $0xbc] sm:$0xf]
    %v93 = vld [vmem:[#allocation2 + $0xc0] sm:$0xf]
    %v94 = vld [vmem:[#allocation2 + $0xc4] sm:$0xf]
    %v95 = vld [vmem:[#allocation2 + $0xc8] sm:$0xf]
    %v96 = vld [vmem:[#allocation2 + $0xcc] sm:$0xf]
    %v97 = vld [vmem:[#allocation2 + $0xd0] sm:$0xf]
    %v98 = vld [vmem:[#allocation2 + $0xd4] sm:$0xf]
    %v99 = vld [vmem:[#allocation2 + $0xd8] sm:$0xf]
    %v100 = vld [vmem:[#allocation2 + $0xdc] sm:$0xf]
    %v101 = vld [vmem:[#allocation2 + $0xe0] sm:$0xf]
    %v102 = vld [vmem:[#allocation2 + $0xe4] sm:$0xf]
    %v103 = vld [vmem:[#allocation2 + $0xe8] sm:$0xf]
    %v104 = vld [vmem:[#allocation2 + $0xec] sm:$0xf]
    %v105 = vld [vmem:[#allocation2 + $0xf0] sm:$0xf]
    %v106 = vld [vmem:[#allocation2 + $0xf4] sm:$0xf]
    %v107 = vld [vmem:[#allocation2 + $0xf8] sm:$0xf]
    %v108 = vld [vmem:[#allocation2 + $0xfc] sm:$0xf]
    %v109 = vld [vmem:[%s1] sm:$0xf]
    %v110 = vld [vmem:[%s1 + $0x4] sm:$0xf]
    %v111 = vld [vmem:[%s1 + $0x8] sm:$0xf]
    %v112 = vld [vmem:[%s1 + $0xc] sm:$0xf]
    %v177 = vunpack.c.l.b16 %v45
    %v178 = vunpack.c.l.b16 %v46
    %v179 = vunpack.c.l.b16 %v47
    %v180 = vunpack.c.l.b16 %v48
    %v181 = vunpack.c.l.b16 %v49
    %v182 = vunpack.c.l.b16 %v50
    %v183 = vunpack.c.l.b16 %v51
    %v184 = vunpack.c.l.b16 %v52
    %v185 = vunpack.c.l.b16 %v53
    %v186 = vunpack.c.l.b16 %v54
    %v187 = vunpack.c.l.b16 %v55
    %v188 = vunpack.c.l.b16 %v56
    %v189 = vunpack.c.l.b16 %v57
    %v190 = vunpack.c.l.b16 %v58
    %v191 = vunpack.c.l.b16 %v59
    %v192 = vunpack.c.l.b16 %v60
    %v193 = vunpack.c.l.b16 %v61
    %v194 = vunpack.c.l.b16 %v62
    %v195 = vunpack.c.l.b16 %v63
    %v196 = vunpack.c.l.b16 %v64
    %v197 = vunpack.c.l.b16 %v65
    %v198 = vunpack.c.l.b16 %v66
    %v199 = vunpack.c.l.b16 %v67
    %v200 = vunpack.c.l.b16 %v68
    %v201 = vunpack.c.l.b16 %v69
    %v202 = vunpack.c.l.b16 %v70
    %v203 = vunpack.c.l.b16 %v71
    %v204 = vunpack.c.l.b16 %v72
    %v205 = vunpack.c.l.b16 %v73
    %v206 = vunpack.c.l.b16 %v74
    %v207 = vunpack.c.l.b16 %v75
    %v208 = vunpack.c.l.b16 %v76
    %v209 = vunpack.c.l.b16 %v77
    %v210 = vunpack.c.l.b16 %v78
    %v211 = vunpack.c.l.b16 %v79
    %v212 = vunpack.c.l.b16 %v80
    %v213 = vunpack.c.l.b16 %v81
    %v214 = vunpack.c.l.b16 %v82
    %v215 = vunpack.c.l.b16 %v83
    %v216 = vunpack.c.l.b16 %v84
    %v217 = vunpack.c.l.b16 %v85
    %v218 = vunpack.c.l.b16 %v86
    %v219 = vunpack.c.l.b16 %v87
    %v220 = vunpack.c.l.b16 %v88
    %v221 = vunpack.c.l.b16 %v89
    %v222 = vunpack.c.l.b16 %v90
    %v223 = vunpack.c.l.b16 %v91
    %v224 = vunpack.c.l.b16 %v92
    %v225 = vunpack.c.l.b16 %v93
    %v226 = vunpack.c.l.b16 %v94
    %v227 = vunpack.c.l.b16 %v95
    %v228 = vunpack.c.l.b16 %v96
    %v229 = vunpack.c.l.b16 %v97
    %v230 = vunpack.c.l.b16 %v98
    %v231 = vunpack.c.l.b16 %v99
    %v232 = vunpack.c.l.b16 %v100
    %v233 = vunpack.c.l.b16 %v101
    %v234 = vunpack.c.l.b16 %v102
    %v235 = vunpack.c.l.b16 %v103
    %v236 = vunpack.c.l.b16 %v104
    %v237 = vunpack.c.l.b16 %v105
    %v238 = vunpack.c.l.b16 %v106
    %v239 = vunpack.c.l.b16 %v107
    %v240 = vunpack.c.l.b16 %v108
    %v241 = vpack.c.b16 %v178, %v177
    %v242 = vpack.c.b16 %v180, %v179
    %v243 = vpack.c.b16 %v182, %v181
    %v244 = vpack.c.b16 %v184, %v183
    %v245 = vpack.c.b16 %v186, %v185
    %v246 = vpack.c.b16 %v188, %v187
    %v247 = vpack.c.b16 %v190, %v189
    %v248 = vpack.c.b16 %v192, %v191
    %v249 = vpack.c.b16 %v194, %v193
    %v250 = vpack.c.b16 %v196, %v195
    %v251 = vpack.c.b16 %v198, %v197
    %v252 = vpack.c.b16 %v200, %v199
    %v253 = vpack.c.b16 %v202, %v201
    %v254 = vpack.c.b16 %v204, %v203
    %v255 = vpack.c.b16 %v206, %v205
    %v256 = vpack.c.b16 %v208, %v207
    %v257 = vpack.c.b16 %v210, %v209
    %v258 = vpack.c.b16 %v212, %v211
    %v259 = vpack.c.b16 %v214, %v213
    %v260 = vpack.c.b16 %v216, %v215
    %v261 = vpack.c.b16 %v218, %v217
    %v262 = vpack.c.b16 %v220, %v219
    %v263 = vpack.c.b16 %v222, %v221
    %v264 = vpack.c.b16 %v224, %v223
    %v265 = vpack.c.b16 %v226, %v225
    %v266 = vpack.c.b16 %v228, %v227
    %v267 = vpack.c.b16 %v230, %v229
    %v268 = vpack.c.b16 %v232, %v231
    %v269 = vpack.c.b16 %v234, %v233
    %v270 = vpack.c.b16 %v236, %v235
    %v271 = vpack.c.b16 %v238, %v237
    %v272 = vpack.c.b16 %v240, %v239
    %v277 = vunpack.c.l.b16 %v109
    %v278 = vunpack.c.l.b16 %v110
    %v279 = vunpack.c.l.b16 %v111
    %v280 = vunpack.c.l.b16 %v112
    %v281 = vpack.c.b16 %v278, %v277
    %v282 = vpack.c.b16 %v280, %v279
    %vm285 = vcmask 261120
    %v287 = vsel %vm285, %v241, 0
    %v290 = vsel %vm285, %v242, 0
    %v293 = vsel %vm285, %v243, 0
    %v296 = vsel %vm285, %v244, 0
    %v299 = vsel %vm285, %v245, 0
    %v302 = vsel %vm285, %v246, 0
    %v305 = vsel %vm285, %v247, 0
    %v308 = vsel %vm285, %v248, 0
    %v311 = vsel %vm285, %v249, 0
    %v314 = vsel %vm285, %v250, 0
    %v317 = vsel %vm285, %v251, 0
    %v320 = vsel %vm285, %v252, 0
    %v323 = vsel %vm285, %v253, 0
    %v326 = vsel %vm285, %v254, 0
    %v329 = vsel %vm285, %v255, 0
    %v332 = vsel %vm285, %v256, 0
    %v335 = vsel %vm285, %v257, 0
    %v338 = vsel %vm285, %v258, 0
    %v341 = vsel %vm285, %v259, 0
    %v344 = vsel %vm285, %v260, 0
    %v347 = vsel %vm285, %v261, 0
    %v350 = vsel %vm285, %v262, 0
    %v353 = vsel %vm285, %v263, 0
    %v356 = vsel %vm285, %v264, 0
    %v359 = vsel %vm285, %v265, 0
    %v362 = vsel %vm285, %v266, 0
    %v365 = vsel %vm285, %v267, 0
    %v368 = vsel %vm285, %v268, 0
    %v371 = vsel %vm285, %v269, 0
    %v374 = vsel %vm285, %v270, 0
    %v377 = vsel %vm285, %v271, 0
    %v380 = vsel %vm285, %v272, 0
    %382 = vmatprep.subr.bf16.mxu0 0
    %383 = vmatpush1.bf16.msra.mxu0 %v281
    %384 = vmatprep.subr.bf16.mxu0 0
    %385 = vmatpush1.bf16.msra.mxu0 %v282
    %386 = vmatprep.subr.bf16.mxu0 0
    %387 = vmatpush1.bf16.msra.mxu0 0
    %388 = vmatprep.subr.bf16.mxu0 0
    %389 = vmatpush1.bf16.msra.mxu0 0
    %390 = vmatprep.subr.bf16.mxu0 0
    %391 = vmatpush1.bf16.msra.mxu0 0
    %392 = vmatprep.subr.bf16.mxu0 0
    %393 = vmatpush1.bf16.msra.mxu0 0
    %394 = vmatprep.subr.bf16.mxu0 0
    %395 = vmatpush1.bf16.msra.mxu0 0
    %396 = vmatprep.subr.bf16.mxu0 0
    %397 = vmatpush1.bf16.msra.mxu0 0
    %398 = vmatprep.subr.bf16.mxu0 0
    %399 = vmatpush1.bf16.msra.mxu0 0
    %400 = vmatprep.subr.bf16.mxu0 0
    %401 = vmatpush1.bf16.msra.mxu0 0
    %402 = vmatprep.subr.bf16.mxu0 0
    %403 = vmatpush1.bf16.msra.mxu0 0
    %404 = vmatprep.subr.bf16.mxu0 0
    %405 = vmatpush1.bf16.msra.mxu0 0
    %406 = vmatprep.subr.bf16.mxu0 0
    %407 = vmatpush1.bf16.msra.mxu0 0
    %408 = vmatprep.subr.bf16.mxu0 0
    %409 = vmatpush1.bf16.msra.mxu0 0
    %410 = vmatprep.subr.bf16.mxu0 0
    %411 = vmatpush1.bf16.msra.mxu0 0
    %412 = vmatprep.subr.bf16.mxu0 0
    %413 = vmatpush1.bf16.msra.mxu0 0
    %414 = vmatprep.mubr.bf16.mxu0 0
    %415 = vmatmul.mubr.bf16.gmra.mrb[0].mxu0 %v287
    %v416 = vpop.f32.mrb[0].mxu0
    %v417 = vadd.f32 0.0, %v416
    %v418 = vpop.f32.mrb[0].mxu0
    %v419 = vpop.f32.mrb[0].mxu0
    %v420 = vadd.f32 0.0, %v419
    %v421 = vpop.f32.mrb[0].mxu0
    %422 = vmatprep.mubr.bf16.mxu0 0
    %423 = vmatmul.mubr.bf16.gmra.mrb[0].mxu0 %v290
    %v424 = vpop.f32.mrb[0].mxu0
    %v425 = vadd.f32 0.0, %v424
    %v426 = vpop.f32.mrb[0].mxu0
    %v427 = vpop.f32.mrb[0].mxu0
    %v428 = vadd.f32 0.0, %v427
    %v429 = vpop.f32.mrb[0].mxu0
    %430 = vmatprep.mubr.bf16.mxu0 0
    %431 = vmatmul.mubr.bf16.gmra.mrb[0].mxu0 %v293
    %v432 = vpop.f32.mrb[0].mxu0
    %v433 = vadd.f32 0.0, %v432
    %v434 = vpop.f32.mrb[0].mxu0
    %v435 = vpop.f32.mrb[0].mxu0
    %v436 = vadd.f32 0.0, %v435
    %v437 = vpop.f32.mrb[0].mxu0
    %438 = vmatprep.mubr.bf16.mxu0 0
    %439 = vmatmul.mubr.bf16.gmra.mrb[0].mxu0 %v296
    %v440 = vpop.f32.mrb[0].mxu0
    %v441 = vadd.f32 0.0, %v440
    %v442 = vpop.f32.mrb[0].mxu0
    %v443 = vpop.f32.mrb[0].mxu0
    %v444 = vadd.f32 0.0, %v443
    %v445 = vpop.f32.mrb[0].mxu0
    %446 = vmatprep.mubr.bf16.mxu0 0
    %447 = vmatmul.mubr.bf16.gmra.mrb[0].mxu0 %v299
    %v448 = vpop.f32.mrb[0].mxu0
    %v449 = vadd.f32 0.0, %v448
    %v450 = vpop.f32.mrb[0].mxu0
    %v451 = vpop.f32.mrb[0].mxu0
    %v452 = vadd.f32 0.0, %v451
    %v453 = vpop.f32.mrb[0].mxu0
    %454 = vmatprep.mubr.bf16.mxu0 0
    %455 = vmatmul.mubr.bf16.gmra.mrb[0].mxu0 %v302
    %v456 = vpop.f32.mrb[0].mxu0
    %v457 = vadd.f32 0.0, %v456
    %v458 = vpop.f32.mrb[0].mxu0
    %v459 = vpop.f32.mrb[0].mxu0
    %v460 = vadd.f32 0.0, %v459
    %v461 = vpop.f32.mrb[0].mxu0
    %462 = vmatprep.mubr.bf16.mxu0 0
    %463 = vmatmul.mubr.bf16.gmra.mrb[0].mxu0 %v305
    %v464 = vpop.f32.mrb[0].mxu0
    %v465 = vadd.f32 0.0, %v464
    %v466 = vpop.f32.mrb[0].mxu0
    %v467 = vpop.f32.mrb[0].mxu0
    %v468 = vadd.f32 0.0, %v467
    %v469 = vpop.f32.mrb[0].mxu0
    %470 = vmatprep.mubr.bf16.mxu0 0
    %471 = vmatmul.mubr.bf16.gmra.mrb[0].mxu0 %v308
    %v472 = vpop.f32.mrb[0].mxu0
    %v473 = vadd.f32 0.0, %v472
    %v474 = vpop.f32.mrb[0].mxu0
    %v475 = vpop.f32.mrb[0].mxu0
    %v476 = vadd.f32 0.0, %v475
    %v477 = vpop.f32.mrb[0].mxu0
    %478 = vmatprep.mubr.bf16.mxu0 0
    %479 = vmatmul.mubr.bf16.gmra.mrb[0].mxu0 %v311
    %v480 = vpop.f32.mrb[0].mxu0
    %v481 = vadd.f32 0.0, %v480
    %v482 = vpop.f32.mrb[0].mxu0
    %v483 = vpop.f32.mrb[0].mxu0
    %v484 = vadd.f32 0.0, %v483
    %v485 = vpop.f32.mrb[0].mxu0
    %486 = vmatprep.mubr.bf16.mxu0 0
    %487 = vmatmul.mubr.bf16.gmra.mrb[0].mxu0 %v314
    %v488 = vpop.f32.mrb[0].mxu0
    %v489 = vadd.f32 0.0, %v488
    %v490 = vpop.f32.mrb[0].mxu0
    %v491 = vpop.f32.mrb[0].mxu0
    %v492 = vadd.f32 0.0, %v491
    %v493 = vpop.f32.mrb[0].mxu0
    %494 = vmatprep.mubr.bf16.mxu0 0
    %495 = vmatmul.mubr.bf16.gmra.mrb[0].mxu0 %v317
    %v496 = vpop.f32.mrb[0].mxu0
    %v497 = vadd.f32 0.0, %v496
    %v498 = vpop.f32.mrb[0].mxu0
    %v499 = vpop.f32.mrb[0].mxu0
    %v500 = vadd.f32 0.0, %v499
    %v501 = vpop.f32.mrb[0].mxu0
    %502 = vmatprep.mubr.bf16.mxu0 0
    %503 = vmatmul.mubr.bf16.gmra.mrb[0].mxu0 %v320
    %v504 = vpop.f32.mrb[0].mxu0
    %v505 = vadd.f32 0.0, %v504
    %v506 = vpop.f32.mrb[0].mxu0
    %v507 = vpop.f32.mrb[0].mxu0
    %v508 = vadd.f32 0.0, %v507
    %v509 = vpop.f32.mrb[0].mxu0
    %510 = vmatprep.mubr.bf16.mxu0 0
    %511 = vmatmul.mubr.bf16.gmra.mrb[0].mxu0 %v323
    %v512 = vpop.f32.mrb[0].mxu0
    %v513 = vadd.f32 0.0, %v512
    %v514 = vpop.f32.mrb[0].mxu0
    %v515 = vpop.f32.mrb[0].mxu0
    %v516 = vadd.f32 0.0, %v515
    %v517 = vpop.f32.mrb[0].mxu0
    %518 = vmatprep.mubr.bf16.mxu0 0
    %519 = vmatmul.mubr.bf16.gmra.mrb[0].mxu0 %v326
    %v520 = vpop.f32.mrb[0].mxu0
    %v521 = vadd.f32 0.0, %v520
    %v522 = vpop.f32.mrb[0].mxu0
    %v523 = vpop.f32.mrb[0].mxu0
    %v524 = vadd.f32 0.0, %v523
    %v525 = vpop.f32.mrb[0].mxu0
    %526 = vmatprep.mubr.bf16.mxu0 0
    %527 = vmatmul.mubr.bf16.gmra.mrb[0].mxu0 %v329
    %v528 = vpop.f32.mrb[0].mxu0
    %v529 = vadd.f32 0.0, %v528
    %v530 = vpop.f32.mrb[0].mxu0
    %v531 = vpop.f32.mrb[0].mxu0
    %v532 = vadd.f32 0.0, %v531
    %v533 = vpop.f32.mrb[0].mxu0
    %534 = vmatprep.mubr.bf16.mxu0 0
    %535 = vmatmul.mubr.bf16.gmra.mrb[0].mxu0 %v332
    %v536 = vpop.f32.mrb[0].mxu0
    %v537 = vadd.f32 0.0, %v536
    %v538 = vpop.f32.mrb[0].mxu0
    %v539 = vpop.f32.mrb[0].mxu0
    %v540 = vadd.f32 0.0, %v539
    %v541 = vpop.f32.mrb[0].mxu0
    %542 = vmatprep.mubr.bf16.mxu0 0
    %543 = vmatmul.mubr.bf16.gmra.mrb[0].mxu0 %v335
    %v544 = vpop.f32.mrb[0].mxu0
    %v545 = vadd.f32 0.0, %v544
    %v546 = vpop.f32.mrb[0].mxu0
    %v547 = vpop.f32.mrb[0].mxu0
    %v548 = vadd.f32 0.0, %v547
    %v549 = vpop.f32.mrb[0].mxu0
    %550 = vmatprep.mubr.bf16.mxu0 0
    %551 = vmatmul.mubr.bf16.gmra.mrb[0].mxu0 %v338
    %v552 = vpop.f32.mrb[0].mxu0
    %v553 = vadd.f32 0.0, %v552
    %v554 = vpop.f32.mrb[0].mxu0
    %v555 = vpop.f32.mrb[0].mxu0
    %v556 = vadd.f32 0.0, %v555
    %v557 = vpop.f32.mrb[0].mxu0
    %558 = vmatprep.mubr.bf16.mxu0 0
    %559 = vmatmul.mubr.bf16.gmra.mrb[0].mxu0 %v341
    %v560 = vpop.f32.mrb[0].mxu0
    %v561 = vadd.f32 0.0, %v560
    %v562 = vpop.f32.mrb[0].mxu0
    %v563 = vpop.f32.mrb[0].mxu0
    %v564 = vadd.f32 0.0, %v563
    %v565 = vpop.f32.mrb[0].mxu0
    %566 = vmatprep.mubr.bf16.mxu0 0
    %567 = vmatmul.mubr.bf16.gmra.mrb[0].mxu0 %v344
    %v568 = vpop.f32.mrb[0].mxu0
    %v569 = vadd.f32 0.0, %v568
    %v570 = vpop.f32.mrb[0].mxu0
    %v571 = vpop.f32.mrb[0].mxu0
    %v572 = vadd.f32 0.0, %v571
    %v573 = vpop.f32.mrb[0].mxu0
    %574 = vmatprep.mubr.bf16.mxu0 0
    %575 = vmatmul.mubr.bf16.gmra.mrb[0].mxu0 %v347
    %v576 = vpop.f32.mrb[0].mxu0
    %v577 = vadd.f32 0.0, %v576
    %v578 = vpop.f32.mrb[0].mxu0
    %v579 = vpop.f32.mrb[0].mxu0
    %v580 = vadd.f32 0.0, %v579
    %v581 = vpop.f32.mrb[0].mxu0
    %582 = vmatprep.mubr.bf16.mxu0 0
    %583 = vmatmul.mubr.bf16.gmra.mrb[0].mxu0 %v350
    %v584 = vpop.f32.mrb[0].mxu0
    %v585 = vadd.f32 0.0, %v584
    %v586 = vpop.f32.mrb[0].mxu0
    %v587 = vpop.f32.mrb[0].mxu0
    %v588 = vadd.f32 0.0, %v587
    %v589 = vpop.f32.mrb[0].mxu0
    %590 = vmatprep.mubr.bf16.mxu0 0
    %591 = vmatmul.mubr.bf16.gmra.mrb[0].mxu0 %v353
    %v592 = vpop.f32.mrb[0].mxu0
    %v593 = vadd.f32 0.0, %v592
    %v594 = vpop.f32.mrb[0].mxu0
    %v595 = vpop.f32.mrb[0].mxu0
    %v596 = vadd.f32 0.0, %v595
    %v597 = vpop.f32.mrb[0].mxu0
    %598 = vmatprep.mubr.bf16.mxu0 0
    %599 = vmatmul.mubr.bf16.gmra.mrb[0].mxu0 %v356
    %v600 = vpop.f32.mrb[0].mxu0
    %v601 = vadd.f32 0.0, %v600
    %v602 = vpop.f32.mrb[0].mxu0
    %v603 = vpop.f32.mrb[0].mxu0
    %v604 = vadd.f32 0.0, %v603
    %v605 = vpop.f32.mrb[0].mxu0
    %606 = vmatprep.mubr.bf16.mxu0 0
    %607 = vmatmul.mubr.bf16.gmra.mrb[0].mxu0 %v359
    %v608 = vpop.f32.mrb[0].mxu0
    %v609 = vadd.f32 0.0, %v608
    %v610 = vpop.f32.mrb[0].mxu0
    %v611 = vpop.f32.mrb[0].mxu0
    %v612 = vadd.f32 0.0, %v611
    %v613 = vpop.f32.mrb[0].mxu0
    %614 = vmatprep.mubr.bf16.mxu0 0
    %615 = vmatmul.mubr.bf16.gmra.mrb[0].mxu0 %v362
    %v616 = vpop.f32.mrb[0].mxu0
    %v617 = vadd.f32 0.0, %v616
    %v618 = vpop.f32.mrb[0].mxu0
    %v619 = vpop.f32.mrb[0].mxu0
    %v620 = vadd.f32 0.0, %v619
    %v621 = vpop.f32.mrb[0].mxu0
    %622 = vmatprep.mubr.bf16.mxu0 0
    %623 = vmatmul.mubr.bf16.gmra.mrb[0].mxu0 %v365
    %v624 = vpop.f32.mrb[0].mxu0
    %v625 = vadd.f32 0.0, %v624
    %v626 = vpop.f32.mrb[0].mxu0
    %v627 = vpop.f32.mrb[0].mxu0
    %v628 = vadd.f32 0.0, %v627
    %v629 = vpop.f32.mrb[0].mxu0
    %630 = vmatprep.mubr.bf16.mxu0 0
    %631 = vmatmul.mubr.bf16.gmra.mrb[0].mxu0 %v368
    %v632 = vpop.f32.mrb[0].mxu0
    %v633 = vadd.f32 0.0, %v632
    %v634 = vpop.f32.mrb[0].mxu0
    %v635 = vpop.f32.mrb[0].mxu0
    %v636 = vadd.f32 0.0, %v635
    %v637 = vpop.f32.mrb[0].mxu0
    %638 = vmatprep.mubr.bf16.mxu0 0
    %639 = vmatmul.mubr.bf16.gmra.mrb[0].mxu0 %v371
    %v640 = vpop.f32.mrb[0].mxu0
    %v641 = vadd.f32 0.0, %v640
    %v642 = vpop.f32.mrb[0].mxu0
    %v643 = vpop.f32.mrb[0].mxu0
    %v644 = vadd.f32 0.0, %v643
    %v645 = vpop.f32.mrb[0].mxu0
    %646 = vmatprep.mubr.bf16.mxu0 0
    %647 = vmatmul.mubr.bf16.gmra.mrb[0].mxu0 %v374
    %v648 = vpop.f32.mrb[0].mxu0
    %v649 = vadd.f32 0.0, %v648
    %v650 = vpop.f32.mrb[0].mxu0
    %v651 = vpop.f32.mrb[0].mxu0
    %v652 = vadd.f32 0.0, %v651
    %v653 = vpop.f32.mrb[0].mxu0
    %654 = vmatprep.mubr.bf16.mxu0 0
    %655 = vmatmul.mubr.bf16.gmra.mrb[0].mxu0 %v377
    %v656 = vpop.f32.mrb[0].mxu0
    %v657 = vadd.f32 0.0, %v656
    %v658 = vpop.f32.mrb[0].mxu0
    %v659 = vpop.f32.mrb[0].mxu0
    %v660 = vadd.f32 0.0, %v659
    %v661 = vpop.f32.mrb[0].mxu0
    %662 = vmatprep.mubr.bf16.mxu0 0
    %663 = vmatmul.mubr.bf16.gmra.mrb[0].mxu0 %v380
    %v664 = vpop.f32.mrb[0].mxu0
    %v665 = vadd.f32 0.0, %v664
    %v666 = vpop.f32.mrb[0].mxu0
    %v667 = vpop.f32.mrb[0].mxu0
    %v668 = vadd.f32 0.0, %v667
    %v669 = vpop.f32.mrb[0].mxu0
    %670 = vdwg.mxu0
    %v671 = vld [vmem:[%s2] sm:$0xff]
    %v672 = vld [vmem:[%s2 + $0x8] sm:$0xff]
    %v673 = vld [vmem:[%s2 + $0x10] sm:$0xff]
    %v674 = vld [vmem:[%s2 + $0x18] sm:$0xff]
    %v675 = vadd.f32 %v417, %v671
    %v676 = vadd.f32 %v420, %v672
    %v677 = vadd.f32 %v425, %v673
    %v678 = vadd.f32 %v428, %v674
    %v679 = vadd.f32 %v433, %v671
    %v680 = vadd.f32 %v436, %v672
    %v681 = vadd.f32 %v441, %v673
    %v682 = vadd.f32 %v444, %v674
    %v683 = vadd.f32 %v449, %v671
    %v684 = vadd.f32 %v452, %v672
    %v685 = vadd.f32 %v457, %v673
    %v686 = vadd.f32 %v460, %v674
    %v687 = vadd.f32 %v465, %v671
    %v688 = vadd.f32 %v468, %v672
    %v689 = vadd.f32 %v473, %v673
    %v690 = vadd.f32 %v476, %v674
    %v691 = vadd.f32 %v481, %v671
    %v692 = vadd.f32 %v484, %v672
    %v693 = vadd.f32 %v489, %v673
    %v694 = vadd.f32 %v492, %v674
    %v695 = vadd.f32 %v497, %v671
    %v696 = vadd.f32 %v500, %v672
    %v697 = vadd.f32 %v505, %v673
    %v698 = vadd.f32 %v508, %v674
    %v699 = vadd.f32 %v513, %v671
    %v700 = vadd.f32 %v516, %v672
    %v701 = vadd.f32 %v521, %v673
    %v702 = vadd.f32 %v524, %v674
    %v703 = vadd.f32 %v529, %v671
    %v704 = vadd.f32 %v532, %v672
    %v705 = vadd.f32 %v537, %v673
    %v706 = vadd.f32 %v540, %v674
    %v707 = vadd.f32 %v545, %v671
    %v708 = vadd.f32 %v548, %v672
    %v709 = vadd.f32 %v553, %v673
    %v710 = vadd.f32 %v556, %v674
    %v711 = vadd.f32 %v561, %v671
    %v712 = vadd.f32 %v564, %v672
    %v713 = vadd.f32 %v569, %v673
    %v714 = vadd.f32 %v572, %v674
    %v715 = vadd.f32 %v577, %v671
    %v716 = vadd.f32 %v580, %v672
    %v717 = vadd.f32 %v585, %v673
    %v718 = vadd.f32 %v588, %v674
    %v719 = vadd.f32 %v593, %v671
    %v720 = vadd.f32 %v596, %v672
    %v721 = vadd.f32 %v601, %v673
    %v722 = vadd.f32 %v604, %v674
    %v723 = vadd.f32 %v609, %v671
    %v724 = vadd.f32 %v612, %v672
    %v725 = vadd.f32 %v617, %v673
    %v726 = vadd.f32 %v620, %v674
    %v727 = vadd.f32 %v625, %v671
    %v728 = vadd.f32 %v628, %v672
    %v729 = vadd.f32 %v633, %v673
    %v730 = vadd.f32 %v636, %v674
    %v731 = vadd.f32 %v641, %v671
    %v732 = vadd.f32 %v644, %v672
    %v733 = vadd.f32 %v649, %v673
    %v734 = vadd.f32 %v652, %v674
    %v735 = vadd.f32 %v657, %v671
    %v736 = vadd.f32 %v660, %v672
    %v737 = vadd.f32 %v665, %v673
    %v738 = vadd.f32 %v668, %v674
    %vm739 = vcmask 23552
    %v740 = vsel %vm739, %v675, -inf
    %v741 = vsel %vm739, %v676, -inf
    %v742 = vmax.f32 %v740, %v741
    %v743 = vsel %vm739, %v677, -inf
    %v744 = vmax.f32 %v742, %v743
    %v745 = vsel %vm739, %v678, -inf
    %v746 = vmax.f32 %v744, %v745
    %v747 = vrot.slane %v746, 4
    %v748 = vmax.f32 %v746, %v747
    %v749 = vrot.slane %v748, 2
    %v750 = vmax.f32 %v748, %v749
    %v751 = vrot.slane %v750, 1
    %v752 = vmax.f32 %v750, %v751
    %v753 = vsel %vm739, %v679, -inf
    %v754 = vsel %vm739, %v680, -inf
    %v755 = vmax.f32 %v753, %v754
    %v756 = vsel %vm739, %v681, -inf
    %v757 = vmax.f32 %v755, %v756
    %v758 = vsel %vm739, %v682, -inf
    %v759 = vmax.f32 %v757, %v758
    %v760 = vrot.slane %v759, 4
    %v761 = vmax.f32 %v759, %v760
    %v762 = vrot.slane %v761, 2
    %v763 = vmax.f32 %v761, %v762
    %v764 = vrot.slane %v763, 1
    %v765 = vmax.f32 %v763, %v764
    %v766 = vsel %vm739, %v683, -inf
    %v767 = vsel %vm739, %v684, -inf
    %v768 = vmax.f32 %v766, %v767
    %v769 = vsel %vm739, %v685, -inf
    %v770 = vmax.f32 %v768, %v769
    %v771 = vsel %vm739, %v686, -inf
    %v772 = vmax.f32 %v770, %v771
    %v773 = vrot.slane %v772, 4
    %v774 = vmax.f32 %v772, %v773
    %v775 = vrot.slane %v774, 2
    %v776 = vmax.f32 %v774, %v775
    %v777 = vrot.slane %v776, 1
    %v778 = vmax.f32 %v776, %v777
    %v779 = vsel %vm739, %v687, -inf
    %v780 = vsel %vm739, %v688, -inf
    %v781 = vmax.f32 %v779, %v780
    %v782 = vsel %vm739, %v689, -inf
    %v783 = vmax.f32 %v781, %v782
    %v784 = vsel %vm739, %v690, -inf
    %v785 = vmax.f32 %v783, %v784
    %v786 = vrot.slane %v785, 4
    %v787 = vmax.f32 %v785, %v786
    %v788 = vrot.slane %v787, 2
    %v789 = vmax.f32 %v787, %v788
    %v790 = vrot.slane %v789, 1
    %v791 = vmax.f32 %v789, %v790
    %v792 = vsel %vm739, %v691, -inf
    %v793 = vsel %vm739, %v692, -inf
    %v794 = vmax.f32 %v792, %v793
    %v795 = vsel %vm739, %v693, -inf
    %v796 = vmax.f32 %v794, %v795
    %v797 = vsel %vm739, %v694, -inf
    %v798 = vmax.f32 %v796, %v797
    %v799 = vrot.slane %v798, 4
    %v800 = vmax.f32 %v798, %v799
    %v801 = vrot.slane %v800, 2
    %v802 = vmax.f32 %v800, %v801
    %v803 = vrot.slane %v802, 1
    %v804 = vmax.f32 %v802, %v803
    %v805 = vsel %vm739, %v695, -inf
    %v806 = vsel %vm739, %v696, -inf
    %v807 = vmax.f32 %v805, %v806
    %v808 = vsel %vm739, %v697, -inf
    %v809 = vmax.f32 %v807, %v808
    %v810 = vsel %vm739, %v698, -inf
    %v811 = vmax.f32 %v809, %v810
    %v812 = vrot.slane %v811, 4
    %v813 = vmax.f32 %v811, %v812
    %v814 = vrot.slane %v813, 2
    %v815 = vmax.f32 %v813, %v814
    %v816 = vrot.slane %v815, 1
    %v817 = vmax.f32 %v815, %v816
    %v818 = vsel %vm739, %v699, -inf
    %v819 = vsel %vm739, %v700, -inf
    %v820 = vmax.f32 %v818, %v819
    %v821 = vsel %vm739, %v701, -inf
    %v822 = vmax.f32 %v820, %v821
    %v823 = vsel %vm739, %v702, -inf
    %v824 = vmax.f32 %v822, %v823
    %v825 = vrot.slane %v824, 4
    %v826 = vmax.f32 %v824, %v825
    %v827 = vrot.slane %v826, 2
    %v828 = vmax.f32 %v826, %v827
    %v829 = vrot.slane %v828, 1
    %v830 = vmax.f32 %v828, %v829
    %v831 = vsel %vm739, %v703, -inf
    %v832 = vsel %vm739, %v704, -inf
    %v833 = vmax.f32 %v831, %v832
    %v834 = vsel %vm739, %v705, -inf
    %v835 = vmax.f32 %v833, %v834
    %v836 = vsel %vm739, %v706, -inf
    %v837 = vmax.f32 %v835, %v836
    %v838 = vrot.slane %v837, 4
    %v839 = vmax.f32 %v837, %v838
    %v840 = vrot.slane %v839, 2
    %v841 = vmax.f32 %v839, %v840
    %v842 = vrot.slane %v841, 1
    %v843 = vmax.f32 %v841, %v842
    %v844 = vsel %vm739, %v707, -inf
    %v845 = vsel %vm739, %v708, -inf
    %v846 = vmax.f32 %v844, %v845
    %v847 = vsel %vm739, %v709, -inf
    %v848 = vmax.f32 %v846, %v847
    %v849 = vsel %vm739, %v710, -inf
    %v850 = vmax.f32 %v848, %v849
    %v851 = vrot.slane %v850, 4
    %v852 = vmax.f32 %v850, %v851
    %v853 = vrot.slane %v852, 2
    %v854 = vmax.f32 %v852, %v853
    %v855 = vrot.slane %v854, 1
    %v856 = vmax.f32 %v854, %v855
    %v857 = vsel %vm739, %v711, -inf
    %v858 = vsel %vm739, %v712, -inf
    %v859 = vmax.f32 %v857, %v858
    %v860 = vsel %vm739, %v713, -inf
    %v861 = vmax.f32 %v859, %v860
    %v862 = vsel %vm739, %v714, -inf
    %v863 = vmax.f32 %v861, %v862
    %v864 = vrot.slane %v863, 4
    %v865 = vmax.f32 %v863, %v864
    %v866 = vrot.slane %v865, 2
    %v867 = vmax.f32 %v865, %v866
    %v868 = vrot.slane %v867, 1
    %v869 = vmax.f32 %v867, %v868
    %v870 = vsel %vm739, %v715, -inf
    %v871 = vsel %vm739, %v716, -inf
    %v872 = vmax.f32 %v870, %v871
    %v873 = vsel %vm739, %v717, -inf
    %v874 = vmax.f32 %v872, %v873
    %v875 = vsel %vm739, %v718, -inf
    %v876 = vmax.f32 %v874, %v875
    %v877 = vrot.slane %v876, 4
    %v878 = vmax.f32 %v876, %v877
    %v879 = vrot.slane %v878, 2
    %v880 = vmax.f32 %v878, %v879
    %v881 = vrot.slane %v880, 1
    %v882 = vmax.f32 %v880, %v881
    %v883 = vsel %vm739, %v719, -inf
    %v884 = vsel %vm739, %v720, -inf
    %v885 = vmax.f32 %v883, %v884
    %v886 = vsel %vm739, %v721, -inf
    %v887 = vmax.f32 %v885, %v886
    %v888 = vsel %vm739, %v722, -inf
    %v889 = vmax.f32 %v887, %v888
    %v890 = vrot.slane %v889, 4
    %v891 = vmax.f32 %v889, %v890
    %v892 = vrot.slane %v891, 2
    %v893 = vmax.f32 %v891, %v892
    %v894 = vrot.slane %v893, 1
    %v895 = vmax.f32 %v893, %v894
    %v896 = vsel %vm739, %v723, -inf
    %v897 = vsel %vm739, %v724, -inf
    %v898 = vmax.f32 %v896, %v897
    %v899 = vsel %vm739, %v725, -inf
    %v900 = vmax.f32 %v898, %v899
    %v901 = vsel %vm739, %v726, -inf
    %v902 = vmax.f32 %v900, %v901
    %v903 = vrot.slane %v902, 4
    %v904 = vmax.f32 %v902, %v903
    %v905 = vrot.slane %v904, 2
    %v906 = vmax.f32 %v904, %v905
    %v907 = vrot.slane %v906, 1
    %v908 = vmax.f32 %v906, %v907
    %v909 = vsel %vm739, %v727, -inf
    %v910 = vsel %vm739, %v728, -inf
    %v911 = vmax.f32 %v909, %v910
    %v912 = vsel %vm739, %v729, -inf
    %v913 = vmax.f32 %v911, %v912
    %v914 = vsel %vm739, %v730, -inf
    %v915 = vmax.f32 %v913, %v914
    %v916 = vrot.slane %v915, 4
    %v917 = vmax.f32 %v915, %v916
    %v918 = vrot.slane %v917, 2
    %v919 = vmax.f32 %v917, %v918
    %v920 = vrot.slane %v919, 1
    %v921 = vmax.f32 %v919, %v920
    %v922 = vsel %vm739, %v731, -inf
    %v923 = vsel %vm739, %v732, -inf
    %v924 = vmax.f32 %v922, %v923
    %v925 = vsel %vm739, %v733, -inf
    %v926 = vmax.f32 %v924, %v925
    %v927 = vsel %vm739, %v734, -inf
    %v928 = vmax.f32 %v926, %v927
    %v929 = vrot.slane %v928, 4
    %v930 = vmax.f32 %v928, %v929
    %v931 = vrot.slane %v930, 2
    %v932 = vmax.f32 %v930, %v931
    %v933 = vrot.slane %v932, 1
    %v934 = vmax.f32 %v932, %v933
    %v935 = vsel %vm739, %v735, -inf
    %v936 = vsel %vm739, %v736, -inf
    %v937 = vmax.f32 %v935, %v936
    %v938 = vsel %vm739, %v737, -inf
    %v939 = vmax.f32 %v937, %v938
    %v940 = vsel %vm739, %v738, -inf
    %v941 = vmax.f32 %v939, %v940
    %v942 = vrot.slane %v941, 4
    %v943 = vmax.f32 %v941, %v942
    %v944 = vrot.slane %v943, 2
    %v945 = vmax.f32 %v943, %v944
    %v946 = vrot.slane %v945, 1
    %v947 = vmax.f32 %v945, %v946
    %v948 = vsub.f32 %v675, %v752
    %v949 = vsub.f32 %v676, %v752
    %v950 = vsub.f32 %v677, %v752
    %v951 = vsub.f32 %v678, %v752
    %v952 = vsub.f32 %v679, %v765
    %v953 = vsub.f32 %v680, %v765
    %v954 = vsub.f32 %v681, %v765
    %v955 = vsub.f32 %v682, %v765
    %v956 = vsub.f32 %v683, %v778
    %v957 = vsub.f32 %v684, %v778
    %v958 = vsub.f32 %v685, %v778
    %v959 = vsub.f32 %v686, %v778
    %v960 = vsub.f32 %v687, %v791
    %v961 = vsub.f32 %v688, %v791
    %v962 = vsub.f32 %v689, %v791
    %v963 = vsub.f32 %v690, %v791
    %v964 = vsub.f32 %v691, %v804
    %v965 = vsub.f32 %v692, %v804
    %v966 = vsub.f32 %v693, %v804
    %v967 = vsub.f32 %v694, %v804
    %v968 = vsub.f32 %v695, %v817
    %v969 = vsub.f32 %v696, %v817
    %v970 = vsub.f32 %v697, %v817
    %v971 = vsub.f32 %v698, %v817
    %v972 = vsub.f32 %v699, %v830
    %v973 = vsub.f32 %v700, %v830
    %v974 = vsub.f32 %v701, %v830
    %v975 = vsub.f32 %v702, %v830
    %v976 = vsub.f32 %v703, %v843
    %v977 = vsub.f32 %v704, %v843
    %v978 = vsub.f32 %v705, %v843
    %v979 = vsub.f32 %v706, %v843
    %v980 = vsub.f32 %v707, %v856
    %v981 = vsub.f32 %v708, %v856
    %v982 = vsub.f32 %v709, %v856
    %v983 = vsub.f32 %v710, %v856
    %v984 = vsub.f32 %v711, %v869
    %v985 = vsub.f32 %v712, %v869
    %v986 = vsub.f32 %v713, %v869
    %v987 = vsub.f32 %v714, %v869
    %v988 = vsub.f32 %v715, %v882
    %v989 = vsub.f32 %v716, %v882
    %v990 = vsub.f32 %v717, %v882
    %v991 = vsub.f32 %v718, %v882
    %v992 = vsub.f32 %v719, %v895
    %v993 = vsub.f32 %v720, %v895
    %v994 = vsub.f32 %v721, %v895
    %v995 = vsub.f32 %v722, %v895
    %v996 = vsub.f32 %v723, %v908
    %v997 = vsub.f32 %v724, %v908
    %v998 = vsub.f32 %v725, %v908
    %v999 = vsub.f32 %v726, %v908
    %v1000 = vsub.f32 %v727, %v921
    %v1001 = vsub.f32 %v728, %v921
    %v1002 = vsub.f32 %v729, %v921
    %v1003 = vsub.f32 %v730, %v921
    %v1004 = vsub.f32 %v731, %v934
    %v1005 = vsub.f32 %v732, %v934
    %v1006 = vsub.f32 %v733, %v934
    %v1007 = vsub.f32 %v734, %v934
    %v1008 = vsub.f32 %v735, %v947
    %v1009 = vsub.f32 %v736, %v947
    %v1010 = vsub.f32 %v737, %v947
    %v1011 = vsub.f32 %v738, %v947
    %v1012 = vmul.f32 %v948, 1.442695
    %v1013 = vpow.pop %v1012
    %v1014 = vmul.f32 %v949, 1.442695
    %v1015 = vpow.pop %v1014
    %v1016 = vmul.f32 %v950, 1.442695
    %v1017 = vpow.pop %v1016
    %v1018 = vmul.f32 %v951, 1.442695
    %v1019 = vpow.pop %v1018
    %v1020 = vmul.f32 %v952, 1.442695
    %v1021 = vpow.pop %v1020
    %v1022 = vmul.f32 %v953, 1.442695
    %v1023 = vpow.pop %v1022
    %v1024 = vmul.f32 %v954, 1.442695
    %v1025 = vpow.pop %v1024
    %v1026 = vmul.f32 %v955, 1.442695
    %v1027 = vpow.pop %v1026
    %v1028 = vmul.f32 %v956, 1.442695
    %v1029 = vpow.pop %v1028
    %v1030 = vmul.f32 %v957, 1.442695
    %v1031 = vpow.pop %v1030
    %v1032 = vmul.f32 %v958, 1.442695
    %v1033 = vpow.pop %v1032
    %v1034 = vmul.f32 %v959, 1.442695
    %v1035 = vpow.pop %v1034
    %v1036 = vmul.f32 %v960, 1.442695
    %v1037 = vpow.pop %v1036
    %v1038 = vmul.f32 %v961, 1.442695
    %v1039 = vpow.pop %v1038
    %v1040 = vmul.f32 %v962, 1.442695
    %v1041 = vpow.pop %v1040
    %v1042 = vmul.f32 %v963, 1.442695
    %v1043 = vpow.pop %v1042
    %v1044 = vmul.f32 %v964, 1.442695
    %v1045 = vpow.pop %v1044
    %v1046 = vmul.f32 %v965, 1.442695
    %v1047 = vpow.pop %v1046
    %v1048 = vmul.f32 %v966, 1.442695
    %v1049 = vpow.pop %v1048
    %v1050 = vmul.f32 %v967, 1.442695
    %v1051 = vpow.pop %v1050
    %v1052 = vmul.f32 %v968, 1.442695
    %v1053 = vpow.pop %v1052
    %v1054 = vmul.f32 %v969, 1.442695
    %v1055 = vpow.pop %v1054
    %v1056 = vmul.f32 %v970, 1.442695
    %v1057 = vpow.pop %v1056
    %v1058 = vmul.f32 %v971, 1.442695
    %v1059 = vpow.pop %v1058
    %v1060 = vmul.f32 %v972, 1.442695
    %v1061 = vpow.pop %v1060
    %v1062 = vmul.f32 %v973, 1.442695
    %v1063 = vpow.pop %v1062
    %v1064 = vmul.f32 %v974, 1.442695
    %v1065 = vpow.pop %v1064
    %v1066 = vmul.f32 %v975, 1.442695
    %v1067 = vpow.pop %v1066
    %v1068 = vmul.f32 %v976, 1.442695
    %v1069 = vpow.pop %v1068
    %v1070 = vmul.f32 %v977, 1.442695
    %v1071 = vpow.pop %v1070
    %v1072 = vmul.f32 %v978, 1.442695
    %v1073 = vpow.pop %v1072
    %v1074 = vmul.f32 %v979, 1.442695
    %v1075 = vpow.pop %v1074
    %v1076 = vmul.f32 %v980, 1.442695
    %v1077 = vpow.pop %v1076
    %v1078 = vmul.f32 %v981, 1.442695
    %v1079 = vpow.pop %v1078
    %v1080 = vmul.f32 %v982, 1.442695
    %v1081 = vpow.pop %v1080
    %v1082 = vmul.f32 %v983, 1.442695
    %v1083 = vpow.pop %v1082
    %v1084 = vmul.f32 %v984, 1.442695
    %v1085 = vpow.pop %v1084
    %v1086 = vmul.f32 %v985, 1.442695
    %v1087 = vpow.pop %v1086
    %v1088 = vmul.f32 %v986, 1.442695
    %v1089 = vpow.pop %v1088
    %v1090 = vmul.f32 %v987, 1.442695
    %v1091 = vpow.pop %v1090
    %v1092 = vmul.f32 %v988, 1.442695
    %v1093 = vpow.pop %v1092
    %v1094 = vmul.f32 %v989, 1.442695
    %v1095 = vpow.pop %v1094
    %v1096 = vmul.f32 %v990, 1.442695
    %v1097 = vpow.pop %v1096
    %v1098 = vmul.f32 %v991, 1.442695
    %v1099 = vpow.pop %v1098
    %v1100 = vmul.f32 %v992, 1.442695
    %v1101 = vpow.pop %v1100
    %v1102 = vmul.f32 %v993, 1.442695
    %v1103 = vpow.pop %v1102
    %v1104 = vmul.f32 %v994, 1.442695
    %v1105 = vpow.pop %v1104
    %v1106 = vmul.f32 %v995, 1.442695
    %v1107 = vpow.pop %v1106
    %v1108 = vmul.f32 %v996, 1.442695
    %v1109 = vpow.pop %v1108
    %v1110 = vmul.f32 %v997, 1.442695
    %v1111 = vpow.pop %v1110
    %v1112 = vmul.f32 %v998, 1.442695
    %v1113 = vpow.pop %v1112
    %v1114 = vmul.f32 %v999, 1.442695
    %v1115 = vpow.pop %v1114
    %v1116 = vmul.f32 %v1000, 1.442695
    %v1117 = vpow.pop %v1116
    %v1118 = vmul.f32 %v1001, 1.442695
    %v1119 = vpow.pop %v1118
    %v1120 = vmul.f32 %v1002, 1.442695
    %v1121 = vpow.pop %v1120
    %v1122 = vmul.f32 %v1003, 1.442695
    %v1123 = vpow.pop %v1122
    %v1124 = vmul.f32 %v1004, 1.442695
    %v1125 = vpow.pop %v1124
    %v1126 = vmul.f32 %v1005, 1.442695
    %v1127 = vpow.pop %v1126
    %v1128 = vmul.f32 %v1006, 1.442695
    %v1129 = vpow.pop %v1128
    %v1130 = vmul.f32 %v1007, 1.442695
    %v1131 = vpow.pop %v1130
    %v1132 = vmul.f32 %v1008, 1.442695
    %v1133 = vpow.pop %v1132
    %v1134 = vmul.f32 %v1009, 1.442695
    %v1135 = vpow.pop %v1134
    %v1136 = vmul.f32 %v1010, 1.442695
    %v1137 = vpow.pop %v1136
    %v1138 = vmul.f32 %v1011, 1.442695
    %v1139 = vpow.pop %v1138
    %v1140 = vsel %vm739, %v1013, 0.0
    %v1141 = vsel %vm739, %v1015, 0.0
    %v1142 = vadd.f32 %v1140, %v1141
    %v1143 = vsel %vm739, %v1017, 0.0
    %v1144 = vadd.f32 %v1142, %v1143
    %v1145 = vsel %vm739, %v1019, 0.0
    %v1146 = vadd.f32 %v1144, %v1145
    %v1147 = vrot.slane %v1146, 4
    %v1148 = vadd.f32 %v1146, %v1147
    %v1149 = vrot.slane %v1148, 2
    %v1150 = vadd.f32 %v1148, %v1149
    %v1151 = vrot.slane %v1150, 1
    %v1152 = vadd.f32 %v1150, %v1151
    %v1153 = vsel %vm739, %v1021, 0.0
    %v1154 = vsel %vm739, %v1023, 0.0
    %v1155 = vadd.f32 %v1153, %v1154
    %v1156 = vsel %vm739, %v1025, 0.0
    %v1157 = vadd.f32 %v1155, %v1156
    %v1158 = vsel %vm739, %v1027, 0.0
    %v1159 = vadd.f32 %v1157, %v1158
    %v1160 = vrot.slane %v1159, 4
    %v1161 = vadd.f32 %v1159, %v1160
    %v1162 = vrot.slane %v1161, 2
    %v1163 = vadd.f32 %v1161, %v1162
    %v1164 = vrot.slane %v1163, 1
    %v1165 = vadd.f32 %v1163, %v1164
    %v1166 = vsel %vm739, %v1029, 0.0
    %v1167 = vsel %vm739, %v1031, 0.0
    %v1168 = vadd.f32 %v1166, %v1167
    %v1169 = vsel %vm739, %v1033, 0.0
    %v1170 = vadd.f32 %v1168, %v1169
    %v1171 = vsel %vm739, %v1035, 0.0
    %v1172 = vadd.f32 %v1170, %v1171
    %v1173 = vrot.slane %v1172, 4
    %v1174 = vadd.f32 %v1172, %v1173
    %v1175 = vrot.slane %v1174, 2
    %v1176 = vadd.f32 %v1174, %v1175
    %v1177 = vrot.slane %v1176, 1
    %v1178 = vadd.f32 %v1176, %v1177
    %v1179 = vsel %vm739, %v1037, 0.0
    %v1180 = vsel %vm739, %v1039, 0.0
    %v1181 = vadd.f32 %v1179, %v1180
    %v1182 = vsel %vm739, %v1041, 0.0
    %v1183 = vadd.f32 %v1181, %v1182
    %v1184 = vsel %vm739, %v1043, 0.0
    %v1185 = vadd.f32 %v1183, %v1184
    %v1186 = vrot.slane %v1185, 4
    %v1187 = vadd.f32 %v1185, %v1186
    %v1188 = vrot.slane %v1187, 2
    %v1189 = vadd.f32 %v1187, %v1188
    %v1190 = vrot.slane %v1189, 1
    %v1191 = vadd.f32 %v1189, %v1190
    %v1192 = vsel %vm739, %v1045, 0.0
    %v1193 = vsel %vm739, %v1047, 0.0
    %v1194 = vadd.f32 %v1192, %v1193
    %v1195 = vsel %vm739, %v1049, 0.0
    %v1196 = vadd.f32 %v1194, %v1195
    %v1197 = vsel %vm739, %v1051, 0.0
    %v1198 = vadd.f32 %v1196, %v1197
    %v1199 = vrot.slane %v1198, 4
    %v1200 = vadd.f32 %v1198, %v1199
    %v1201 = vrot.slane %v1200, 2
    %v1202 = vadd.f32 %v1200, %v1201
    %v1203 = vrot.slane %v1202, 1
    %v1204 = vadd.f32 %v1202, %v1203
    %v1205 = vsel %vm739, %v1053, 0.0
    %v1206 = vsel %vm739, %v1055, 0.0
    %v1207 = vadd.f32 %v1205, %v1206
    %v1208 = vsel %vm739, %v1057, 0.0
    %v1209 = vadd.f32 %v1207, %v1208
    %v1210 = vsel %vm739, %v1059, 0.0
    %v1211 = vadd.f32 %v1209, %v1210
    %v1212 = vrot.slane %v1211, 4
    %v1213 = vadd.f32 %v1211, %v1212
    %v1214 = vrot.slane %v1213, 2
    %v1215 = vadd.f32 %v1213, %v1214
    %v1216 = vrot.slane %v1215, 1
    %v1217 = vadd.f32 %v1215, %v1216
    %v1218 = vsel %vm739, %v1061, 0.0
    %v1219 = vsel %vm739, %v1063, 0.0
    %v1220 = vadd.f32 %v1218, %v1219
    %v1221 = vsel %vm739, %v1065, 0.0
    %v1222 = vadd.f32 %v1220, %v1221
    %v1223 = vsel %vm739, %v1067, 0.0
    %v1224 = vadd.f32 %v1222, %v1223
    %v1225 = vrot.slane %v1224, 4
    %v1226 = vadd.f32 %v1224, %v1225
    %v1227 = vrot.slane %v1226, 2
    %v1228 = vadd.f32 %v1226, %v1227
    %v1229 = vrot.slane %v1228, 1
    %v1230 = vadd.f32 %v1228, %v1229
    %v1231 = vsel %vm739, %v1069, 0.0
    %v1232 = vsel %vm739, %v1071, 0.0
    %v1233 = vadd.f32 %v1231, %v1232
    %v1234 = vsel %vm739, %v1073, 0.0
    %v1235 = vadd.f32 %v1233, %v1234
    %v1236 = vsel %vm739, %v1075, 0.0
    %v1237 = vadd.f32 %v1235, %v1236
    %v1238 = vrot.slane %v1237, 4
    %v1239 = vadd.f32 %v1237, %v1238
    %v1240 = vrot.slane %v1239, 2
    %v1241 = vadd.f32 %v1239, %v1240
    %v1242 = vrot.slane %v1241, 1
    %v1243 = vadd.f32 %v1241, %v1242
    %v1244 = vsel %vm739, %v1077, 0.0
    %v1245 = vsel %vm739, %v1079, 0.0
    %v1246 = vadd.f32 %v1244, %v1245
    %v1247 = vsel %vm739, %v1081, 0.0
    %v1248 = vadd.f32 %v1246, %v1247
    %v1249 = vsel %vm739, %v1083, 0.0
    %v1250 = vadd.f32 %v1248, %v1249
    %v1251 = vrot.slane %v1250, 4
    %v1252 = vadd.f32 %v1250, %v1251
    %v1253 = vrot.slane %v1252, 2
    %v1254 = vadd.f32 %v1252, %v1253
    %v1255 = vrot.slane %v1254, 1
    %v1256 = vadd.f32 %v1254, %v1255
    %v1257 = vsel %vm739, %v1085, 0.0
    %v1258 = vsel %vm739, %v1087, 0.0
    %v1259 = vadd.f32 %v1257, %v1258
    %v1260 = vsel %vm739, %v1089, 0.0
    %v1261 = vadd.f32 %v1259, %v1260
    %v1262 = vsel %vm739, %v1091, 0.0
    %v1263 = vadd.f32 %v1261, %v1262
    %v1264 = vrot.slane %v1263, 4
    %v1265 = vadd.f32 %v1263, %v1264
    %v1266 = vrot.slane %v1265, 2
    %v1267 = vadd.f32 %v1265, %v1266
    %v1268 = vrot.slane %v1267, 1
    %v1269 = vadd.f32 %v1267, %v1268
    %v1270 = vsel %vm739, %v1093, 0.0
    %v1271 = vsel %vm739, %v1095, 0.0
    %v1272 = vadd.f32 %v1270, %v1271
    %v1273 = vsel %vm739, %v1097, 0.0
    %v1274 = vadd.f32 %v1272, %v1273
    %v1275 = vsel %vm739, %v1099, 0.0
    %v1276 = vadd.f32 %v1274, %v1275
    %v1277 = vrot.slane %v1276, 4
    %v1278 = vadd.f32 %v1276, %v1277
    %v1279 = vrot.slane %v1278, 2
    %v1280 = vadd.f32 %v1278, %v1279
    %v1281 = vrot.slane %v1280, 1
    %v1282 = vadd.f32 %v1280, %v1281
    %v1283 = vsel %vm739, %v1101, 0.0
    %v1284 = vsel %vm739, %v1103, 0.0
    %v1285 = vadd.f32 %v1283, %v1284
    %v1286 = vsel %vm739, %v1105, 0.0
    %v1287 = vadd.f32 %v1285, %v1286
    %v1288 = vsel %vm739, %v1107, 0.0
    %v1289 = vadd.f32 %v1287, %v1288
    %v1290 = vrot.slane %v1289, 4
    %v1291 = vadd.f32 %v1289, %v1290
    %v1292 = vrot.slane %v1291, 2
    %v1293 = vadd.f32 %v1291, %v1292
    %v1294 = vrot.slane %v1293, 1
    %v1295 = vadd.f32 %v1293, %v1294
    %v1296 = vsel %vm739, %v1109, 0.0
    %v1297 = vsel %vm739, %v1111, 0.0
    %v1298 = vadd.f32 %v1296, %v1297
    %v1299 = vsel %vm739, %v1113, 0.0
    %v1300 = vadd.f32 %v1298, %v1299
    %v1301 = vsel %vm739, %v1115, 0.0
    %v1302 = vadd.f32 %v1300, %v1301
    %v1303 = vrot.slane %v1302, 4
    %v1304 = vadd.f32 %v1302, %v1303
    %v1305 = vrot.slane %v1304, 2
    %v1306 = vadd.f32 %v1304, %v1305
    %v1307 = vrot.slane %v1306, 1
    %v1308 = vadd.f32 %v1306, %v1307
    %v1309 = vsel %vm739, %v1117, 0.0
    %v1310 = vsel %vm739, %v1119, 0.0
    %v1311 = vadd.f32 %v1309, %v1310
    %v1312 = vsel %vm739, %v1121, 0.0
    %v1313 = vadd.f32 %v1311, %v1312
    %v1314 = vsel %vm739, %v1123, 0.0
    %v1315 = vadd.f32 %v1313, %v1314
    %v1316 = vrot.slane %v1315, 4
    %v1317 = vadd.f32 %v1315, %v1316
    %v1318 = vrot.slane %v1317, 2
    %v1319 = vadd.f32 %v1317, %v1318
    %v1320 = vrot.slane %v1319, 1
    %v1321 = vadd.f32 %v1319, %v1320
    %v1322 = vsel %vm739, %v1125, 0.0
    %v1323 = vsel %vm739, %v1127, 0.0
    %v1324 = vadd.f32 %v1322, %v1323
    %v1325 = vsel %vm739, %v1129, 0.0
    %v1326 = vadd.f32 %v1324, %v1325
    %v1327 = vsel %vm739, %v1131, 0.0
    %v1328 = vadd.f32 %v1326, %v1327
    %v1329 = vrot.slane %v1328, 4
    %v1330 = vadd.f32 %v1328, %v1329
    %v1331 = vrot.slane %v1330, 2
    %v1332 = vadd.f32 %v1330, %v1331
    %v1333 = vrot.slane %v1332, 1
    %v1334 = vadd.f32 %v1332, %v1333
    %v1335 = vsel %vm739, %v1133, 0.0
    %v1336 = vsel %vm739, %v1135, 0.0
    %v1337 = vadd.f32 %v1335, %v1336
    %v1338 = vsel %vm739, %v1137, 0.0
    %v1339 = vadd.f32 %v1337, %v1338
    %v1340 = vsel %vm739, %v1139, 0.0
    %v1341 = vadd.f32 %v1339, %v1340
    %v1342 = vrot.slane %v1341, 4
    %v1343 = vadd.f32 %v1341, %v1342
    %v1344 = vrot.slane %v1343, 2
    %v1345 = vadd.f32 %v1343, %v1344
    %v1346 = vrot.slane %v1345, 1
    %v1347 = vadd.f32 %v1345, %v1346
    %v1348 = vrcp.pop %v1152
    %v1349 = vrcp.pop %v1165
    %v1350 = vrcp.pop %v1178
    %v1351 = vrcp.pop %v1191
    %v1352 = vrcp.pop %v1204
    %v1353 = vrcp.pop %v1217
    %v1354 = vrcp.pop %v1230
    %v1355 = vrcp.pop %v1243
    %v1356 = vrcp.pop %v1256
    %v1357 = vrcp.pop %v1269
    %v1358 = vrcp.pop %v1282
    %v1359 = vrcp.pop %v1295
    %v1360 = vrcp.pop %v1308
    %v1361 = vrcp.pop %v1321
    %v1362 = vrcp.pop %v1334
    %v1363 = vrcp.pop %v1347
    %v1364 = vmul.f32 %v1013, %v1348
    %v1365 = vmul.f32 %v1015, %v1348
    %v1366 = vmul.f32 %v1017, %v1348
    %v1367 = vmul.f32 %v1019, %v1348
    %v1368 = vmul.f32 %v1021, %v1349
    %v1369 = vmul.f32 %v1023, %v1349
    %v1370 = vmul.f32 %v1025, %v1349
    %v1371 = vmul.f32 %v1027, %v1349
    %v1372 = vmul.f32 %v1029, %v1350
    %v1373 = vmul.f32 %v1031, %v1350
    %v1374 = vmul.f32 %v1033, %v1350
    %v1375 = vmul.f32 %v1035, %v1350
    %v1376 = vmul.f32 %v1037, %v1351
    %v1377 = vmul.f32 %v1039, %v1351
    %v1378 = vmul.f32 %v1041, %v1351
    %v1379 = vmul.f32 %v1043, %v1351
    %v1380 = vmul.f32 %v1045, %v1352
    %v1381 = vmul.f32 %v1047, %v1352
    %v1382 = vmul.f32 %v1049, %v1352
    %v1383 = vmul.f32 %v1051, %v1352
    %v1384 = vmul.f32 %v1053, %v1353
    %v1385 = vmul.f32 %v1055, %v1353
    %v1386 = vmul.f32 %v1057, %v1353
    %v1387 = vmul.f32 %v1059, %v1353
    %v1388 = vmul.f32 %v1061, %v1354
    %v1389 = vmul.f32 %v1063, %v1354
    %v1390 = vmul.f32 %v1065, %v1354
    %v1391 = vmul.f32 %v1067, %v1354
    %v1392 = vmul.f32 %v1069, %v1355
    %v1393 = vmul.f32 %v1071, %v1355
    %v1394 = vmul.f32 %v1073, %v1355
    %v1395 = vmul.f32 %v1075, %v1355
    %v1396 = vmul.f32 %v1077, %v1356
    %v1397 = vmul.f32 %v1079, %v1356
    %v1398 = vmul.f32 %v1081, %v1356
    %v1399 = vmul.f32 %v1083, %v1356
    %v1400 = vmul.f32 %v1085, %v1357
    %v1401 = vmul.f32 %v1087, %v1357
    %v1402 = vmul.f32 %v1089, %v1357
    %v1403 = vmul.f32 %v1091, %v1357
    %v1404 = vmul.f32 %v1093, %v1358
    %v1405 = vmul.f32 %v1095, %v1358
    %v1406 = vmul.f32 %v1097, %v1358
    %v1407 = vmul.f32 %v1099, %v1358
    %v1408 = vmul.f32 %v1101, %v1359
    %v1409 = vmul.f32 %v1103, %v1359
    %v1410 = vmul.f32 %v1105, %v1359
    %v1411 = vmul.f32 %v1107, %v1359
    %v1412 = vmul.f32 %v1109, %v1360
    %v1413 = vmul.f32 %v1111, %v1360
    %v1414 = vmul.f32 %v1113, %v1360
    %v1415 = vmul.f32 %v1115, %v1360
    %v1416 = vmul.f32 %v1117, %v1361
    %v1417 = vmul.f32 %v1119, %v1361
    %v1418 = vmul.f32 %v1121, %v1361
    %v1419 = vmul.f32 %v1123, %v1361
    %v1420 = vmul.f32 %v1125, %v1362
    %v1421 = vmul.f32 %v1127, %v1362
    %v1422 = vmul.f32 %v1129, %v1362
    %v1423 = vmul.f32 %v1131, %v1362
    %v1424 = vmul.f32 %v1133, %v1363
    %v1425 = vmul.f32 %v1135, %v1363
    %v1426 = vmul.f32 %v1137, %v1363
    %v1427 = vmul.f32 %v1139, %v1363
    %v1428 = vunpack.c.l.bf16 %v45
    %v1429 = vunpack.c.l.bf16 %v46
    %v1430 = vunpack.c.l.bf16 %v47
    %v1431 = vunpack.c.l.bf16 %v48
    %v1432 = vunpack.c.l.bf16 %v49
    %v1433 = vunpack.c.l.bf16 %v50
    %v1434 = vunpack.c.l.bf16 %v51
    %v1435 = vunpack.c.l.bf16 %v52
    %v1436 = vunpack.c.l.bf16 %v53
    %v1437 = vunpack.c.l.bf16 %v54
    %v1438 = vunpack.c.l.bf16 %v55
    %v1439 = vunpack.c.l.bf16 %v56
    %v1440 = vunpack.c.l.bf16 %v57
    %v1441 = vunpack.c.l.bf16 %v58
    %v1442 = vunpack.c.l.bf16 %v59
    %v1443 = vunpack.c.l.bf16 %v60
    %v1444 = vunpack.c.l.bf16 %v61
    %v1445 = vunpack.c.l.bf16 %v62
    %v1446 = vunpack.c.l.bf16 %v63
    %v1447 = vunpack.c.l.bf16 %v64
    %v1448 = vunpack.c.l.bf16 %v65
    %v1449 = vunpack.c.l.bf16 %v66
    %v1450 = vunpack.c.l.bf16 %v67
    %v1451 = vunpack.c.l.bf16 %v68
    %v1452 = vunpack.c.l.bf16 %v69
    %v1453 = vunpack.c.l.bf16 %v70
    %v1454 = vunpack.c.l.bf16 %v71
    %v1455 = vunpack.c.l.bf16 %v72
    %v1456 = vunpack.c.l.bf16 %v73
    %v1457 = vunpack.c.l.bf16 %v74
    %v1458 = vunpack.c.l.bf16 %v75
    %v1459 = vunpack.c.l.bf16 %v76
    %v1460 = vunpack.c.l.bf16 %v77
    %v1461 = vunpack.c.l.bf16 %v78
    %v1462 = vunpack.c.l.bf16 %v79
    %v1463 = vunpack.c.l.bf16 %v80
    %v1464 = vunpack.c.l.bf16 %v81
    %v1465 = vunpack.c.l.bf16 %v82
    %v1466 = vunpack.c.l.bf16 %v83
    %v1467 = vunpack.c.l.bf16 %v84
    %v1468 = vunpack.c.l.bf16 %v85
    %v1469 = vunpack.c.l.bf16 %v86
    %v1470 = vunpack.c.l.bf16 %v87
    %v1471 = vunpack.c.l.bf16 %v88
    %v1472 = vunpack.c.l.bf16 %v89
    %v1473 = vunpack.c.l.bf16 %v90
    %v1474 = vunpack.c.l.bf16 %v91
    %v1475 = vunpack.c.l.bf16 %v92
    %v1476 = vunpack.c.l.bf16 %v93
    %v1477 = vunpack.c.l.bf16 %v94
    %v1478 = vunpack.c.l.bf16 %v95
    %v1479 = vunpack.c.l.bf16 %v96
    %v1480 = vunpack.c.l.bf16 %v97
    %v1481 = vunpack.c.l.bf16 %v98
    %v1482 = vunpack.c.l.bf16 %v99
    %v1483 = vunpack.c.l.bf16 %v100
    %v1484 = vunpack.c.l.bf16 %v101
    %v1485 = vunpack.c.l.bf16 %v102
    %v1486 = vunpack.c.l.bf16 %v103
    %v1487 = vunpack.c.l.bf16 %v104
    %v1488 = vunpack.c.l.bf16 %v105
    %v1489 = vunpack.c.l.bf16 %v106
    %v1490 = vunpack.c.l.bf16 %v107
    %v1491 = vunpack.c.l.bf16 %v108
    %v1492 = vld [vmem:[%s3] sm:$0xff]
    %v1493 = vld [vmem:[%s3 + $0x8] sm:$0xff]
    %v1494 = vld [vmem:[%s3 + $0x10] sm:$0xff]
    %v1495 = vld [vmem:[%s3 + $0x18] sm:$0xff]
    %v1496 = vadd.f32 %v1428, %v1492
    %v1497 = vadd.f32 %v1429, %v1493
    %v1498 = vadd.f32 %v1430, %v1494
    %v1499 = vadd.f32 %v1431, %v1495
    %v1500 = vadd.f32 %v1432, %v1492
    %v1501 = vadd.f32 %v1433, %v1493
    %v1502 = vadd.f32 %v1434, %v1494
    %v1503 = vadd.f32 %v1435, %v1495
    %v1504 = vadd.f32 %v1436, %v1492
    %v1505 = vadd.f32 %v1437, %v1493
    %v1506 = vadd.f32 %v1438, %v1494
    %v1507 = vadd.f32 %v1439, %v1495
    %v1508 = vadd.f32 %v1440, %v1492
    %v1509 = vadd.f32 %v1441, %v1493
    %v1510 = vadd.f32 %v1442, %v1494
    %v1511 = vadd.f32 %v1443, %v1495
    %v1512 = vadd.f32 %v1444, %v1492
    %v1513 = vadd.f32 %v1445, %v1493
    %v1514 = vadd.f32 %v1446, %v1494
    %v1515 = vadd.f32 %v1447, %v1495
    %v1516 = vadd.f32 %v1448, %v1492
    %v1517 = vadd.f32 %v1449, %v1493
    %v1518 = vadd.f32 %v1450, %v1494
    %v1519 = vadd.f32 %v1451, %v1495
    %v1520 = vadd.f32 %v1452, %v1492
    %v1521 = vadd.f32 %v1453, %v1493
    %v1522 = vadd.f32 %v1454, %v1494
    %v1523 = vadd.f32 %v1455, %v1495
    %v1524 = vadd.f32 %v1456, %v1492
    %v1525 = vadd.f32 %v1457, %v1493
    %v1526 = vadd.f32 %v1458, %v1494
    %v1527 = vadd.f32 %v1459, %v1495
    %v1528 = vadd.f32 %v1460, %v1492
    %v1529 = vadd.f32 %v1461, %v1493
    %v1530 = vadd.f32 %v1462, %v1494
    %v1531 = vadd.f32 %v1463, %v1495
    %v1532 = vadd.f32 %v1464, %v1492
    %v1533 = vadd.f32 %v1465, %v1493
    %v1534 = vadd.f32 %v1466, %v1494
    %v1535 = vadd.f32 %v1467, %v1495
    %v1536 = vadd.f32 %v1468, %v1492
    %v1537 = vadd.f32 %v1469, %v1493
    %v1538 = vadd.f32 %v1470, %v1494
    %v1539 = vadd.f32 %v1471, %v1495
    %v1540 = vadd.f32 %v1472, %v1492
    %v1541 = vadd.f32 %v1473, %v1493
    %v1542 = vadd.f32 %v1474, %v1494
    %v1543 = vadd.f32 %v1475, %v1495
    %v1544 = vadd.f32 %v1476, %v1492
    %v1545 = vadd.f32 %v1477, %v1493
    %v1546 = vadd.f32 %v1478, %v1494
    %v1547 = vadd.f32 %v1479, %v1495
    %v1548 = vadd.f32 %v1480, %v1492
    %v1549 = vadd.f32 %v1481, %v1493
    %v1550 = vadd.f32 %v1482, %v1494
    %v1551 = vadd.f32 %v1483, %v1495
    %v1552 = vadd.f32 %v1484, %v1492
    %v1553 = vadd.f32 %v1485, %v1493
    %v1554 = vadd.f32 %v1486, %v1494
    %v1555 = vadd.f32 %v1487, %v1495
    %v1556 = vadd.f32 %v1488, %v1492
    %v1557 = vadd.f32 %v1489, %v1493
    %v1558 = vadd.f32 %v1490, %v1494
    %v1559 = vadd.f32 %v1491, %v1495
    %1561 = vset.pattern.permute.xlu0 0
    %1562 = vperm.xlu0 %1561, %v1364
    %v1563 = vpop.permute.xlu0 %1562
    %1566 = vset.pattern.permute.xlu0 0
    %1567 = vperm.xlu0 %1566, %v1365
    %v1568 = vpop.permute.xlu0 %1567
    %1571 = vset.pattern.permute.xlu0 0
    %1572 = vperm.xlu0 %1571, %v1366
    %v1573 = vpop.permute.xlu0 %1572
    %1576 = vset.pattern.permute.xlu0 0
    %1577 = vperm.xlu0 %1576, %v1367
    %v1578 = vpop.permute.xlu0 %1577
    %1581 = vset.pattern.permute.xlu0 0
    %1582 = vperm.xlu0 %1581, %v1368
    %v1583 = vpop.permute.xlu0 %1582
    %1586 = vset.pattern.permute.xlu0 0
    %1587 = vperm.xlu0 %1586, %v1369
    %v1588 = vpop.permute.xlu0 %1587
    %1591 = vset.pattern.permute.xlu0 0
    %1592 = vperm.xlu0 %1591, %v1370
    %v1593 = vpop.permute.xlu0 %1592
    %1596 = vset.pattern.permute.xlu0 0
    %1597 = vperm.xlu0 %1596, %v1371
    %v1598 = vpop.permute.xlu0 %1597
    %1601 = vset.pattern.permute.xlu0 0
    %1602 = vperm.xlu0 %1601, %v1372
    %v1603 = vpop.permute.xlu0 %1602
    %1606 = vset.pattern.permute.xlu0 0
    %1607 = vperm.xlu0 %1606, %v1373
    %v1608 = vpop.permute.xlu0 %1607
    %1611 = vset.pattern.permute.xlu0 0
    %1612 = vperm.xlu0 %1611, %v1374
    %v1613 = vpop.permute.xlu0 %1612
    %1616 = vset.pattern.permute.xlu0 0
    %1617 = vperm.xlu0 %1616, %v1375
    %v1618 = vpop.permute.xlu0 %1617
    %1621 = vset.pattern.permute.xlu0 0
    %1622 = vperm.xlu0 %1621, %v1376
    %v1623 = vpop.permute.xlu0 %1622
    %1626 = vset.pattern.permute.xlu0 0
    %1627 = vperm.xlu0 %1626, %v1377
    %v1628 = vpop.permute.xlu0 %1627
    %1631 = vset.pattern.permute.xlu0 0
    %1632 = vperm.xlu0 %1631, %v1378
    %v1633 = vpop.permute.xlu0 %1632
    %1636 = vset.pattern.permute.xlu0 0
    %1637 = vperm.xlu0 %1636, %v1379
    %v1638 = vpop.permute.xlu0 %1637
    %1641 = vset.pattern.permute.xlu0 0
    %1642 = vperm.xlu0 %1641, %v1380
    %v1643 = vpop.permute.xlu0 %1642
    %1646 = vset.pattern.permute.xlu0 0
    %1647 = vperm.xlu0 %1646, %v1381
    %v1648 = vpop.permute.xlu0 %1647
    %1651 = vset.pattern.permute.xlu0 0
    %1652 = vperm.xlu0 %1651, %v1382
    %v1653 = vpop.permute.xlu0 %1652
    %1656 = vset.pattern.permute.xlu0 0
    %1657 = vperm.xlu0 %1656, %v1383
    %v1658 = vpop.permute.xlu0 %1657
    %1661 = vset.pattern.permute.xlu0 0
    %1662 = vperm.xlu0 %1661, %v1384
    %v1663 = vpop.permute.xlu0 %1662
    %1666 = vset.pattern.permute.xlu0 0
    %1667 = vperm.xlu0 %1666, %v1385
    %v1668 = vpop.permute.xlu0 %1667
    %1671 = vset.pattern.permute.xlu0 0
    %1672 = vperm.xlu0 %1671, %v1386
    %v1673 = vpop.permute.xlu0 %1672
    %1676 = vset.pattern.permute.xlu0 0
    %1677 = vperm.xlu0 %1676, %v1387
    %v1678 = vpop.permute.xlu0 %1677
    %1681 = vset.pattern.permute.xlu0 0
    %1682 = vperm.xlu0 %1681, %v1388
    %v1683 = vpop.permute.xlu0 %1682
    %1686 = vset.pattern.permute.xlu0 0
    %1687 = vperm.xlu0 %1686, %v1389
    %v1688 = vpop.permute.xlu0 %1687
    %1691 = vset.pattern.permute.xlu0 0
    %1692 = vperm.xlu0 %1691, %v1390
    %v1693 = vpop.permute.xlu0 %1692
    %1696 = vset.pattern.permute.xlu0 0
    %1697 = vperm.xlu0 %1696, %v1391
    %v1698 = vpop.permute.xlu0 %1697
    %1701 = vset.pattern.permute.xlu0 0
    %1702 = vperm.xlu0 %1701, %v1392
    %v1703 = vpop.permute.xlu0 %1702
    %1706 = vset.pattern.permute.xlu0 0
    %1707 = vperm.xlu0 %1706, %v1393
    %v1708 = vpop.permute.xlu0 %1707
    %1711 = vset.pattern.permute.xlu0 0
    %1712 = vperm.xlu0 %1711, %v1394
    %v1713 = vpop.permute.xlu0 %1712
    %1716 = vset.pattern.permute.xlu0 0
    %1717 = vperm.xlu0 %1716, %v1395
    %v1718 = vpop.permute.xlu0 %1717
    %1721 = vset.pattern.permute.xlu0 0
    %1722 = vperm.xlu0 %1721, %v1396
    %v1723 = vpop.permute.xlu0 %1722
    %1726 = vset.pattern.permute.xlu0 0
    %1727 = vperm.xlu0 %1726, %v1397
    %v1728 = vpop.permute.xlu0 %1727
    %1731 = vset.pattern.permute.xlu0 0
    %1732 = vperm.xlu0 %1731, %v1398
    %v1733 = vpop.permute.xlu0 %1732
    %1736 = vset.pattern.permute.xlu0 0
    %1737 = vperm.xlu0 %1736, %v1399
    %v1738 = vpop.permute.xlu0 %1737
    %1741 = vset.pattern.permute.xlu0 0
    %1742 = vperm.xlu0 %1741, %v1400
    %v1743 = vpop.permute.xlu0 %1742
    %1746 = vset.pattern.permute.xlu0 0
    %1747 = vperm.xlu0 %1746, %v1401
    %v1748 = vpop.permute.xlu0 %1747
    %1751 = vset.pattern.permute.xlu0 0
    %1752 = vperm.xlu0 %1751, %v1402
    %v1753 = vpop.permute.xlu0 %1752
    %1756 = vset.pattern.permute.xlu0 0
    %1757 = vperm.xlu0 %1756, %v1403
    %v1758 = vpop.permute.xlu0 %1757
    %1761 = vset.pattern.permute.xlu0 0
    %1762 = vperm.xlu0 %1761, %v1404
    %v1763 = vpop.permute.xlu0 %1762
    %1766 = vset.pattern.permute.xlu0 0
    %1767 = vperm.xlu0 %1766, %v1405
    %v1768 = vpop.permute.xlu0 %1767
    %1771 = vset.pattern.permute.xlu0 0
    %1772 = vperm.xlu0 %1771, %v1406
    %v1773 = vpop.permute.xlu0 %1772
    %1776 = vset.pattern.permute.xlu0 0
    %1777 = vperm.xlu0 %1776, %v1407
    %v1778 = vpop.permute.xlu0 %1777
    %1781 = vset.pattern.permute.xlu0 0
    %1782 = vperm.xlu0 %1781, %v1408
    %v1783 = vpop.permute.xlu0 %1782
    %1786 = vset.pattern.permute.xlu0 0
    %1787 = vperm.xlu0 %1786, %v1409
    %v1788 = vpop.permute.xlu0 %1787
    %1791 = vset.pattern.permute.xlu0 0
    %1792 = vperm.xlu0 %1791, %v1410
    %v1793 = vpop.permute.xlu0 %1792
    %1796 = vset.pattern.permute.xlu0 0
    %1797 = vperm.xlu0 %1796, %v1411
    %v1798 = vpop.permute.xlu0 %1797
    %1801 = vset.pattern.permute.xlu0 0
    %1802 = vperm.xlu0 %1801, %v1412
    %v1803 = vpop.permute.xlu0 %1802
    %1806 = vset.pattern.permute.xlu0 0
    %1807 = vperm.xlu0 %1806, %v1413
    %v1808 = vpop.permute.xlu0 %1807
    %1811 = vset.pattern.permute.xlu0 0
    %1812 = vperm.xlu0 %1811, %v1414
    %v1813 = vpop.permute.xlu0 %1812
    %1816 = vset.pattern.permute.xlu0 0
    %1817 = vperm.xlu0 %1816, %v1415
    %v1818 = vpop.permute.xlu0 %1817
    %1821 = vset.pattern.permute.xlu0 0
    %1822 = vperm.xlu0 %1821, %v1416
    %v1823 = vpop.permute.xlu0 %1822
    %1826 = vset.pattern.permute.xlu0 0
    %1827 = vperm.xlu0 %1826, %v1417
    %v1828 = vpop.permute.xlu0 %1827
    %1831 = vset.pattern.permute.xlu0 0
    %1832 = vperm.xlu0 %1831, %v1418
    %v1833 = vpop.permute.xlu0 %1832
    %1836 = vset.pattern.permute.xlu0 0
    %1837 = vperm.xlu0 %1836, %v1419
    %v1838 = vpop.permute.xlu0 %1837
    %1841 = vset.pattern.permute.xlu0 0
    %1842 = vperm.xlu0 %1841, %v1420
    %v1843 = vpop.permute.xlu0 %1842
    %1846 = vset.pattern.permute.xlu0 0
    %1847 = vperm.xlu0 %1846, %v1421
    %v1848 = vpop.permute.xlu0 %1847
    %1851 = vset.pattern.permute.xlu0 0
    %1852 = vperm.xlu0 %1851, %v1422
    %v1853 = vpop.permute.xlu0 %1852
    %1856 = vset.pattern.permute.xlu0 0
    %1857 = vperm.xlu0 %1856, %v1423
    %v1858 = vpop.permute.xlu0 %1857
    %1861 = vset.pattern.permute.xlu0 0
    %1862 = vperm.xlu0 %1861, %v1424
    %v1863 = vpop.permute.xlu0 %1862
    %1866 = vset.pattern.permute.xlu0 0
    %1867 = vperm.xlu0 %1866, %v1425
    %v1868 = vpop.permute.xlu0 %1867
    %1871 = vset.pattern.permute.xlu0 0
    %1872 = vperm.xlu0 %1871, %v1426
    %v1873 = vpop.permute.xlu0 %1872
    %1876 = vset.pattern.permute.xlu0 0
    %1877 = vperm.xlu0 %1876, %v1427
    %v1878 = vpop.permute.xlu0 %1877
    %v1880 = vmul.f32 %v1496, %v1563
    %v1881 = vmul.f32 %v1497, %v1568
    %v1882 = vmul.f32 %v1498, %v1573
    %v1883 = vmul.f32 %v1499, %v1578
    %v1884 = vmul.f32 %v1500, %v1583
    %v1885 = vmul.f32 %v1501, %v1588
    %v1886 = vmul.f32 %v1502, %v1593
    %v1887 = vmul.f32 %v1503, %v1598
    %v1888 = vmul.f32 %v1504, %v1603
    %v1889 = vmul.f32 %v1505, %v1608
    %v1890 = vmul.f32 %v1506, %v1613
    %v1891 = vmul.f32 %v1507, %v1618
    %v1892 = vmul.f32 %v1508, %v1623
    %v1893 = vmul.f32 %v1509, %v1628
    %v1894 = vmul.f32 %v1510, %v1633
    %v1895 = vmul.f32 %v1511, %v1638
    %v1896 = vmul.f32 %v1512, %v1643
    %v1897 = vmul.f32 %v1513, %v1648
    %v1898 = vmul.f32 %v1514, %v1653
    %v1899 = vmul.f32 %v1515, %v1658
    %v1900 = vmul.f32 %v1516, %v1663
    %v1901 = vmul.f32 %v1517, %v1668
    %v1902 = vmul.f32 %v1518, %v1673
    %v1903 = vmul.f32 %v1519, %v1678
    %v1904 = vmul.f32 %v1520, %v1683
    %v1905 = vmul.f32 %v1521, %v1688
    %v1906 = vmul.f32 %v1522, %v1693
    %v1907 = vmul.f32 %v1523, %v1698
    %v1908 = vmul.f32 %v1524, %v1703
    %v1909 = vmul.f32 %v1525, %v1708
    %v1910 = vmul.f32 %v1526, %v1713
    %v1911 = vmul.f32 %v1527, %v1718
    %v1912 = vmul.f32 %v1528, %v1723
    %v1913 = vmul.f32 %v1529, %v1728
    %v1914 = vmul.f32 %v1530, %v1733
    %v1915 = vmul.f32 %v1531, %v1738
    %v1916 = vmul.f32 %v1532, %v1743
    %v1917 = vmul.f32 %v1533, %v1748
    %v1918 = vmul.f32 %v1534, %v1753
    %v1919 = vmul.f32 %v1535, %v1758
    %v1920 = vmul.f32 %v1536, %v1763
    %v1921 = vmul.f32 %v1537, %v1768
    %v1922 = vmul.f32 %v1538, %v1773
    %v1923 = vmul.f32 %v1539, %v1778
    %v1924 = vmul.f32 %v1540, %v1783
    %v1925 = vmul.f32 %v1541, %v1788
    %v1926 = vmul.f32 %v1542, %v1793
    %v1927 = vmul.f32 %v1543, %v1798
    %v1928 = vmul.f32 %v1544, %v1803
    %v1929 = vmul.f32 %v1545, %v1808
    %v1930 = vmul.f32 %v1546, %v1813
    %v1931 = vmul.f32 %v1547, %v1818
    %v1932 = vmul.f32 %v1548, %v1823
    %v1933 = vmul.f32 %v1549, %v1828
    %v1934 = vmul.f32 %v1550, %v1833
    %v1935 = vmul.f32 %v1551, %v1838
    %v1936 = vmul.f32 %v1552, %v1843
    %v1937 = vmul.f32 %v1553, %v1848
    %v1938 = vmul.f32 %v1554, %v1853
    %v1939 = vmul.f32 %v1555, %v1858
    %v1940 = vmul.f32 %v1556, %v1863
    %v1941 = vmul.f32 %v1557, %v1868
    %v1942 = vmul.f32 %v1558, %v1873
    %v1943 = vmul.f32 %v1559, %v1878
    %v1944 = vsel %vm285, %v1880, 0.0
    %v1945 = vsel %vm285, %v1881, 0.0
    %v1946 = vadd.f32 %v1944, %v1945
    %v1947 = vsel %vm285, %v1882, 0.0
    %v1948 = vadd.f32 %v1946, %v1947
    %v1949 = vsel %vm285, %v1883, 0.0
    %v1950 = vadd.f32 %v1948, %v1949
    %v1951 = vrot.slane %v1950, 4
    %v1952 = vadd.f32 %v1950, %v1951
    %v1953 = vrot.slane %v1952, 2
    %v1954 = vadd.f32 %v1952, %v1953
    %v1955 = vrot.slane %v1954, 1
    %v1956 = vadd.f32 %v1954, %v1955
    %v1957 = vsel %vm285, %v1884, 0.0
    %v1958 = vsel %vm285, %v1885, 0.0
    %v1959 = vadd.f32 %v1957, %v1958
    %v1960 = vsel %vm285, %v1886, 0.0
    %v1961 = vadd.f32 %v1959, %v1960
    %v1962 = vsel %vm285, %v1887, 0.0
    %v1963 = vadd.f32 %v1961, %v1962
    %v1964 = vrot.slane %v1963, 4
    %v1965 = vadd.f32 %v1963, %v1964
    %v1966 = vrot.slane %v1965, 2
    %v1967 = vadd.f32 %v1965, %v1966
    %v1968 = vrot.slane %v1967, 1
    %v1969 = vadd.f32 %v1967, %v1968
    %v1970 = vsel %vm285, %v1888, 0.0
    %v1971 = vsel %vm285, %v1889, 0.0
    %v1972 = vadd.f32 %v1970, %v1971
    %v1973 = vsel %vm285, %v1890, 0.0
    %v1974 = vadd.f32 %v1972, %v1973
    %v1975 = vsel %vm285, %v1891, 0.0
    %v1976 = vadd.f32 %v1974, %v1975
    %v1977 = vrot.slane %v1976, 4
    %v1978 = vadd.f32 %v1976, %v1977
    %v1979 = vrot.slane %v1978, 2
    %v1980 = vadd.f32 %v1978, %v1979
    %v1981 = vrot.slane %v1980, 1
    %v1982 = vadd.f32 %v1980, %v1981
    %v1983 = vsel %vm285, %v1892, 0.0
    %v1984 = vsel %vm285, %v1893, 0.0
    %v1985 = vadd.f32 %v1983, %v1984
    %v1986 = vsel %vm285, %v1894, 0.0
    %v1987 = vadd.f32 %v1985, %v1986
    %v1988 = vsel %vm285, %v1895, 0.0
    %v1989 = vadd.f32 %v1987, %v1988
    %v1990 = vrot.slane %v1989, 4
    %v1991 = vadd.f32 %v1989, %v1990
    %v1992 = vrot.slane %v1991, 2
    %v1993 = vadd.f32 %v1991, %v1992
    %v1994 = vrot.slane %v1993, 1
    %v1995 = vadd.f32 %v1993, %v1994
    %v1996 = vsel %vm285, %v1896, 0.0
    %v1997 = vsel %vm285, %v1897, 0.0
    %v1998 = vadd.f32 %v1996, %v1997
    %v1999 = vsel %vm285, %v1898, 0.0
    %v2000 = vadd.f32 %v1998, %v1999
    %v2001 = vsel %vm285, %v1899, 0.0
    %v2002 = vadd.f32 %v2000, %v2001
    %v2003 = vrot.slane %v2002, 4
    %v2004 = vadd.f32 %v2002, %v2003
    %v2005 = vrot.slane %v2004, 2
    %v2006 = vadd.f32 %v2004, %v2005
    %v2007 = vrot.slane %v2006, 1
    %v2008 = vadd.f32 %v2006, %v2007
    %v2009 = vsel %vm285, %v1900, 0.0
    %v2010 = vsel %vm285, %v1901, 0.0
    %v2011 = vadd.f32 %v2009, %v2010
    %v2012 = vsel %vm285, %v1902, 0.0
    %v2013 = vadd.f32 %v2011, %v2012
    %v2014 = vsel %vm285, %v1903, 0.0
    %v2015 = vadd.f32 %v2013, %v2014
    %v2016 = vrot.slane %v2015, 4
    %v2017 = vadd.f32 %v2015, %v2016
    %v2018 = vrot.slane %v2017, 2
    %v2019 = vadd.f32 %v2017, %v2018
    %v2020 = vrot.slane %v2019, 1
    %v2021 = vadd.f32 %v2019, %v2020
    %v2022 = vsel %vm285, %v1904, 0.0
    %v2023 = vsel %vm285, %v1905, 0.0
    %v2024 = vadd.f32 %v2022, %v2023
    %v2025 = vsel %vm285, %v1906, 0.0
    %v2026 = vadd.f32 %v2024, %v2025
    %v2027 = vsel %vm285, %v1907, 0.0
    %v2028 = vadd.f32 %v2026, %v2027
    %v2029 = vrot.slane %v2028, 4
    %v2030 = vadd.f32 %v2028, %v2029
    %v2031 = vrot.slane %v2030, 2
    %v2032 = vadd.f32 %v2030, %v2031
    %v2033 = vrot.slane %v2032, 1
    %v2034 = vadd.f32 %v2032, %v2033
    %v2035 = vsel %vm285, %v1908, 0.0
    %v2036 = vsel %vm285, %v1909, 0.0
    %v2037 = vadd.f32 %v2035, %v2036
    %v2038 = vsel %vm285, %v1910, 0.0
    %v2039 = vadd.f32 %v2037, %v2038
    %v2040 = vsel %vm285, %v1911, 0.0
    %v2041 = vadd.f32 %v2039, %v2040
    %v2042 = vrot.slane %v2041, 4
    %v2043 = vadd.f32 %v2041, %v2042
    %v2044 = vrot.slane %v2043, 2
    %v2045 = vadd.f32 %v2043, %v2044
    %v2046 = vrot.slane %v2045, 1
    %v2047 = vadd.f32 %v2045, %v2046
    %v2048 = vsel %vm285, %v1912, 0.0
    %v2049 = vsel %vm285, %v1913, 0.0
    %v2050 = vadd.f32 %v2048, %v2049
    %v2051 = vsel %vm285, %v1914, 0.0
    %v2052 = vadd.f32 %v2050, %v2051
    %v2053 = vsel %vm285, %v1915, 0.0
    %v2054 = vadd.f32 %v2052, %v2053
    %v2055 = vrot.slane %v2054, 4
    %v2056 = vadd.f32 %v2054, %v2055
    %v2057 = vrot.slane %v2056, 2
    %v2058 = vadd.f32 %v2056, %v2057
    %v2059 = vrot.slane %v2058, 1
    %v2060 = vadd.f32 %v2058, %v2059
    %v2061 = vsel %vm285, %v1916, 0.0
    %v2062 = vsel %vm285, %v1917, 0.0
    %v2063 = vadd.f32 %v2061, %v2062
    %v2064 = vsel %vm285, %v1918, 0.0
    %v2065 = vadd.f32 %v2063, %v2064
    %v2066 = vsel %vm285, %v1919, 0.0
    %v2067 = vadd.f32 %v2065, %v2066
    %v2068 = vrot.slane %v2067, 4
    %v2069 = vadd.f32 %v2067, %v2068
    %v2070 = vrot.slane %v2069, 2
    %v2071 = vadd.f32 %v2069, %v2070
    %v2072 = vrot.slane %v2071, 1
    %v2073 = vadd.f32 %v2071, %v2072
    %v2074 = vsel %vm285, %v1920, 0.0
    %v2075 = vsel %vm285, %v1921, 0.0
    %v2076 = vadd.f32 %v2074, %v2075
    %v2077 = vsel %vm285, %v1922, 0.0
    %v2078 = vadd.f32 %v2076, %v2077
    %v2079 = vsel %vm285, %v1923, 0.0
    %v2080 = vadd.f32 %v2078, %v2079
    %v2081 = vrot.slane %v2080, 4
    %v2082 = vadd.f32 %v2080, %v2081
    %v2083 = vrot.slane %v2082, 2
    %v2084 = vadd.f32 %v2082, %v2083
    %v2085 = vrot.slane %v2084, 1
    %v2086 = vadd.f32 %v2084, %v2085
    %v2087 = vsel %vm285, %v1924, 0.0
    %v2088 = vsel %vm285, %v1925, 0.0
    %v2089 = vadd.f32 %v2087, %v2088
    %v2090 = vsel %vm285, %v1926, 0.0
    %v2091 = vadd.f32 %v2089, %v2090
    %v2092 = vsel %vm285, %v1927, 0.0
    %v2093 = vadd.f32 %v2091, %v2092
    %v2094 = vrot.slane %v2093, 4
    %v2095 = vadd.f32 %v2093, %v2094
    %v2096 = vrot.slane %v2095, 2
    %v2097 = vadd.f32 %v2095, %v2096
    %v2098 = vrot.slane %v2097, 1
    %v2099 = vadd.f32 %v2097, %v2098
    %v2100 = vsel %vm285, %v1928, 0.0
    %v2101 = vsel %vm285, %v1929, 0.0
    %v2102 = vadd.f32 %v2100, %v2101
    %v2103 = vsel %vm285, %v1930, 0.0
    %v2104 = vadd.f32 %v2102, %v2103
    %v2105 = vsel %vm285, %v1931, 0.0
    %v2106 = vadd.f32 %v2104, %v2105
    %v2107 = vrot.slane %v2106, 4
    %v2108 = vadd.f32 %v2106, %v2107
    %v2109 = vrot.slane %v2108, 2
    %v2110 = vadd.f32 %v2108, %v2109
    %v2111 = vrot.slane %v2110, 1
    %v2112 = vadd.f32 %v2110, %v2111
    %v2113 = vsel %vm285, %v1932, 0.0
    %v2114 = vsel %vm285, %v1933, 0.0
    %v2115 = vadd.f32 %v2113, %v2114
    %v2116 = vsel %vm285, %v1934, 0.0
    %v2117 = vadd.f32 %v2115, %v2116
    %v2118 = vsel %vm285, %v1935, 0.0
    %v2119 = vadd.f32 %v2117, %v2118
    %v2120 = vrot.slane %v2119, 4
    %v2121 = vadd.f32 %v2119, %v2120
    %v2122 = vrot.slane %v2121, 2
    %v2123 = vadd.f32 %v2121, %v2122
    %v2124 = vrot.slane %v2123, 1
    %v2125 = vadd.f32 %v2123, %v2124
    %v2126 = vsel %vm285, %v1936, 0.0
    %v2127 = vsel %vm285, %v1937, 0.0
    %v2128 = vadd.f32 %v2126, %v2127
    %v2129 = vsel %vm285, %v1938, 0.0
    %v2130 = vadd.f32 %v2128, %v2129
    %v2131 = vsel %vm285, %v1939, 0.0
    %v2132 = vadd.f32 %v2130, %v2131
    %v2133 = vrot.slane %v2132, 4
    %v2134 = vadd.f32 %v2132, %v2133
    %v2135 = vrot.slane %v2134, 2
    %v2136 = vadd.f32 %v2134, %v2135
    %v2137 = vrot.slane %v2136, 1
    %v2138 = vadd.f32 %v2136, %v2137
    %v2139 = vsel %vm285, %v1940, 0.0
    %v2140 = vsel %vm285, %v1941, 0.0
    %v2141 = vadd.f32 %v2139, %v2140
    %v2142 = vsel %vm285, %v1942, 0.0
    %v2143 = vadd.f32 %v2141, %v2142
    %v2144 = vsel %vm285, %v1943, 0.0
    %v2145 = vadd.f32 %v2143, %v2144
    %v2146 = vrot.slane %v2145, 4
    %v2147 = vadd.f32 %v2145, %v2146
    %v2148 = vrot.slane %v2147, 2
    %v2149 = vadd.f32 %v2147, %v2148
    %v2150 = vrot.slane %v2149, 1
    %v2151 = vadd.f32 %v2149, %v2150
    %v2152 = vld [vmem:[%s4] sm:$0xff]
    %v2153 = vld [vmem:[%s4 + $0x8] sm:$0xff]
    %v2154 = vld [vmem:[%s4 + $0x10] sm:$0xff]
    %v2155 = vld [vmem:[%s4 + $0x18] sm:$0xff]
    %v2156 = vld [vmem:[%s5] sm:$0x1]
    %v2158 = vlaneseq
    %v2159 = vshrl.u32 %v2158, 7
    %v2160 = vsub.s32 0, %v2159
    %v2161 = vrot.slane %v2156, %v2160
    %vm2179 = vcmask 1041409
    %v2180 = vsel %vm2179, %v1969, %v1956
    %vm2181 = vcmask 1042434
    %v2182 = vsel %vm2181, %v1982, %v2180
    %vm2183 = vcmask 1043459
    %v2184 = vsel %vm2183, %v1995, %v2182
    %vm2185 = vcmask 1044484
    %v2186 = vsel %vm2185, %v2008, %v2184
    %vm2187 = vcmask 1045509
    %v2188 = vsel %vm2187, %v2021, %v2186
    %vm2189 = vcmask 1046534
    %v2190 = vsel %vm2189, %v2034, %v2188
    %vm2191 = vcmask 1047559
    %v2192 = vsel %vm2191, %v2047, %v2190
    %v2193 = vsel %vm2179, %v2073, %v2060
    %v2194 = vsel %vm2181, %v2086, %v2193
    %v2195 = vsel %vm2183, %v2099, %v2194
    %v2196 = vsel %vm2185, %v2112, %v2195
    %v2197 = vsel %vm2187, %v2125, %v2196
    %v2198 = vsel %vm2189, %v2138, %v2197
    %v2199 = vsel %vm2191, %v2151, %v2198
    %v2200 = vsel %vm285, %v2192, 0
    %v2202 = vsel %vm285, %v2199, 0
    %2204 = vmatprep.subr.mxu0 0.0
    %2205 = vmatpush1.msra.mxu0 %v2152
    %2206 = vmatprep.subr.mxu0 0.0
    %2207 = vmatpush1.msra.mxu0 %v2153
    %2208 = vmatprep.subr.mxu0 0.0
    %2209 = vmatpush1.msra.mxu0 %v2154
    %2210 = vmatprep.subr.mxu0 0.0
    %2211 = vmatpush1.msra.mxu0 %v2155
    %2212 = vmatprep.subr.mxu0 0.0
    %2213 = vmatpush1.msra.mxu0 0.0
    %2214 = vmatprep.subr.mxu0 0.0
    %2215 = vmatpush1.msra.mxu0 0.0
    %2216 = vmatprep.subr.mxu0 0.0
    %2217 = vmatpush1.msra.mxu0 0.0
    %2218 = vmatprep.subr.mxu0 0.0
    %2219 = vmatpush1.msra.mxu0 0.0
    %2220 = vmatprep.subr.mxu0 0.0
    %2221 = vmatpush1.msra.mxu0 0.0
    %2222 = vmatprep.subr.mxu0 0.0
    %2223 = vmatpush1.msra.mxu0 0.0
    %2224 = vmatprep.subr.mxu0 0.0
    %2225 = vmatpush1.msra.mxu0 0.0
    %2226 = vmatprep.subr.mxu0 0.0
    %2227 = vmatpush1.msra.mxu0 0.0
    %2228 = vmatprep.subr.mxu0 0.0
    %2229 = vmatpush1.msra.mxu0 0.0
    %2230 = vmatprep.subr.mxu0 0.0
    %2231 = vmatpush1.msra.mxu0 0.0
    %2232 = vmatprep.subr.mxu0 0.0
    %2233 = vmatpush1.msra.mxu0 0.0
    %2234 = vmatprep.subr.mxu0 0.0
    %2235 = vmatpush1.msra.mxu0 0.0
    %2236 = vmatprep.subr.mxu0 0.0
    %2237 = vmatpush1.msra.mxu0 0.0
    %2238 = vmatprep.subr.mxu0 0.0
    %2239 = vmatpush1.msra.mxu0 0.0
    %2240 = vmatprep.subr.mxu0 0.0
    %2241 = vmatpush1.msra.mxu0 0.0
    %2242 = vmatprep.subr.mxu0 0.0
    %2243 = vmatpush1.msra.mxu0 0.0
    %2244 = vmatprep.subr.mxu0 0.0
    %2245 = vmatpush1.msra.mxu0 0.0
    %2246 = vmatprep.subr.mxu0 0.0
    %2247 = vmatpush1.msra.mxu0 0.0
    %2248 = vmatprep.subr.mxu0 0.0
    %2249 = vmatpush1.msra.mxu0 0.0
    %2250 = vmatprep.subr.mxu0 0.0
    %2251 = vmatpush1.msra.mxu0 0.0
    %2252 = vmatprep.subr.mxu0 0.0
    %2253 = vmatpush1.msra.mxu0 0.0
    %2254 = vmatprep.subr.mxu0 0.0
    %2255 = vmatpush1.msra.mxu0 0.0
    %2256 = vmatprep.subr.mxu0 0.0
    %2257 = vmatpush1.msra.mxu0 0.0
    %2258 = vmatprep.subr.mxu0 0.0
    %2259 = vmatpush1.msra.mxu0 0.0
    %2260 = vmatprep.subr.mxu0 0.0
    %2261 = vmatpush1.msra.mxu0 0.0
    %2262 = vmatprep.subr.mxu0 0.0
    %2263 = vmatpush1.msra.mxu0 0.0
    %2264 = vmatprep.subr.mxu0 0.0
    %2265 = vmatpush1.msra.mxu0 0.0
    %2266 = vmatprep.subr.mxu0 0.0
    %2267 = vmatpush1.msra.mxu0 0.0
    %2268 = vmatprep.mubr.f32.mxu0 0.0
    %2269 = vmatmul.mubr.f32.gmra.mrb[0].mxu0 %v2200
    %v2270 = vpop.f32.mrb[0].mxu0
    %v2271 = vadd.f32 %v2161, %v2270
    %v2272 = vpop.f32.mrb[0].mxu0
    %2273 = vmatprep.mubr.f32.mxu0 0.0
    %2274 = vmatmul.mubr.f32.gmra.mrb[0].mxu0 %v2202
    %v2275 = vpop.f32.mrb[0].mxu0
    %v2276 = vadd.f32 %v2161, %v2275
    %v2277 = vpop.f32.mrb[0].mxu0
    %2278 = vdwg.mxu0
    %v2279 = vmax.f32 %v2271, 0.0
    %v2280 = vmax.f32 %v2276, 0.0
    %v2281 = vld [vmem:[%s6] sm:$0xff]
    %2282 = vset.pattern.permute.xlu0 1
    %2283 = vperm.xlu0 %2282, %v1364
    %v2284 = vpop.permute.xlu0 %2283
    %2286 = vset.pattern.permute.xlu0 1
    %2287 = vperm.xlu0 %2286, %v1365
    %v2288 = vpop.permute.xlu0 %2287
    %2290 = vset.pattern.permute.xlu0 1
    %2291 = vperm.xlu0 %2290, %v1366
    %v2292 = vpop.permute.xlu0 %2291
    %2294 = vset.pattern.permute.xlu0 1
    %2295 = vperm.xlu0 %2294, %v1367
    %v2296 = vpop.permute.xlu0 %2295
    %2298 = vset.pattern.permute.xlu0 1
    %2299 = vperm.xlu0 %2298, %v1368
    %v2300 = vpop.permute.xlu0 %2299
    %2302 = vset.pattern.permute.xlu0 1
    %2303 = vperm.xlu0 %2302, %v1369
    %v2304 = vpop.permute.xlu0 %2303
    %2306 = vset.pattern.permute.xlu0 1
    %2307 = vperm.xlu0 %2306, %v1370
    %v2308 = vpop.permute.xlu0 %2307
    %2310 = vset.pattern.permute.xlu0 1
    %2311 = vperm.xlu0 %2310, %v1371
    %v2312 = vpop.permute.xlu0 %2311
    %2314 = vset.pattern.permute.xlu0 1
    %2315 = vperm.xlu0 %2314, %v1372
    %v2316 = vpop.permute.xlu0 %2315
    %2318 = vset.pattern.permute.xlu0 1
    %2319 = vperm.xlu0 %2318, %v1373
    %v2320 = vpop.permute.xlu0 %2319
    %2322 = vset.pattern.permute.xlu0 1
    %2323 = vperm.xlu0 %2322, %v1374
    %v2324 = vpop.permute.xlu0 %2323
    %2326 = vset.pattern.permute.xlu0 1
    %2327 = vperm.xlu0 %2326, %v1375
    %v2328 = vpop.permute.xlu0 %2327
    %2330 = vset.pattern.permute.xlu0 1
    %2331 = vperm.xlu0 %2330, %v1376
    %v2332 = vpop.permute.xlu0 %2331
    %2334 = vset.pattern.permute.xlu0 1
    %2335 = vperm.xlu0 %2334, %v1377
    %v2336 = vpop.permute.xlu0 %2335
    %2338 = vset.pattern.permute.xlu0 1
    %2339 = vperm.xlu0 %2338, %v1378
    %v2340 = vpop.permute.xlu0 %2339
    %2342 = vset.pattern.permute.xlu0 1
    %2343 = vperm.xlu0 %2342, %v1379
    %v2344 = vpop.permute.xlu0 %2343
    %2346 = vset.pattern.permute.xlu0 1
    %2347 = vperm.xlu0 %2346, %v1380
    %v2348 = vpop.permute.xlu0 %2347
    %2350 = vset.pattern.permute.xlu0 1
    %2351 = vperm.xlu0 %2350, %v1381
    %v2352 = vpop.permute.xlu0 %2351
    %2354 = vset.pattern.permute.xlu0 1
    %2355 = vperm.xlu0 %2354, %v1382
    %v2356 = vpop.permute.xlu0 %2355
    %2358 = vset.pattern.permute.xlu0 1
    %2359 = vperm.xlu0 %2358, %v1383
    %v2360 = vpop.permute.xlu0 %2359
    %2362 = vset.pattern.permute.xlu0 1
    %2363 = vperm.xlu0 %2362, %v1384
    %v2364 = vpop.permute.xlu0 %2363
    %2366 = vset.pattern.permute.xlu0 1
    %2367 = vperm.xlu0 %2366, %v1385
    %v2368 = vpop.permute.xlu0 %2367
    %2370 = vset.pattern.permute.xlu0 1
    %2371 = vperm.xlu0 %2370, %v1386
    %v2372 = vpop.permute.xlu0 %2371
    %2374 = vset.pattern.permute.xlu0 1
    %2375 = vperm.xlu0 %2374, %v1387
    %v2376 = vpop.permute.xlu0 %2375
    %2378 = vset.pattern.permute.xlu0 1
    %2379 = vperm.xlu0 %2378, %v1388
    %v2380 = vpop.permute.xlu0 %2379
    %2382 = vset.pattern.permute.xlu0 1
    %2383 = vperm.xlu0 %2382, %v1389
    %v2384 = vpop.permute.xlu0 %2383
    %2386 = vset.pattern.permute.xlu0 1
    %2387 = vperm.xlu0 %2386, %v1390
    %v2388 = vpop.permute.xlu0 %2387
    %2390 = vset.pattern.permute.xlu0 1
    %2391 = vperm.xlu0 %2390, %v1391
    %v2392 = vpop.permute.xlu0 %2391
    %2394 = vset.pattern.permute.xlu0 1
    %2395 = vperm.xlu0 %2394, %v1392
    %v2396 = vpop.permute.xlu0 %2395
    %2398 = vset.pattern.permute.xlu0 1
    %2399 = vperm.xlu0 %2398, %v1393
    %v2400 = vpop.permute.xlu0 %2399
    %2402 = vset.pattern.permute.xlu0 1
    %2403 = vperm.xlu0 %2402, %v1394
    %v2404 = vpop.permute.xlu0 %2403
    %2406 = vset.pattern.permute.xlu0 1
    %2407 = vperm.xlu0 %2406, %v1395
    %v2408 = vpop.permute.xlu0 %2407
    %2410 = vset.pattern.permute.xlu0 1
    %2411 = vperm.xlu0 %2410, %v1396
    %v2412 = vpop.permute.xlu0 %2411
    %2414 = vset.pattern.permute.xlu0 1
    %2415 = vperm.xlu0 %2414, %v1397
    %v2416 = vpop.permute.xlu0 %2415
    %2418 = vset.pattern.permute.xlu0 1
    %2419 = vperm.xlu0 %2418, %v1398
    %v2420 = vpop.permute.xlu0 %2419
    %2422 = vset.pattern.permute.xlu0 1
    %2423 = vperm.xlu0 %2422, %v1399
    %v2424 = vpop.permute.xlu0 %2423
    %2426 = vset.pattern.permute.xlu0 1
    %2427 = vperm.xlu0 %2426, %v1400
    %v2428 = vpop.permute.xlu0 %2427
    %2430 = vset.pattern.permute.xlu0 1
    %2431 = vperm.xlu0 %2430, %v1401
    %v2432 = vpop.permute.xlu0 %2431
    %2434 = vset.pattern.permute.xlu0 1
    %2435 = vperm.xlu0 %2434, %v1402
    %v2436 = vpop.permute.xlu0 %2435
    %2438 = vset.pattern.permute.xlu0 1
    %2439 = vperm.xlu0 %2438, %v1403
    %v2440 = vpop.permute.xlu0 %2439
    %2442 = vset.pattern.permute.xlu0 1
    %2443 = vperm.xlu0 %2442, %v1404
    %v2444 = vpop.permute.xlu0 %2443
    %2446 = vset.pattern.permute.xlu0 1
    %2447 = vperm.xlu0 %2446, %v1405
    %v2448 = vpop.permute.xlu0 %2447
    %2450 = vset.pattern.permute.xlu0 1
    %2451 = vperm.xlu0 %2450, %v1406
    %v2452 = vpop.permute.xlu0 %2451
    %2454 = vset.pattern.permute.xlu0 1
    %2455 = vperm.xlu0 %2454, %v1407
    %v2456 = vpop.permute.xlu0 %2455
    %2458 = vset.pattern.permute.xlu0 1
    %2459 = vperm.xlu0 %2458, %v1408
    %v2460 = vpop.permute.xlu0 %2459
    %2462 = vset.pattern.permute.xlu0 1
    %2463 = vperm.xlu0 %2462, %v1409
    %v2464 = vpop.permute.xlu0 %2463
    %2466 = vset.pattern.permute.xlu0 1
    %2467 = vperm.xlu0 %2466, %v1410
    %v2468 = vpop.permute.xlu0 %2467
    %2470 = vset.pattern.permute.xlu0 1
    %2471 = vperm.xlu0 %2470, %v1411
    %v2472 = vpop.permute.xlu0 %2471
    %2474 = vset.pattern.permute.xlu0 1
    %2475 = vperm.xlu0 %2474, %v1412
    %v2476 = vpop.permute.xlu0 %2475
    %2478 = vset.pattern.permute.xlu0 1
    %2479 = vperm.xlu0 %2478, %v1413
    %v2480 = vpop.permute.xlu0 %2479
    %2482 = vset.pattern.permute.xlu0 1
    %2483 = vperm.xlu0 %2482, %v1414
    %v2484 = vpop.permute.xlu0 %2483
    %2486 = vset.pattern.permute.xlu0 1
    %2487 = vperm.xlu0 %2486, %v1415
    %v2488 = vpop.permute.xlu0 %2487
    %2490 = vset.pattern.permute.xlu0 1
    %2491 = vperm.xlu0 %2490, %v1416
    %v2492 = vpop.permute.xlu0 %2491
    %2494 = vset.pattern.permute.xlu0 1
    %2495 = vperm.xlu0 %2494, %v1417
    %v2496 = vpop.permute.xlu0 %2495
    %2498 = vset.pattern.permute.xlu0 1
    %2499 = vperm.xlu0 %2498, %v1418
    %v2500 = vpop.permute.xlu0 %2499
    %2502 = vset.pattern.permute.xlu0 1
    %2503 = vperm.xlu0 %2502, %v1419
    %v2504 = vpop.permute.xlu0 %2503
    %2506 = vset.pattern.permute.xlu0 1
    %2507 = vperm.xlu0 %2506, %v1420
    %v2508 = vpop.permute.xlu0 %2507
    %2510 = vset.pattern.permute.xlu0 1
    %2511 = vperm.xlu0 %2510, %v1421
    %v2512 = vpop.permute.xlu0 %2511
    %2514 = vset.pattern.permute.xlu0 1
    %2515 = vperm.xlu0 %2514, %v1422
    %v2516 = vpop.permute.xlu0 %2515
    %2518 = vset.pattern.permute.xlu0 1
    %2519 = vperm.xlu0 %2518, %v1423
    %v2520 = vpop.permute.xlu0 %2519
    %2522 = vset.pattern.permute.xlu0 1
    %2523 = vperm.xlu0 %2522, %v1424
    %v2524 = vpop.permute.xlu0 %2523
    %2526 = vset.pattern.permute.xlu0 1
    %2527 = vperm.xlu0 %2526, %v1425
    %v2528 = vpop.permute.xlu0 %2527
    %2530 = vset.pattern.permute.xlu0 1
    %2531 = vperm.xlu0 %2530, %v1426
    %v2532 = vpop.permute.xlu0 %2531
    %2534 = vset.pattern.permute.xlu0 1
    %2535 = vperm.xlu0 %2534, %v1427
    %v2536 = vpop.permute.xlu0 %2535
    %v2538 = vmul.f32 %v1496, %v2284
    %v2539 = vmul.f32 %v1497, %v2288
    %v2540 = vmul.f32 %v1498, %v2292
    %v2541 = vmul.f32 %v1499, %v2296
    %v2542 = vmul.f32 %v1500, %v2300
    %v2543 = vmul.f32 %v1501, %v2304
    %v2544 = vmul.f32 %v1502, %v2308
    %v2545 = vmul.f32 %v1503, %v2312
    %v2546 = vmul.f32 %v1504, %v2316
    %v2547 = vmul.f32 %v1505, %v2320
    %v2548 = vmul.f32 %v1506, %v2324
    %v2549 = vmul.f32 %v1507, %v2328
    %v2550 = vmul.f32 %v1508, %v2332
    %v2551 = vmul.f32 %v1509, %v2336
    %v2552 = vmul.f32 %v1510, %v2340
    %v2553 = vmul.f32 %v1511, %v2344
    %v2554 = vmul.f32 %v1512, %v2348
    %v2555 = vmul.f32 %v1513, %v2352
    %v2556 = vmul.f32 %v1514, %v2356
    %v2557 = vmul.f32 %v1515, %v2360
    %v2558 = vmul.f32 %v1516, %v2364
    %v2559 = vmul.f32 %v1517, %v2368
    %v2560 = vmul.f32 %v1518, %v2372
    %v2561 = vmul.f32 %v1519, %v2376
    %v2562 = vmul.f32 %v1520, %v2380
    %v2563 = vmul.f32 %v1521, %v2384
    %v2564 = vmul.f32 %v1522, %v2388
    %v2565 = vmul.f32 %v1523, %v2392
    %v2566 = vmul.f32 %v1524, %v2396
    %v2567 = vmul.f32 %v1525, %v2400
    %v2568 = vmul.f32 %v1526, %v2404
    %v2569 = vmul.f32 %v1527, %v2408
    %v2570 = vmul.f32 %v1528, %v2412
    %v2571 = vmul.f32 %v1529, %v2416
    %v2572 = vmul.f32 %v1530, %v2420
    %v2573 = vmul.f32 %v1531, %v2424
    %v2574 = vmul.f32 %v1532, %v2428
    %v2575 = vmul.f32 %v1533, %v2432
    %v2576 = vmul.f32 %v1534, %v2436
    %v2577 = vmul.f32 %v1535, %v2440
    %v2578 = vmul.f32 %v1536, %v2444
    %v2579 = vmul.f32 %v1537, %v2448
    %v2580 = vmul.f32 %v1538, %v2452
    %v2581 = vmul.f32 %v1539, %v2456
    %v2582 = vmul.f32 %v1540, %v2460
    %v2583 = vmul.f32 %v1541, %v2464
    %v2584 = vmul.f32 %v1542, %v2468
    %v2585 = vmul.f32 %v1543, %v2472
    %v2586 = vmul.f32 %v1544, %v2476
    %v2587 = vmul.f32 %v1545, %v2480
    %v2588 = vmul.f32 %v1546, %v2484
    %v2589 = vmul.f32 %v1547, %v2488
    %v2590 = vmul.f32 %v1548, %v2492
    %v2591 = vmul.f32 %v1549, %v2496
    %v2592 = vmul.f32 %v1550, %v2500
    %v2593 = vmul.f32 %v1551, %v2504
    %v2594 = vmul.f32 %v1552, %v2508
    %v2595 = vmul.f32 %v1553, %v2512
    %v2596 = vmul.f32 %v1554, %v2516
    %v2597 = vmul.f32 %v1555, %v2520
    %v2598 = vmul.f32 %v1556, %v2524
    %v2599 = vmul.f32 %v1557, %v2528
    %v2600 = vmul.f32 %v1558, %v2532
    %v2601 = vmul.f32 %v1559, %v2536
    %v2602 = vsel %vm285, %v2538, 0.0
    %v2603 = vsel %vm285, %v2539, 0.0
    %v2604 = vadd.f32 %v2602, %v2603
    %v2605 = vsel %vm285, %v2540, 0.0
    %v2606 = vadd.f32 %v2604, %v2605
    %v2607 = vsel %vm285, %v2541, 0.0
    %v2608 = vadd.f32 %v2606, %v2607
    %v2609 = vrot.slane %v2608, 4
    %v2610 = vadd.f32 %v2608, %v2609
    %v2611 = vrot.slane %v2610, 2
    %v2612 = vadd.f32 %v2610, %v2611
    %v2613 = vrot.slane %v2612, 1
    %v2614 = vadd.f32 %v2612, %v2613
    %v2615 = vsel %vm285, %v2542, 0.0
    %v2616 = vsel %vm285, %v2543, 0.0
    %v2617 = vadd.f32 %v2615, %v2616
    %v2618 = vsel %vm285, %v2544, 0.0
    %v2619 = vadd.f32 %v2617, %v2618
    %v2620 = vsel %vm285, %v2545, 0.0
    %v2621 = vadd.f32 %v2619, %v2620
    %v2622 = vrot.slane %v2621, 4
    %v2623 = vadd.f32 %v2621, %v2622
    %v2624 = vrot.slane %v2623, 2
    %v2625 = vadd.f32 %v2623, %v2624
    %v2626 = vrot.slane %v2625, 1
    %v2627 = vadd.f32 %v2625, %v2626
    %v2628 = vsel %vm285, %v2546, 0.0
    %v2629 = vsel %vm285, %v2547, 0.0
    %v2630 = vadd.f32 %v2628, %v2629
    %v2631 = vsel %vm285, %v2548, 0.0
    %v2632 = vadd.f32 %v2630, %v2631
    %v2633 = vsel %vm285, %v2549, 0.0
    %v2634 = vadd.f32 %v2632, %v2633
    %v2635 = vrot.slane %v2634, 4
    %v2636 = vadd.f32 %v2634, %v2635
    %v2637 = vrot.slane %v2636, 2
    %v2638 = vadd.f32 %v2636, %v2637
    %v2639 = vrot.slane %v2638, 1
    %v2640 = vadd.f32 %v2638, %v2639
    %v2641 = vsel %vm285, %v2550, 0.0
    %v2642 = vsel %vm285, %v2551, 0.0
    %v2643 = vadd.f32 %v2641, %v2642
    %v2644 = vsel %vm285, %v2552, 0.0
    %v2645 = vadd.f32 %v2643, %v2644
    %v2646 = vsel %vm285, %v2553, 0.0
    %v2647 = vadd.f32 %v2645, %v2646
    %v2648 = vrot.slane %v2647, 4
    %v2649 = vadd.f32 %v2647, %v2648
    %v2650 = vrot.slane %v2649, 2
    %v2651 = vadd.f32 %v2649, %v2650
    %v2652 = vrot.slane %v2651, 1
    %v2653 = vadd.f32 %v2651, %v2652
    %v2654 = vsel %vm285, %v2554, 0.0
    %v2655 = vsel %vm285, %v2555, 0.0
    %v2656 = vadd.f32 %v2654, %v2655
    %v2657 = vsel %vm285, %v2556, 0.0
    %v2658 = vadd.f32 %v2656, %v2657
    %v2659 = vsel %vm285, %v2557, 0.0
    %v2660 = vadd.f32 %v2658, %v2659
    %v2661 = vrot.slane %v2660, 4
    %v2662 = vadd.f32 %v2660, %v2661
    %v2663 = vrot.slane %v2662, 2
    %v2664 = vadd.f32 %v2662, %v2663
    %v2665 = vrot.slane %v2664, 1
    %v2666 = vadd.f32 %v2664, %v2665
    %v2667 = vsel %vm285, %v2558, 0.0
    %v2668 = vsel %vm285, %v2559, 0.0
    %v2669 = vadd.f32 %v2667, %v2668
    %v2670 = vsel %vm285, %v2560, 0.0
    %v2671 = vadd.f32 %v2669, %v2670
    %v2672 = vsel %vm285, %v2561, 0.0
    %v2673 = vadd.f32 %v2671, %v2672
    %v2674 = vrot.slane %v2673, 4
    %v2675 = vadd.f32 %v2673, %v2674
    %v2676 = vrot.slane %v2675, 2
    %v2677 = vadd.f32 %v2675, %v2676
    %v2678 = vrot.slane %v2677, 1
    %v2679 = vadd.f32 %v2677, %v2678
    %v2680 = vsel %vm285, %v2562, 0.0
    %v2681 = vsel %vm285, %v2563, 0.0
    %v2682 = vadd.f32 %v2680, %v2681
    %v2683 = vsel %vm285, %v2564, 0.0
    %v2684 = vadd.f32 %v2682, %v2683
    %v2685 = vsel %vm285, %v2565, 0.0
    %v2686 = vadd.f32 %v2684, %v2685
    %v2687 = vrot.slane %v2686, 4
    %v2688 = vadd.f32 %v2686, %v2687
    %v2689 = vrot.slane %v2688, 2
    %v2690 = vadd.f32 %v2688, %v2689
    %v2691 = vrot.slane %v2690, 1
    %v2692 = vadd.f32 %v2690, %v2691
    %v2693 = vsel %vm285, %v2566, 0.0
    %v2694 = vsel %vm285, %v2567, 0.0
    %v2695 = vadd.f32 %v2693, %v2694
    %v2696 = vsel %vm285, %v2568, 0.0
    %v2697 = vadd.f32 %v2695, %v2696
    %v2698 = vsel %vm285, %v2569, 0.0
    %v2699 = vadd.f32 %v2697, %v2698
    %v2700 = vrot.slane %v2699, 4
    %v2701 = vadd.f32 %v2699, %v2700
    %v2702 = vrot.slane %v2701, 2
    %v2703 = vadd.f32 %v2701, %v2702
    %v2704 = vrot.slane %v2703, 1
    %v2705 = vadd.f32 %v2703, %v2704
    %v2706 = vsel %vm285, %v2570, 0.0
    %v2707 = vsel %vm285, %v2571, 0.0
    %v2708 = vadd.f32 %v2706, %v2707
    %v2709 = vsel %vm285, %v2572, 0.0
    %v2710 = vadd.f32 %v2708, %v2709
    %v2711 = vsel %vm285, %v2573, 0.0
    %v2712 = vadd.f32 %v2710, %v2711
    %v2713 = vrot.slane %v2712, 4
    %v2714 = vadd.f32 %v2712, %v2713
    %v2715 = vrot.slane %v2714, 2
    %v2716 = vadd.f32 %v2714, %v2715
    %v2717 = vrot.slane %v2716, 1
    %v2718 = vadd.f32 %v2716, %v2717
    %v2719 = vsel %vm285, %v2574, 0.0
    %v2720 = vsel %vm285, %v2575, 0.0
    %v2721 = vadd.f32 %v2719, %v2720
    %v2722 = vsel %vm285, %v2576, 0.0
    %v2723 = vadd.f32 %v2721, %v2722
    %v2724 = vsel %vm285, %v2577, 0.0
    %v2725 = vadd.f32 %v2723, %v2724
    %v2726 = vrot.slane %v2725, 4
    %v2727 = vadd.f32 %v2725, %v2726
    %v2728 = vrot.slane %v2727, 2
    %v2729 = vadd.f32 %v2727, %v2728
    %v2730 = vrot.slane %v2729, 1
    %v2731 = vadd.f32 %v2729, %v2730
    %v2732 = vsel %vm285, %v2578, 0.0
    %v2733 = vsel %vm285, %v2579, 0.0
    %v2734 = vadd.f32 %v2732, %v2733
    %v2735 = vsel %vm285, %v2580, 0.0
    %v2736 = vadd.f32 %v2734, %v2735
    %v2737 = vsel %vm285, %v2581, 0.0
    %v2738 = vadd.f32 %v2736, %v2737
    %v2739 = vrot.slane %v2738, 4
    %v2740 = vadd.f32 %v2738, %v2739
    %v2741 = vrot.slane %v2740, 2
    %v2742 = vadd.f32 %v2740, %v2741
    %v2743 = vrot.slane %v2742, 1
    %v2744 = vadd.f32 %v2742, %v2743
    %v2745 = vsel %vm285, %v2582, 0.0
    %v2746 = vsel %vm285, %v2583, 0.0
    %v2747 = vadd.f32 %v2745, %v2746
    %v2748 = vsel %vm285, %v2584, 0.0
    %v2749 = vadd.f32 %v2747, %v2748
    %v2750 = vsel %vm285, %v2585, 0.0
    %v2751 = vadd.f32 %v2749, %v2750
    %v2752 = vrot.slane %v2751, 4
    %v2753 = vadd.f32 %v2751, %v2752
    %v2754 = vrot.slane %v2753, 2
    %v2755 = vadd.f32 %v2753, %v2754
    %v2756 = vrot.slane %v2755, 1
    %v2757 = vadd.f32 %v2755, %v2756
    %v2758 = vsel %vm285, %v2586, 0.0
    %v2759 = vsel %vm285, %v2587, 0.0
    %v2760 = vadd.f32 %v2758, %v2759
    %v2761 = vsel %vm285, %v2588, 0.0
    %v2762 = vadd.f32 %v2760, %v2761
    %v2763 = vsel %vm285, %v2589, 0.0
    %v2764 = vadd.f32 %v2762, %v2763
    %v2765 = vrot.slane %v2764, 4
    %v2766 = vadd.f32 %v2764, %v2765
    %v2767 = vrot.slane %v2766, 2
    %v2768 = vadd.f32 %v2766, %v2767
    %v2769 = vrot.slane %v2768, 1
    %v2770 = vadd.f32 %v2768, %v2769
    %v2771 = vsel %vm285, %v2590, 0.0
    %v2772 = vsel %vm285, %v2591, 0.0
    %v2773 = vadd.f32 %v2771, %v2772
    %v2774 = vsel %vm285, %v2592, 0.0
    %v2775 = vadd.f32 %v2773, %v2774
    %v2776 = vsel %vm285, %v2593, 0.0
    %v2777 = vadd.f32 %v2775, %v2776
    %v2778 = vrot.slane %v2777, 4
    %v2779 = vadd.f32 %v2777, %v2778
    %v2780 = vrot.slane %v2779, 2
    %v2781 = vadd.f32 %v2779, %v2780
    %v2782 = vrot.slane %v2781, 1
    %v2783 = vadd.f32 %v2781, %v2782
    %v2784 = vsel %vm285, %v2594, 0.0
    %v2785 = vsel %vm285, %v2595, 0.0
    %v2786 = vadd.f32 %v2784, %v2785
    %v2787 = vsel %vm285, %v2596, 0.0
    %v2788 = vadd.f32 %v2786, %v2787
    %v2789 = vsel %vm285, %v2597, 0.0
    %v2790 = vadd.f32 %v2788, %v2789
    %v2791 = vrot.slane %v2790, 4
    %v2792 = vadd.f32 %v2790, %v2791
    %v2793 = vrot.slane %v2792, 2
    %v2794 = vadd.f32 %v2792, %v2793
    %v2795 = vrot.slane %v2794, 1
    %v2796 = vadd.f32 %v2794, %v2795
    %v2797 = vsel %vm285, %v2598, 0.0
    %v2798 = vsel %vm285, %v2599, 0.0
    %v2799 = vadd.f32 %v2797, %v2798
    %v2800 = vsel %vm285, %v2600, 0.0
    %v2801 = vadd.f32 %v2799, %v2800
    %v2802 = vsel %vm285, %v2601, 0.0
    %v2803 = vadd.f32 %v2801, %v2802
    %v2804 = vrot.slane %v2803, 4
    %v2805 = vadd.f32 %v2803, %v2804
    %v2806 = vrot.slane %v2805, 2
    %v2807 = vadd.f32 %v2805, %v2806
    %v2808 = vrot.slane %v2807, 1
    %v2809 = vadd.f32 %v2807, %v2808
    %v2826 = vsel %vm2179, %v2627, %v2614
    %v2827 = vsel %vm2181, %v2640, %v2826
    %v2828 = vsel %vm2183, %v2653, %v2827
    %v2829 = vsel %vm2185, %v2666, %v2828
    %v2830 = vsel %vm2187, %v2679, %v2829
    %v2831 = vsel %vm2189, %v2692, %v2830
    %v2832 = vsel %vm2191, %v2705, %v2831
    %v2833 = vsel %vm2179, %v2731, %v2718
    %v2834 = vsel %vm2181, %v2744, %v2833
    %v2835 = vsel %vm2183, %v2757, %v2834
    %v2836 = vsel %vm2185, %v2770, %v2835
    %v2837 = vsel %vm2187, %v2783, %v2836
    %v2838 = vsel %vm2189, %v2796, %v2837
    %v2839 = vsel %vm2191, %v2809, %v2838
    %v2840 = vsel %vm285, %v2832, 0
    %v2842 = vsel %vm285, %v2839, 0
    %2844 = vmatprep.subr.mxu0 0.0
    %2845 = vmatpush1.msra.mxu0 %v2152
    %2846 = vmatprep.subr.mxu0 0.0
    %2847 = vmatpush1.msra.mxu0 %v2153
    %2848 = vmatprep.subr.mxu0 0.0
    %2849 = vmatpush1.msra.mxu0 %v2154
    %2850 = vmatprep.subr.mxu0 0.0
    %2851 = vmatpush1.msra.mxu0 %v2155
    %2852 = vmatprep.subr.mxu0 0.0
    %2853 = vmatpush1.msra.mxu0 0.0
    %2854 = vmatprep.subr.mxu0 0.0
    %2855 = vmatpush1.msra.mxu0 0.0
    %2856 = vmatprep.subr.mxu0 0.0
    %2857 = vmatpush1.msra.mxu0 0.0
    %2858 = vmatprep.subr.mxu0 0.0
    %2859 = vmatpush1.msra.mxu0 0.0
    %2860 = vmatprep.subr.mxu0 0.0
    %2861 = vmatpush1.msra.mxu0 0.0
    %2862 = vmatprep.subr.mxu0 0.0
    %2863 = vmatpush1.msra.mxu0 0.0
    %2864 = vmatprep.subr.mxu0 0.0
    %2865 = vmatpush1.msra.mxu0 0.0
    %2866 = vmatprep.subr.mxu0 0.0
    %2867 = vmatpush1.msra.mxu0 0.0
    %2868 = vmatprep.subr.mxu0 0.0
    %2869 = vmatpush1.msra.mxu0 0.0
    %2870 = vmatprep.subr.mxu0 0.0
    %2871 = vmatpush1.msra.mxu0 0.0
    %2872 = vmatprep.subr.mxu0 0.0
    %2873 = vmatpush1.msra.mxu0 0.0
    %2874 = vmatprep.subr.mxu0 0.0
    %2875 = vmatpush1.msra.mxu0 0.0
    %2876 = vmatprep.subr.mxu0 0.0
    %2877 = vmatpush1.msra.mxu0 0.0
    %2878 = vmatprep.subr.mxu0 0.0
    %2879 = vmatpush1.msra.mxu0 0.0
    %2880 = vmatprep.subr.mxu0 0.0
    %2881 = vmatpush1.msra.mxu0 0.0
    %2882 = vmatprep.subr.mxu0 0.0
    %2883 = vmatpush1.msra.mxu0 0.0
    %2884 = vmatprep.subr.mxu0 0.0
    %2885 = vmatpush1.msra.mxu0 0.0
    %2886 = vmatprep.subr.mxu0 0.0
    %2887 = vmatpush1.msra.mxu0 0.0
    %2888 = vmatprep.subr.mxu0 0.0
    %2889 = vmatpush1.msra.mxu0 0.0
    %2890 = vmatprep.subr.mxu0 0.0
    %2891 = vmatpush1.msra.mxu0 0.0
    %2892 = vmatprep.subr.mxu0 0.0
    %2893 = vmatpush1.msra.mxu0 0.0
    %2894 = vmatprep.subr.mxu0 0.0
    %2895 = vmatpush1.msra.mxu0 0.0
    %2896 = vmatprep.subr.mxu0 0.0
    %2897 = vmatpush1.msra.mxu0 0.0
    %2898 = vmatprep.subr.mxu0 0.0
    %2899 = vmatpush1.msra.mxu0 0.0
    %2900 = vmatprep.subr.mxu0 0.0
    %2901 = vmatpush1.msra.mxu0 0.0
    %2902 = vmatprep.subr.mxu0 0.0
    %2903 = vmatpush1.msra.mxu0 0.0
    %2904 = vmatprep.subr.mxu0 0.0
    %2905 = vmatpush1.msra.mxu0 0.0
    %2906 = vmatprep.subr.mxu0 0.0
    %2907 = vmatpush1.msra.mxu0 0.0
    %2908 = vmatprep.mubr.f32.mxu0 0.0
    %2909 = vmatmul.mubr.f32.gmra.mrb[0].mxu0 %v2840
    %v2910 = vpop.f32.mrb[0].mxu0
    %v2911 = vadd.f32 %v2161, %v2910
    %v2912 = vpop.f32.mrb[0].mxu0
    %2913 = vmatprep.mubr.f32.mxu0 0.0
    %2914 = vmatmul.mubr.f32.gmra.mrb[0].mxu0 %v2842
    %v2915 = vpop.f32.mrb[0].mxu0
    %v2916 = vadd.f32 %v2161, %v2915
    %v2917 = vpop.f32.mrb[0].mxu0
    %2918 = vdwg.mxu0
    %v2919 = vmax.f32 %v2911, 0.0
    %v2920 = vmax.f32 %v2916, 0.0
    %s2921 = scalar_lea.vmem %s6, 8
    %v2922 = vld [vmem:[%s2921] sm:$0xff]
    %vm2923 = vcmask 64512
    %v2925 = vsel %vm2923, %v2919, 0
    %v2928 = vsel %vm2923, %v2920, 0
    %2930 = vmatprep.subr.mxu0 0.0
    %2931 = vmatpush1.msra.mxu0 %v2922
    %2932 = vmatprep.subr.mxu0 0.0
    %2933 = vmatpush1.msra.mxu0 0.0
    %2934 = vmatprep.subr.mxu0 0.0
    %2935 = vmatpush1.msra.mxu0 0.0
    %2936 = vmatprep.subr.mxu0 0.0
    %2937 = vmatpush1.msra.mxu0 0.0
    %2938 = vmatprep.subr.mxu0 0.0
    %2939 = vmatpush1.msra.mxu0 0.0
    %2940 = vmatprep.subr.mxu0 0.0
    %2941 = vmatpush1.msra.mxu0 0.0
    %2942 = vmatprep.subr.mxu0 0.0
    %2943 = vmatpush1.msra.mxu0 0.0
    %2944 = vmatprep.subr.mxu0 0.0
    %2945 = vmatpush1.msra.mxu0 0.0
    %2946 = vmatprep.subr.mxu0 0.0
    %2947 = vmatpush1.msra.mxu0 0.0
    %2948 = vmatprep.subr.mxu0 0.0
    %2949 = vmatpush1.msra.mxu0 0.0
    %2950 = vmatprep.subr.mxu0 0.0
    %2951 = vmatpush1.msra.mxu0 0.0
    %2952 = vmatprep.subr.mxu0 0.0
    %2953 = vmatpush1.msra.mxu0 0.0
    %2954 = vmatprep.subr.mxu0 0.0
    %2955 = vmatpush1.msra.mxu0 0.0
    %2956 = vmatprep.subr.mxu0 0.0
    %2957 = vmatpush1.msra.mxu0 0.0
    %2958 = vmatprep.subr.mxu0 0.0
    %2959 = vmatpush1.msra.mxu0 0.0
    %2960 = vmatprep.subr.mxu0 0.0
    %2961 = vmatpush1.msra.mxu0 0.0
    %2962 = vmatprep.subr.mxu0 0.0
    %2963 = vmatpush1.msra.mxu0 0.0
    %2964 = vmatprep.subr.mxu0 0.0
    %2965 = vmatpush1.msra.mxu0 0.0
    %2966 = vmatprep.subr.mxu0 0.0
    %2967 = vmatpush1.msra.mxu0 0.0
    %2968 = vmatprep.subr.mxu0 0.0
    %2969 = vmatpush1.msra.mxu0 0.0
    %2970 = vmatprep.subr.mxu0 0.0
    %2971 = vmatpush1.msra.mxu0 0.0
    %2972 = vmatprep.subr.mxu0 0.0
    %2973 = vmatpush1.msra.mxu0 0.0
    %2974 = vmatprep.subr.mxu0 0.0
    %2975 = vmatpush1.msra.mxu0 0.0
    %2976 = vmatprep.subr.mxu0 0.0
    %2977 = vmatpush1.msra.mxu0 0.0
    %2978 = vmatprep.subr.mxu0 0.0
    %2979 = vmatpush1.msra.mxu0 0.0
    %2980 = vmatprep.subr.mxu0 0.0
    %2981 = vmatpush1.msra.mxu0 0.0
    %2982 = vmatprep.subr.mxu0 0.0
    %2983 = vmatpush1.msra.mxu0 0.0
    %2984 = vmatprep.subr.mxu0 0.0
    %2985 = vmatpush1.msra.mxu0 0.0
    %2986 = vmatprep.subr.mxu0 0.0
    %2987 = vmatpush1.msra.mxu0 0.0
    %2988 = vmatprep.subr.mxu0 0.0
    %2989 = vmatpush1.msra.mxu0 0.0
    %2990 = vmatprep.subr.mxu0 0.0
    %2991 = vmatpush1.msra.mxu0 0.0
    %2992 = vmatprep.subr.mxu0 0.0
    %2993 = vmatpush1.msra.mxu0 0.0
    %2994 = vmatprep.mubr.f32.mxu0 0.0
    %2995 = vmatmul.mubr.f32.gmra.mrb[0].mxu0 %v2925
    %v2996 = vpop.f32.mrb[0].mxu0
    %v2997 = vadd.f32 0.0, %v2996
    %v2998 = vpop.f32.mrb[0].mxu0
    %2999 = vmatprep.mubr.f32.mxu0 0.0
    %3000 = vmatmul.mubr.f32.gmra.mrb[0].mxu0 %v2928
    %v3001 = vpop.f32.mrb[0].mxu0
    %v3002 = vadd.f32 0.0, %v3001
    %v3003 = vpop.f32.mrb[0].mxu0
    %3004 = vdwg.mxu0
    %v3006 = vsel %vm2923, %v2279, 0
    %v3009 = vsel %vm2923, %v2280, 0
    %3011 = vmatprep.subr.mxu0 0.0
    %3012 = vmatpush1.msra.mxu0 %v2281
    %3013 = vmatprep.subr.mxu0 0.0
    %3014 = vmatpush1.msra.mxu0 0.0
    %3015 = vmatprep.subr.mxu0 0.0
    %3016 = vmatpush1.msra.mxu0 0.0
    %3017 = vmatprep.subr.mxu0 0.0
    %3018 = vmatpush1.msra.mxu0 0.0
    %3019 = vmatprep.subr.mxu0 0.0
    %3020 = vmatpush1.msra.mxu0 0.0
    %3021 = vmatprep.subr.mxu0 0.0
    %3022 = vmatpush1.msra.mxu0 0.0
    %3023 = vmatprep.subr.mxu0 0.0
    %3024 = vmatpush1.msra.mxu0 0.0
    %3025 = vmatprep.subr.mxu0 0.0
    %3026 = vmatpush1.msra.mxu0 0.0
    %3027 = vmatprep.subr.mxu0 0.0
    %3028 = vmatpush1.msra.mxu0 0.0
    %3029 = vmatprep.subr.mxu0 0.0
    %3030 = vmatpush1.msra.mxu0 0.0
    %3031 = vmatprep.subr.mxu0 0.0
    %3032 = vmatpush1.msra.mxu0 0.0
    %3033 = vmatprep.subr.mxu0 0.0
    %3034 = vmatpush1.msra.mxu0 0.0
    %3035 = vmatprep.subr.mxu0 0.0
    %3036 = vmatpush1.msra.mxu0 0.0
    %3037 = vmatprep.subr.mxu0 0.0
    %3038 = vmatpush1.msra.mxu0 0.0
    %3039 = vmatprep.subr.mxu0 0.0
    %3040 = vmatpush1.msra.mxu0 0.0
    %3041 = vmatprep.subr.mxu0 0.0
    %3042 = vmatpush1.msra.mxu0 0.0
    %3043 = vmatprep.subr.mxu0 0.0
    %3044 = vmatpush1.msra.mxu0 0.0
    %3045 = vmatprep.subr.mxu0 0.0
    %3046 = vmatpush1.msra.mxu0 0.0
    %3047 = vmatprep.subr.mxu0 0.0
    %3048 = vmatpush1.msra.mxu0 0.0
    %3049 = vmatprep.subr.mxu0 0.0
    %3050 = vmatpush1.msra.mxu0 0.0
    %3051 = vmatprep.subr.mxu0 0.0
    %3052 = vmatpush1.msra.mxu0 0.0
    %3053 = vmatprep.subr.mxu0 0.0
    %3054 = vmatpush1.msra.mxu0 0.0
    %3055 = vmatprep.subr.mxu0 0.0
    %3056 = vmatpush1.msra.mxu0 0.0
    %3057 = vmatprep.subr.mxu0 0.0
    %3058 = vmatpush1.msra.mxu0 0.0
    %3059 = vmatprep.subr.mxu0 0.0
    %3060 = vmatpush1.msra.mxu0 0.0
    %3061 = vmatprep.subr.mxu0 0.0
    %3062 = vmatpush1.msra.mxu0 0.0
    %3063 = vmatprep.subr.mxu0 0.0
    %3064 = vmatpush1.msra.mxu0 0.0
    %3065 = vmatprep.subr.mxu0 0.0
    %3066 = vmatpush1.msra.mxu0 0.0
    %3067 = vmatprep.subr.mxu0 0.0
    %3068 = vmatpush1.msra.mxu0 0.0
    %3069 = vmatprep.subr.mxu0 0.0
    %3070 = vmatpush1.msra.mxu0 0.0
    %3071 = vmatprep.subr.mxu0 0.0
    %3072 = vmatpush1.msra.mxu0 0.0
    %3073 = vmatprep.subr.mxu0 0.0
    %3074 = vmatpush1.msra.mxu0 0.0
    %3075 = vmatprep.mubr.f32.mxu0 0.0
    %3076 = vmatmul.mubr.f32.gmra.mrb[0].mxu0 %v3006
    %v3077 = vpop.f32.mrb[0].mxu0
    %v3078 = vadd.f32 %v2997, %v3077
    %v3079 = vpop.f32.mrb[0].mxu0
    %3080 = vmatprep.mubr.f32.mxu0 0.0
    %3081 = vmatmul.mubr.f32.gmra.mrb[0].mxu0 %v3009
    %v3082 = vpop.f32.mrb[0].mxu0
    %v3083 = vadd.f32 %v3002, %v3082
    %v3084 = vpop.f32.mrb[0].mxu0
    %3085 = vdwg.mxu0
    %3086 = vset.pattern.permute.xlu0 2
    %3087 = vperm.xlu0 %3086, %v1364
    %v3088 = vpop.permute.xlu0 %3087
    %3090 = vset.pattern.permute.xlu0 2
    %3091 = vperm.xlu0 %3090, %v1365
    %v3092 = vpop.permute.xlu0 %3091
    %3094 = vset.pattern.permute.xlu0 2
    %3095 = vperm.xlu0 %3094, %v1366
    %v3096 = vpop.permute.xlu0 %3095
    %3098 = vset.pattern.permute.xlu0 2
    %3099 = vperm.xlu0 %3098, %v1367
    %v3100 = vpop.permute.xlu0 %3099
    %3102 = vset.pattern.permute.xlu0 2
    %3103 = vperm.xlu0 %3102, %v1368
    %v3104 = vpop.permute.xlu0 %3103
    %3106 = vset.pattern.permute.xlu0 2
    %3107 = vperm.xlu0 %3106, %v1369
    %v3108 = vpop.permute.xlu0 %3107
    %3110 = vset.pattern.permute.xlu0 2
    %3111 = vperm.xlu0 %3110, %v1370
    %v3112 = vpop.permute.xlu0 %3111
    %3114 = vset.pattern.permute.xlu0 2
    %3115 = vperm.xlu0 %3114, %v1371
    %v3116 = vpop.permute.xlu0 %3115
    %3118 = vset.pattern.permute.xlu0 2
    %3119 = vperm.xlu0 %3118, %v1372
    %v3120 = vpop.permute.xlu0 %3119
    %3122 = vset.pattern.permute.xlu0 2
    %3123 = vperm.xlu0 %3122, %v1373
    %v3124 = vpop.permute.xlu0 %3123
    %3126 = vset.pattern.permute.xlu0 2
    %3127 = vperm.xlu0 %3126, %v1374
    %v3128 = vpop.permute.xlu0 %3127
    %3130 = vset.pattern.permute.xlu0 2
    %3131 = vperm.xlu0 %3130, %v1375
    %v3132 = vpop.permute.xlu0 %3131
    %3134 = vset.pattern.permute.xlu0 2
    %3135 = vperm.xlu0 %3134, %v1376
    %v3136 = vpop.permute.xlu0 %3135
    %3138 = vset.pattern.permute.xlu0 2
    %3139 = vperm.xlu0 %3138, %v1377
    %v3140 = vpop.permute.xlu0 %3139
    %3142 = vset.pattern.permute.xlu0 2
    %3143 = vperm.xlu0 %3142, %v1378
    %v3144 = vpop.permute.xlu0 %3143
    %3146 = vset.pattern.permute.xlu0 2
    %3147 = vperm.xlu0 %3146, %v1379
    %v3148 = vpop.permute.xlu0 %3147
    %3150 = vset.pattern.permute.xlu0 2
    %3151 = vperm.xlu0 %3150, %v1380
    %v3152 = vpop.permute.xlu0 %3151
    %3154 = vset.pattern.permute.xlu0 2
    %3155 = vperm.xlu0 %3154, %v1381
    %v3156 = vpop.permute.xlu0 %3155
    %3158 = vset.pattern.permute.xlu0 2
    %3159 = vperm.xlu0 %3158, %v1382
    %v3160 = vpop.permute.xlu0 %3159
    %3162 = vset.pattern.permute.xlu0 2
    %3163 = vperm.xlu0 %3162, %v1383
    %v3164 = vpop.permute.xlu0 %3163
    %3166 = vset.pattern.permute.xlu0 2
    %3167 = vperm.xlu0 %3166, %v1384
    %v3168 = vpop.permute.xlu0 %3167
    %3170 = vset.pattern.permute.xlu0 2
    %3171 = vperm.xlu0 %3170, %v1385
    %v3172 = vpop.permute.xlu0 %3171
    %3174 = vset.pattern.permute.xlu0 2
    %3175 = vperm.xlu0 %3174, %v1386
    %v3176 = vpop.permute.xlu0 %3175
    %3178 = vset.pattern.permute.xlu0 2
    %3179 = vperm.xlu0 %3178, %v1387
    %v3180 = vpop.permute.xlu0 %3179
    %3182 = vset.pattern.permute.xlu0 2
    %3183 = vperm.xlu0 %3182, %v1388
    %v3184 = vpop.permute.xlu0 %3183
    %3186 = vset.pattern.permute.xlu0 2
    %3187 = vperm.xlu0 %3186, %v1389
    %v3188 = vpop.permute.xlu0 %3187
    %3190 = vset.pattern.permute.xlu0 2
    %3191 = vperm.xlu0 %3190, %v1390
    %v3192 = vpop.permute.xlu0 %3191
    %3194 = vset.pattern.permute.xlu0 2
    %3195 = vperm.xlu0 %3194, %v1391
    %v3196 = vpop.permute.xlu0 %3195
    %3198 = vset.pattern.permute.xlu0 2
    %3199 = vperm.xlu0 %3198, %v1392
    %v3200 = vpop.permute.xlu0 %3199
    %3202 = vset.pattern.permute.xlu0 2
    %3203 = vperm.xlu0 %3202, %v1393
    %v3204 = vpop.permute.xlu0 %3203
    %3206 = vset.pattern.permute.xlu0 2
    %3207 = vperm.xlu0 %3206, %v1394
    %v3208 = vpop.permute.xlu0 %3207
    %3210 = vset.pattern.permute.xlu0 2
    %3211 = vperm.xlu0 %3210, %v1395
    %v3212 = vpop.permute.xlu0 %3211
    %3214 = vset.pattern.permute.xlu0 2
    %3215 = vperm.xlu0 %3214, %v1396
    %v3216 = vpop.permute.xlu0 %3215
    %3218 = vset.pattern.permute.xlu0 2
    %3219 = vperm.xlu0 %3218, %v1397
    %v3220 = vpop.permute.xlu0 %3219
    %3222 = vset.pattern.permute.xlu0 2
    %3223 = vperm.xlu0 %3222, %v1398
    %v3224 = vpop.permute.xlu0 %3223
    %3226 = vset.pattern.permute.xlu0 2
    %3227 = vperm.xlu0 %3226, %v1399
    %v3228 = vpop.permute.xlu0 %3227
    %3230 = vset.pattern.permute.xlu0 2
    %3231 = vperm.xlu0 %3230, %v1400
    %v3232 = vpop.permute.xlu0 %3231
    %3234 = vset.pattern.permute.xlu0 2
    %3235 = vperm.xlu0 %3234, %v1401
    %v3236 = vpop.permute.xlu0 %3235
    %3238 = vset.pattern.permute.xlu0 2
    %3239 = vperm.xlu0 %3238, %v1402
    %v3240 = vpop.permute.xlu0 %3239
    %3242 = vset.pattern.permute.xlu0 2
    %3243 = vperm.xlu0 %3242, %v1403
    %v3244 = vpop.permute.xlu0 %3243
    %3246 = vset.pattern.permute.xlu0 2
    %3247 = vperm.xlu0 %3246, %v1404
    %v3248 = vpop.permute.xlu0 %3247
    %3250 = vset.pattern.permute.xlu0 2
    %3251 = vperm.xlu0 %3250, %v1405
    %v3252 = vpop.permute.xlu0 %3251
    %3254 = vset.pattern.permute.xlu0 2
    %3255 = vperm.xlu0 %3254, %v1406
    %v3256 = vpop.permute.xlu0 %3255
    %3258 = vset.pattern.permute.xlu0 2
    %3259 = vperm.xlu0 %3258, %v1407
    %v3260 = vpop.permute.xlu0 %3259
    %3262 = vset.pattern.permute.xlu0 2
    %3263 = vperm.xlu0 %3262, %v1408
    %v3264 = vpop.permute.xlu0 %3263
    %3266 = vset.pattern.permute.xlu0 2
    %3267 = vperm.xlu0 %3266, %v1409
    %v3268 = vpop.permute.xlu0 %3267
    %3270 = vset.pattern.permute.xlu0 2
    %3271 = vperm.xlu0 %3270, %v1410
    %v3272 = vpop.permute.xlu0 %3271
    %3274 = vset.pattern.permute.xlu0 2
    %3275 = vperm.xlu0 %3274, %v1411
    %v3276 = vpop.permute.xlu0 %3275
    %3278 = vset.pattern.permute.xlu0 2
    %3279 = vperm.xlu0 %3278, %v1412
    %v3280 = vpop.permute.xlu0 %3279
    %3282 = vset.pattern.permute.xlu0 2
    %3283 = vperm.xlu0 %3282, %v1413
    %v3284 = vpop.permute.xlu0 %3283
    %3286 = vset.pattern.permute.xlu0 2
    %3287 = vperm.xlu0 %3286, %v1414
    %v3288 = vpop.permute.xlu0 %3287
    %3290 = vset.pattern.permute.xlu0 2
    %3291 = vperm.xlu0 %3290, %v1415
    %v3292 = vpop.permute.xlu0 %3291
    %3294 = vset.pattern.permute.xlu0 2
    %3295 = vperm.xlu0 %3294, %v1416
    %v3296 = vpop.permute.xlu0 %3295
    %3298 = vset.pattern.permute.xlu0 2
    %3299 = vperm.xlu0 %3298, %v1417
    %v3300 = vpop.permute.xlu0 %3299
    %3302 = vset.pattern.permute.xlu0 2
    %3303 = vperm.xlu0 %3302, %v1418
    %v3304 = vpop.permute.xlu0 %3303
    %3306 = vset.pattern.permute.xlu0 2
    %3307 = vperm.xlu0 %3306, %v1419
    %v3308 = vpop.permute.xlu0 %3307
    %3310 = vset.pattern.permute.xlu0 2
    %3311 = vperm.xlu0 %3310, %v1420
    %v3312 = vpop.permute.xlu0 %3311
    %3314 = vset.pattern.permute.xlu0 2
    %3315 = vperm.xlu0 %3314, %v1421
    %v3316 = vpop.permute.xlu0 %3315
    %3318 = vset.pattern.permute.xlu0 2
    %3319 = vperm.xlu0 %3318, %v1422
    %v3320 = vpop.permute.xlu0 %3319
    %3322 = vset.pattern.permute.xlu0 2
    %3323 = vperm.xlu0 %3322, %v1423
    %v3324 = vpop.permute.xlu0 %3323
    %3326 = vset.pattern.permute.xlu0 2
    %3327 = vperm.xlu0 %3326, %v1424
    %v3328 = vpop.permute.xlu0 %3327
    %3330 = vset.pattern.permute.xlu0 2
    %3331 = vperm.xlu0 %3330, %v1425
    %v3332 = vpop.permute.xlu0 %3331
    %3334 = vset.pattern.permute.xlu0 2
    %3335 = vperm.xlu0 %3334, %v1426
    %v3336 = vpop.permute.xlu0 %3335
    %3338 = vset.pattern.permute.xlu0 2
    %3339 = vperm.xlu0 %3338, %v1427
    %v3340 = vpop.permute.xlu0 %3339
    %v3342 = vmul.f32 %v1496, %v3088
    %v3343 = vmul.f32 %v1497, %v3092
    %v3344 = vmul.f32 %v1498, %v3096
    %v3345 = vmul.f32 %v1499, %v3100
    %v3346 = vmul.f32 %v1500, %v3104
    %v3347 = vmul.f32 %v1501, %v3108
    %v3348 = vmul.f32 %v1502, %v3112
    %v3349 = vmul.f32 %v1503, %v3116
    %v3350 = vmul.f32 %v1504, %v3120
    %v3351 = vmul.f32 %v1505, %v3124
    %v3352 = vmul.f32 %v1506, %v3128
    %v3353 = vmul.f32 %v1507, %v3132
    %v3354 = vmul.f32 %v1508, %v3136
    %v3355 = vmul.f32 %v1509, %v3140
    %v3356 = vmul.f32 %v1510, %v3144
    %v3357 = vmul.f32 %v1511, %v3148
    %v3358 = vmul.f32 %v1512, %v3152
    %v3359 = vmul.f32 %v1513, %v3156
    %v3360 = vmul.f32 %v1514, %v3160
    %v3361 = vmul.f32 %v1515, %v3164
    %v3362 = vmul.f32 %v1516, %v3168
    %v3363 = vmul.f32 %v1517, %v3172
    %v3364 = vmul.f32 %v1518, %v3176
    %v3365 = vmul.f32 %v1519, %v3180
    %v3366 = vmul.f32 %v1520, %v3184
    %v3367 = vmul.f32 %v1521, %v3188
    %v3368 = vmul.f32 %v1522, %v3192
    %v3369 = vmul.f32 %v1523, %v3196
    %v3370 = vmul.f32 %v1524, %v3200
    %v3371 = vmul.f32 %v1525, %v3204
    %v3372 = vmul.f32 %v1526, %v3208
    %v3373 = vmul.f32 %v1527, %v3212
    %v3374 = vmul.f32 %v1528, %v3216
    %v3375 = vmul.f32 %v1529, %v3220
    %v3376 = vmul.f32 %v1530, %v3224
    %v3377 = vmul.f32 %v1531, %v3228
    %v3378 = vmul.f32 %v1532, %v3232
    %v3379 = vmul.f32 %v1533, %v3236
    %v3380 = vmul.f32 %v1534, %v3240
    %v3381 = vmul.f32 %v1535, %v3244
    %v3382 = vmul.f32 %v1536, %v3248
    %v3383 = vmul.f32 %v1537, %v3252
    %v3384 = vmul.f32 %v1538, %v3256
    %v3385 = vmul.f32 %v1539, %v3260
    %v3386 = vmul.f32 %v1540, %v3264
    %v3387 = vmul.f32 %v1541, %v3268
    %v3388 = vmul.f32 %v1542, %v3272
    %v3389 = vmul.f32 %v1543, %v3276
    %v3390 = vmul.f32 %v1544, %v3280
    %v3391 = vmul.f32 %v1545, %v3284
    %v3392 = vmul.f32 %v1546, %v3288
    %v3393 = vmul.f32 %v1547, %v3292
    %v3394 = vmul.f32 %v1548, %v3296
    %v3395 = vmul.f32 %v1549, %v3300
    %v3396 = vmul.f32 %v1550, %v3304
    %v3397 = vmul.f32 %v1551, %v3308
    %v3398 = vmul.f32 %v1552, %v3312
    %v3399 = vmul.f32 %v1553, %v3316
    %v3400 = vmul.f32 %v1554, %v3320
    %v3401 = vmul.f32 %v1555, %v3324
    %v3402 = vmul.f32 %v1556, %v3328
    %v3403 = vmul.f32 %v1557, %v3332
    %v3404 = vmul.f32 %v1558, %v3336
    %v3405 = vmul.f32 %v1559, %v3340
    %v3406 = vsel %vm285, %v3342, 0.0
    %v3407 = vsel %vm285, %v3343, 0.0
    %v3408 = vadd.f32 %v3406, %v3407
    %v3409 = vsel %vm285, %v3344, 0.0
    %v3410 = vadd.f32 %v3408, %v3409
    %v3411 = vsel %vm285, %v3345, 0.0
    %v3412 = vadd.f32 %v3410, %v3411
    %v3413 = vrot.slane %v3412, 4
    %v3414 = vadd.f32 %v3412, %v3413
    %v3415 = vrot.slane %v3414, 2
    %v3416 = vadd.f32 %v3414, %v3415
    %v3417 = vrot.slane %v3416, 1
    %v3418 = vadd.f32 %v3416, %v3417
    %v3419 = vsel %vm285, %v3346, 0.0
    %v3420 = vsel %vm285, %v3347, 0.0
    %v3421 = vadd.f32 %v3419, %v3420
    %v3422 = vsel %vm285, %v3348, 0.0
    %v3423 = vadd.f32 %v3421, %v3422
    %v3424 = vsel %vm285, %v3349, 0.0
    %v3425 = vadd.f32 %v3423, %v3424
    %v3426 = vrot.slane %v3425, 4
    %v3427 = vadd.f32 %v3425, %v3426
    %v3428 = vrot.slane %v3427, 2
    %v3429 = vadd.f32 %v3427, %v3428
    %v3430 = vrot.slane %v3429, 1
    %v3431 = vadd.f32 %v3429, %v3430
    %v3432 = vsel %vm285, %v3350, 0.0
    %v3433 = vsel %vm285, %v3351, 0.0
    %v3434 = vadd.f32 %v3432, %v3433
    %v3435 = vsel %vm285, %v3352, 0.0
    %v3436 = vadd.f32 %v3434, %v3435
    %v3437 = vsel %vm285, %v3353, 0.0
    %v3438 = vadd.f32 %v3436, %v3437
    %v3439 = vrot.slane %v3438, 4
    %v3440 = vadd.f32 %v3438, %v3439
    %v3441 = vrot.slane %v3440, 2
    %v3442 = vadd.f32 %v3440, %v3441
    %v3443 = vrot.slane %v3442, 1
    %v3444 = vadd.f32 %v3442, %v3443
    %v3445 = vsel %vm285, %v3354, 0.0
    %v3446 = vsel %vm285, %v3355, 0.0
    %v3447 = vadd.f32 %v3445, %v3446
    %v3448 = vsel %vm285, %v3356, 0.0
    %v3449 = vadd.f32 %v3447, %v3448
    %v3450 = vsel %vm285, %v3357, 0.0
    %v3451 = vadd.f32 %v3449, %v3450
    %v3452 = vrot.slane %v3451, 4
    %v3453 = vadd.f32 %v3451, %v3452
    %v3454 = vrot.slane %v3453, 2
    %v3455 = vadd.f32 %v3453, %v3454
    %v3456 = vrot.slane %v3455, 1
    %v3457 = vadd.f32 %v3455, %v3456
    %v3458 = vsel %vm285, %v3358, 0.0
    %v3459 = vsel %vm285, %v3359, 0.0
    %v3460 = vadd.f32 %v3458, %v3459
    %v3461 = vsel %vm285, %v3360, 0.0
    %v3462 = vadd.f32 %v3460, %v3461
    %v3463 = vsel %vm285, %v3361, 0.0
    %v3464 = vadd.f32 %v3462, %v3463
    %v3465 = vrot.slane %v3464, 4
    %v3466 = vadd.f32 %v3464, %v3465
    %v3467 = vrot.slane %v3466, 2
    %v3468 = vadd.f32 %v3466, %v3467
    %v3469 = vrot.slane %v3468, 1
    %v3470 = vadd.f32 %v3468, %v3469
    %v3471 = vsel %vm285, %v3362, 0.0
    %v3472 = vsel %vm285, %v3363, 0.0
    %v3473 = vadd.f32 %v3471, %v3472
    %v3474 = vsel %vm285, %v3364, 0.0
    %v3475 = vadd.f32 %v3473, %v3474
    %v3476 = vsel %vm285, %v3365, 0.0
    %v3477 = vadd.f32 %v3475, %v3476
    %v3478 = vrot.slane %v3477, 4
    %v3479 = vadd.f32 %v3477, %v3478
    %v3480 = vrot.slane %v3479, 2
    %v3481 = vadd.f32 %v3479, %v3480
    %v3482 = vrot.slane %v3481, 1
    %v3483 = vadd.f32 %v3481, %v3482
    %v3484 = vsel %vm285, %v3366, 0.0
    %v3485 = vsel %vm285, %v3367, 0.0
    %v3486 = vadd.f32 %v3484, %v3485
    %v3487 = vsel %vm285, %v3368, 0.0
    %v3488 = vadd.f32 %v3486, %v3487
    %v3489 = vsel %vm285, %v3369, 0.0
    %v3490 = vadd.f32 %v3488, %v3489
    %v3491 = vrot.slane %v3490, 4
    %v3492 = vadd.f32 %v3490, %v3491
    %v3493 = vrot.slane %v3492, 2
    %v3494 = vadd.f32 %v3492, %v3493
    %v3495 = vrot.slane %v3494, 1
    %v3496 = vadd.f32 %v3494, %v3495
    %v3497 = vsel %vm285, %v3370, 0.0
    %v3498 = vsel %vm285, %v3371, 0.0
    %v3499 = vadd.f32 %v3497, %v3498
    %v3500 = vsel %vm285, %v3372, 0.0
    %v3501 = vadd.f32 %v3499, %v3500
    %v3502 = vsel %vm285, %v3373, 0.0
    %v3503 = vadd.f32 %v3501, %v3502
    %v3504 = vrot.slane %v3503, 4
    %v3505 = vadd.f32 %v3503, %v3504
    %v3506 = vrot.slane %v3505, 2
    %v3507 = vadd.f32 %v3505, %v3506
    %v3508 = vrot.slane %v3507, 1
    %v3509 = vadd.f32 %v3507, %v3508
    %v3510 = vsel %vm285, %v3374, 0.0
    %v3511 = vsel %vm285, %v3375, 0.0
    %v3512 = vadd.f32 %v3510, %v3511
    %v3513 = vsel %vm285, %v3376, 0.0
    %v3514 = vadd.f32 %v3512, %v3513
    %v3515 = vsel %vm285, %v3377, 0.0
    %v3516 = vadd.f32 %v3514, %v3515
    %v3517 = vrot.slane %v3516, 4
    %v3518 = vadd.f32 %v3516, %v3517
    %v3519 = vrot.slane %v3518, 2
    %v3520 = vadd.f32 %v3518, %v3519
    %v3521 = vrot.slane %v3520, 1
    %v3522 = vadd.f32 %v3520, %v3521
    %v3523 = vsel %vm285, %v3378, 0.0
    %v3524 = vsel %vm285, %v3379, 0.0
    %v3525 = vadd.f32 %v3523, %v3524
    %v3526 = vsel %vm285, %v3380, 0.0
    %v3527 = vadd.f32 %v3525, %v3526
    %v3528 = vsel %vm285, %v3381, 0.0
    %v3529 = vadd.f32 %v3527, %v3528
    %v3530 = vrot.slane %v3529, 4
    %v3531 = vadd.f32 %v3529, %v3530
    %v3532 = vrot.slane %v3531, 2
    %v3533 = vadd.f32 %v3531, %v3532
    %v3534 = vrot.slane %v3533, 1
    %v3535 = vadd.f32 %v3533, %v3534
    %v3536 = vsel %vm285, %v3382, 0.0
    %v3537 = vsel %vm285, %v3383, 0.0
    %v3538 = vadd.f32 %v3536, %v3537
    %v3539 = vsel %vm285, %v3384, 0.0
    %v3540 = vadd.f32 %v3538, %v3539
    %v3541 = vsel %vm285, %v3385, 0.0
    %v3542 = vadd.f32 %v3540, %v3541
    %v3543 = vrot.slane %v3542, 4
    %v3544 = vadd.f32 %v3542, %v3543
    %v3545 = vrot.slane %v3544, 2
    %v3546 = vadd.f32 %v3544, %v3545
    %v3547 = vrot.slane %v3546, 1
    %v3548 = vadd.f32 %v3546, %v3547
    %v3549 = vsel %vm285, %v3386, 0.0
    %v3550 = vsel %vm285, %v3387, 0.0
    %v3551 = vadd.f32 %v3549, %v3550
    %v3552 = vsel %vm285, %v3388, 0.0
    %v3553 = vadd.f32 %v3551, %v3552
    %v3554 = vsel %vm285, %v3389, 0.0
    %v3555 = vadd.f32 %v3553, %v3554
    %v3556 = vrot.slane %v3555, 4
    %v3557 = vadd.f32 %v3555, %v3556
    %v3558 = vrot.slane %v3557, 2
    %v3559 = vadd.f32 %v3557, %v3558
    %v3560 = vrot.slane %v3559, 1
    %v3561 = vadd.f32 %v3559, %v3560
    %v3562 = vsel %vm285, %v3390, 0.0
    %v3563 = vsel %vm285, %v3391, 0.0
    %v3564 = vadd.f32 %v3562, %v3563
    %v3565 = vsel %vm285, %v3392, 0.0
    %v3566 = vadd.f32 %v3564, %v3565
    %v3567 = vsel %vm285, %v3393, 0.0
    %v3568 = vadd.f32 %v3566, %v3567
    %v3569 = vrot.slane %v3568, 4
    %v3570 = vadd.f32 %v3568, %v3569
    %v3571 = vrot.slane %v3570, 2
    %v3572 = vadd.f32 %v3570, %v3571
    %v3573 = vrot.slane %v3572, 1
    %v3574 = vadd.f32 %v3572, %v3573
    %v3575 = vsel %vm285, %v3394, 0.0
    %v3576 = vsel %vm285, %v3395, 0.0
    %v3577 = vadd.f32 %v3575, %v3576
    %v3578 = vsel %vm285, %v3396, 0.0
    %v3579 = vadd.f32 %v3577, %v3578
    %v3580 = vsel %vm285, %v3397, 0.0
    %v3581 = vadd.f32 %v3579, %v3580
    %v3582 = vrot.slane %v3581, 4
    %v3583 = vadd.f32 %v3581, %v3582
    %v3584 = vrot.slane %v3583, 2
    %v3585 = vadd.f32 %v3583, %v3584
    %v3586 = vrot.slane %v3585, 1
    %v3587 = vadd.f32 %v3585, %v3586
    %v3588 = vsel %vm285, %v3398, 0.0
    %v3589 = vsel %vm285, %v3399, 0.0
    %v3590 = vadd.f32 %v3588, %v3589
    %v3591 = vsel %vm285, %v3400, 0.0
    %v3592 = vadd.f32 %v3590, %v3591
    %v3593 = vsel %vm285, %v3401, 0.0
    %v3594 = vadd.f32 %v3592, %v3593
    %v3595 = vrot.slane %v3594, 4
    %v3596 = vadd.f32 %v3594, %v3595
    %v3597 = vrot.slane %v3596, 2
    %v3598 = vadd.f32 %v3596, %v3597
    %v3599 = vrot.slane %v3598, 1
    %v3600 = vadd.f32 %v3598, %v3599
    %v3601 = vsel %vm285, %v3402, 0.0
    %v3602 = vsel %vm285, %v3403, 0.0
    %v3603 = vadd.f32 %v3601, %v3602
    %v3604 = vsel %vm285, %v3404, 0.0
    %v3605 = vadd.f32 %v3603, %v3604
    %v3606 = vsel %vm285, %v3405, 0.0
    %v3607 = vadd.f32 %v3605, %v3606
    %v3608 = vrot.slane %v3607, 4
    %v3609 = vadd.f32 %v3607, %v3608
    %v3610 = vrot.slane %v3609, 2
    %v3611 = vadd.f32 %v3609, %v3610
    %v3612 = vrot.slane %v3611, 1
    %v3613 = vadd.f32 %v3611, %v3612
    %v3630 = vsel %vm2179, %v3431, %v3418
    %v3631 = vsel %vm2181, %v3444, %v3630
    %v3632 = vsel %vm2183, %v3457, %v3631
    %v3633 = vsel %vm2185, %v3470, %v3632
    %v3634 = vsel %vm2187, %v3483, %v3633
    %v3635 = vsel %vm2189, %v3496, %v3634
    %v3636 = vsel %vm2191, %v3509, %v3635
    %v3637 = vsel %vm2179, %v3535, %v3522
    %v3638 = vsel %vm2181, %v3548, %v3637
    %v3639 = vsel %vm2183, %v3561, %v3638
    %v3640 = vsel %vm2185, %v3574, %v3639
    %v3641 = vsel %vm2187, %v3587, %v3640
    %v3642 = vsel %vm2189, %v3600, %v3641
    %v3643 = vsel %vm2191, %v3613, %v3642
    %v3644 = vsel %vm285, %v3636, 0
    %v3646 = vsel %vm285, %v3643, 0
    %3648 = vmatprep.subr.mxu0 0.0
    %3649 = vmatpush1.msra.mxu0 %v2152
    %3650 = vmatprep.subr.mxu0 0.0
    %3651 = vmatpush1.msra.mxu0 %v2153
    %3652 = vmatprep.subr.mxu0 0.0
    %3653 = vmatpush1.msra.mxu0 %v2154
    %3654 = vmatprep.subr.mxu0 0.0
    %3655 = vmatpush1.msra.mxu0 %v2155
    %3656 = vmatprep.subr.mxu0 0.0
    %3657 = vmatpush1.msra.mxu0 0.0
    %3658 = vmatprep.subr.mxu0 0.0
    %3659 = vmatpush1.msra.mxu0 0.0
    %3660 = vmatprep.subr.mxu0 0.0
    %3661 = vmatpush1.msra.mxu0 0.0
    %3662 = vmatprep.subr.mxu0 0.0
    %3663 = vmatpush1.msra.mxu0 0.0
    %3664 = vmatprep.subr.mxu0 0.0
    %3665 = vmatpush1.msra.mxu0 0.0
    %3666 = vmatprep.subr.mxu0 0.0
    %3667 = vmatpush1.msra.mxu0 0.0
    %3668 = vmatprep.subr.mxu0 0.0
    %3669 = vmatpush1.msra.mxu0 0.0
    %3670 = vmatprep.subr.mxu0 0.0
    %3671 = vmatpush1.msra.mxu0 0.0
    %3672 = vmatprep.subr.mxu0 0.0
    %3673 = vmatpush1.msra.mxu0 0.0
    %3674 = vmatprep.subr.mxu0 0.0
    %3675 = vmatpush1.msra.mxu0 0.0
    %3676 = vmatprep.subr.mxu0 0.0
    %3677 = vmatpush1.msra.mxu0 0.0
    %3678 = vmatprep.subr.mxu0 0.0
    %3679 = vmatpush1.msra.mxu0 0.0
    %3680 = vmatprep.subr.mxu0 0.0
    %3681 = vmatpush1.msra.mxu0 0.0
    %3682 = vmatprep.subr.mxu0 0.0
    %3683 = vmatpush1.msra.mxu0 0.0
    %3684 = vmatprep.subr.mxu0 0.0
    %3685 = vmatpush1.msra.mxu0 0.0
    %3686 = vmatprep.subr.mxu0 0.0
    %3687 = vmatpush1.msra.mxu0 0.0
    %3688 = vmatprep.subr.mxu0 0.0
    %3689 = vmatpush1.msra.mxu0 0.0
    %3690 = vmatprep.subr.mxu0 0.0
    %3691 = vmatpush1.msra.mxu0 0.0
    %3692 = vmatprep.subr.mxu0 0.0
    %3693 = vmatpush1.msra.mxu0 0.0
    %3694 = vmatprep.subr.mxu0 0.0
    %3695 = vmatpush1.msra.mxu0 0.0
    %3696 = vmatprep.subr.mxu0 0.0
    %3697 = vmatpush1.msra.mxu0 0.0
    %3698 = vmatprep.subr.mxu0 0.0
    %3699 = vmatpush1.msra.mxu0 0.0
    %3700 = vmatprep.subr.mxu0 0.0
    %3701 = vmatpush1.msra.mxu0 0.0
    %3702 = vmatprep.subr.mxu0 0.0
    %3703 = vmatpush1.msra.mxu0 0.0
    %3704 = vmatprep.subr.mxu0 0.0
    %3705 = vmatpush1.msra.mxu0 0.0
    %3706 = vmatprep.subr.mxu0 0.0
    %3707 = vmatpush1.msra.mxu0 0.0
    %3708 = vmatprep.subr.mxu0 0.0
    %3709 = vmatpush1.msra.mxu0 0.0
    %3710 = vmatprep.subr.mxu0 0.0
    %3711 = vmatpush1.msra.mxu0 0.0
    %3712 = vmatprep.mubr.f32.mxu0 0.0
    %3713 = vmatmul.mubr.f32.gmra.mrb[0].mxu0 %v3644
    %v3714 = vpop.f32.mrb[0].mxu0
    %v3715 = vadd.f32 %v2161, %v3714
    %v3716 = vpop.f32.mrb[0].mxu0
    %3717 = vmatprep.mubr.f32.mxu0 0.0
    %3718 = vmatmul.mubr.f32.gmra.mrb[0].mxu0 %v3646
    %v3719 = vpop.f32.mrb[0].mxu0
    %v3720 = vadd.f32 %v2161, %v3719
    %v3721 = vpop.f32.mrb[0].mxu0
    %3722 = vdwg.mxu0
    %v3723 = vmax.f32 %v3715, 0.0
    %v3724 = vmax.f32 %v3720, 0.0
    %s3725 = scalar_lea.vmem %s6, 16
    %v3726 = vld [vmem:[%s3725] sm:$0xff]
    %v3728 = vsel %vm2923, %v3723, 0
    %v3731 = vsel %vm2923, %v3724, 0
    %3733 = vmatprep.subr.mxu0 0.0
    %3734 = vmatpush1.msra.mxu0 %v3726
    %3735 = vmatprep.subr.mxu0 0.0
    %3736 = vmatpush1.msra.mxu0 0.0
    %3737 = vmatprep.subr.mxu0 0.0
    %3738 = vmatpush1.msra.mxu0 0.0
    %3739 = vmatprep.subr.mxu0 0.0
    %3740 = vmatpush1.msra.mxu0 0.0
    %3741 = vmatprep.subr.mxu0 0.0
    %3742 = vmatpush1.msra.mxu0 0.0
    %3743 = vmatprep.subr.mxu0 0.0
    %3744 = vmatpush1.msra.mxu0 0.0
    %3745 = vmatprep.subr.mxu0 0.0
    %3746 = vmatpush1.msra.mxu0 0.0
    %3747 = vmatprep.subr.mxu0 0.0
    %3748 = vmatpush1.msra.mxu0 0.0
    %3749 = vmatprep.subr.mxu0 0.0
    %3750 = vmatpush1.msra.mxu0 0.0
    %3751 = vmatprep.subr.mxu0 0.0
    %3752 = vmatpush1.msra.mxu0 0.0
    %3753 = vmatprep.subr.mxu0 0.0
    %3754 = vmatpush1.msra.mxu0 0.0
    %3755 = vmatprep.subr.mxu0 0.0
    %3756 = vmatpush1.msra.mxu0 0.0
    %3757 = vmatprep.subr.mxu0 0.0
    %3758 = vmatpush1.msra.mxu0 0.0
    %3759 = vmatprep.subr.mxu0 0.0
    %3760 = vmatpush1.msra.mxu0 0.0
    %3761 = vmatprep.subr.mxu0 0.0
    %3762 = vmatpush1.msra.mxu0 0.0
    %3763 = vmatprep.subr.mxu0 0.0
    %3764 = vmatpush1.msra.mxu0 0.0
    %3765 = vmatprep.subr.mxu0 0.0
    %3766 = vmatpush1.msra.mxu0 0.0
    %3767 = vmatprep.subr.mxu0 0.0
    %3768 = vmatpush1.msra.mxu0 0.0
    %3769 = vmatprep.subr.mxu0 0.0
    %3770 = vmatpush1.msra.mxu0 0.0
    %3771 = vmatprep.subr.mxu0 0.0
    %3772 = vmatpush1.msra.mxu0 0.0
    %3773 = vmatprep.subr.mxu0 0.0
    %3774 = vmatpush1.msra.mxu0 0.0
    %3775 = vmatprep.subr.mxu0 0.0
    %3776 = vmatpush1.msra.mxu0 0.0
    %3777 = vmatprep.subr.mxu0 0.0
    %3778 = vmatpush1.msra.mxu0 0.0
    %3779 = vmatprep.subr.mxu0 0.0
    %3780 = vmatpush1.msra.mxu0 0.0
    %3781 = vmatprep.subr.mxu0 0.0
    %3782 = vmatpush1.msra.mxu0 0.0
    %3783 = vmatprep.subr.mxu0 0.0
    %3784 = vmatpush1.msra.mxu0 0.0
    %3785 = vmatprep.subr.mxu0 0.0
    %3786 = vmatpush1.msra.mxu0 0.0
    %3787 = vmatprep.subr.mxu0 0.0
    %3788 = vmatpush1.msra.mxu0 0.0
    %3789 = vmatprep.subr.mxu0 0.0
    %3790 = vmatpush1.msra.mxu0 0.0
    %3791 = vmatprep.subr.mxu0 0.0
    %3792 = vmatpush1.msra.mxu0 0.0
    %3793 = vmatprep.subr.mxu0 0.0
    %3794 = vmatpush1.msra.mxu0 0.0
    %3795 = vmatprep.subr.mxu0 0.0
    %3796 = vmatpush1.msra.mxu0 0.0
    %3797 = vmatprep.mubr.f32.mxu0 0.0
    %3798 = vmatmul.mubr.f32.gmra.mrb[0].mxu0 %v3728
    %v3799 = vpop.f32.mrb[0].mxu0
    %v3800 = vadd.f32 0.0, %v3799
    %v3801 = vpop.f32.mrb[0].mxu0
    %3802 = vmatprep.mubr.f32.mxu0 0.0
    %3803 = vmatmul.mubr.f32.gmra.mrb[0].mxu0 %v3731
    %v3804 = vpop.f32.mrb[0].mxu0
    %v3805 = vadd.f32 0.0, %v3804
    %v3806 = vpop.f32.mrb[0].mxu0
    %3807 = vdwg.mxu0
    %v3808 = vadd.f32 %v3078, %v3800
    %v3809 = vadd.f32 %v3083, %v3805
    %v3810 = vld [vmem:[%s7] sm:$0x1]
    %v3812 = vlaneseq
    %v3813 = vshrl.u32 %v3812, 7
    %v3814 = vsub.s32 0, %v3813
    %v3815 = vrot.slane %v3810, %v3814
    %v3817 = vadd.f32 %v3808, %v3815
    %v3818 = vadd.f32 %v3809, %v3815
    %3819 = vst [vmem:[#allocation5] sm:$0xff] %v3817
    %3820 = vst [vmem:[#allocation5 + $0x8] sm:$0xff] %v3818
    // Predicated region
    $region38: #{tpu_custom_call.1} parent=1 // pred_check
      _
    $region39: #{tpu_custom_call.1} parent=1 // pred_check_branch
      %3822 = sbr.rel (0) target = $region41
    $region40: #{tpu_custom_call.1} parent=1 // pred_region
      %s3824 = ssub.s32 256, 256
      %3825 = vsyncadd [#allocation4], %s3824
      %s3826 = sshll.u32 [#allocation5], 4
      %s3827 = int_to_ptr.vmem [resolvable:$true] %s3826
      %3832 = dma.vmem_to_hbm [thread:$0]  %s3827, 256, %s8, [#allocation4], 128, 128, 8
    $region41: #{tpu_custom_call.1} parent=1 // pred_fallthru
      _
    // Predicated region
    $region42: #{tpu_custom_call.1} parent=1 // pred_check
      _
    $region43: #{tpu_custom_call.1} parent=1 // pred_check_branch
      %3834 = sbr.rel (0) target = $region45
    $region44: #{tpu_custom_call.1} parent=1 // pred_region
      %3835 = dma.done [#allocation4], 256
    $region45: #{tpu_custom_call.1} parent=1 // pred_fallthru
      _
    %3836 = vsyncpa [#allocation3], 1
    %3837 = vsyncpa [#allocation4], 1

</llo_original>
